<compile_context>
chip_gen: v6e
topology: v6e:2x2x1
jax: 0.10.0
libtpu: 0.0.40
codegen_flags: <defaults>
</compile_context>

<pallas_src>
import jax
import jax.numpy as jnp
from jax import lax
from jax.experimental import pallas as pl
from jax.experimental.pallas import tpu as pltpu

F32 = jnp.float32
PRED_PAD = 128                        # lane-dense padded width of the prediction output
VMEM_LIMIT_BYTES = 32 * 1024 * 1024   # explicit scoped-VMEM budget (safe on v5e/v6e/v7x)
VMEM_SPEC = pl.BlockSpec(memory_space=pltpu.MemorySpace.VMEM)


def _vmem_specs(n):
    return [pl.BlockSpec(memory_space=pltpu.MemorySpace.VMEM) for _ in range(n)]


def _round_up(x, m):
    return ((x + m - 1) // m) * m


def _make_fused_kernel(num_layers, node_dim, edge_dim, tpad, epad, inv_denom):
    nd, ed = node_dim, edge_dim
    r1 = 2 * nd + ed                        # end of [W_src; W_dst; W_edge]
    r2 = r1 + 2 * nd                        # end of [W_self; W_agg]
    r3 = r2 + _round_up(nd + ed, 8)         # end of [W_eupd_edge; W_eupd_msg] (row-padded)
    hdim = nd + ed

    def kernel(edge_ints, batch_node_i, t_g, h_node, h_edge, pos,
               emb_blob, layer_blob, final_blob, pred_out):
        N = h_node.shape[0]
        E = h_edge.shape[0]
        G = t_g.shape[0]

        # ---- structural 0/1 masks built in-register (no O(E*N)/O(N*G) HBM traffic) ----
        ei = edge_ints[...]                                     # (E, 4) int32 [src, dst, batch_edge, -]
        src_i, dst_i, be_i = ei[:, 0:1], ei[:, 1:2], ei[:, 2:3]
        node_iota = lax.broadcasted_iota(jnp.int32, (E, N), 1)
        src_mask = (node_iota == src_i).astype(F32)             # (E, N) gather matrix
        dst_mask = (node_iota == dst_i).astype(F32)             # (E, N) gather / scatter matrix
        graph_iota_e = lax.broadcasted_iota(jnp.int32, (E, G), 1)
        edge_assign = (graph_iota_e == be_i).astype(F32)        # (E, G)
        bn = batch_node_i[...]                                  # (N, 1) int32
        graph_iota_n = lax.broadcasted_iota(jnp.int32, (N, G), 1)
        node_assign = (graph_iota_n == bn).astype(F32)          # (N, G)

        # ---- per-node / per-edge timesteps gathered in-kernel from per-graph t ----
        tg = t_g[...]                                           # (G, 1)
        t_node = jnp.dot(node_assign, tg, preferred_element_type=F32)   # (N, 1)
        t_edge = jnp.dot(edge_assign, tg, preferred_element_type=F32)   # (E, 1)
        node_time = t_node * inv_denom
        edge_time = t_edge * inv_denom

        # ---- embedders + GaussianSmearing time embedding (padded lanes, no concat) ----
        w_node_emb = emb_blob[0:tpad, 0:nd]                     # (tpad, nd), time lanes zeroed
        off = emb_blob[tpad:tpad + 1, 0:nd]                     # smearing offsets (padded lanes)
        coef = emb_blob[tpad + 1:tpad + 2, 0:nd]                # smearing coeff
        tmask = emb_blob[tpad + 2:tpad + 3, 0:nd]               # 0/1 time-lane mask
        w_edge_emb = emb_blob[tpad + 8:tpad + 8 + epad, 0:ed]   # (epad, ed)

        d = t_node - off                                        # (N, nd)
        time_emb = tmask * jnp.exp(coef * d * d)                # zero on embedding lanes
        hn = jnp.dot(h_node[...], w_node_emb, preferred_element_type=F32) + time_emb  # (N, nd)
        he = jnp.dot(h_edge[...], w_edge_emb, preferred_element_type=F32)             # (E, ed)

        # ---- edge lengths: single (src - dst) mask matmul against 8-lane-padded pos ----
        dvec = jnp.dot(src_mask - dst_mask, pos[...], preferred_element_type=F32)     # (E, 8)
        dist = jnp.sqrt(jnp.sum(dvec * dvec, axis=-1, keepdims=True))                 # (E, 1)

        # ---- NodeEdgeNet-style residual message-passing blocks (statically unrolled) ----
        # TODO(synk): NodeEdgeNet internals (per-block distance smearing, gating, norm) are
        #             not given in the source; implemented as a generic residual MP block.
        for l in range(num_layers):
            lb = layer_blob[l]                                  # (RPL, nd), all offsets 8-aligned
            w_src, w_dst = lb[0:nd, :], lb[nd:2 * nd, :]
            w_edge = lb[2 * nd:r1, :]
            w_self, w_agg = lb[r1:r1 + nd, :], lb[r1 + nd:r2, :]
            w_eupd_e = lb[r2:r2 + ed, 0:ed]                     # (ed, ed)
            w_eupd_m = lb[r2 + ed:r2 + ed + nd, 0:ed]           # (nd, ed)
            w_dist = lb[r3:r3 + 1, :]
            w_time = lb[r3 + 1:r3 + 2, :]
            b_msg = lb[r3 + 2:r3 + 3, :]
            w_ut = lb[r3 + 3:r3 + 4, :]
            b_upd = lb[r3 + 4:r3 + 5, :]
            b_eupd = lb[r3 + 5:r3 + 6, 0:ed]

            # projection-before-gather (exact: one-hot row selection commutes with the
            # linear map); projections run on N node rows instead of E edge rows.
            g_src = jnp.dot(hn, w_src, preferred_element_type=F32)          # (N, nd)
            g_dst = jnp.dot(hn, w_dst, preferred_element_type=F32)          # (N, nd)
            m_src = jnp.dot(src_mask, g_src, preferred_element_type=F32)    # (E, nd) gather
            m_dst = jnp.dot(dst_mask, g_dst, preferred_element_type=F32)    # (E, nd) gather
            msg = (m_src + m_dst
                   + jnp.dot(he, w_edge, preferred_element_type=F32)
                   + dist * w_dist + edge_time * w_time + b_msg)
            msg = jnp.maximum(msg, 0.0)

            # scatter-add onto destination nodes: contract the edge axis of dst_mask
            # directly (no transposed (N, E) operand).
            agg = lax.dot_general(dst_mask, msg, (((0,), (0,)), ((), ())),
                                  preferred_element_type=F32)               # (N, nd)

            node_upd = (jnp.dot(hn, w_self, preferred_element_type=F32)
                        + jnp.dot(agg, w_agg, preferred_element_type=F32)
                        + node_time * w_ut + b_upd)
            hn = hn + jnp.maximum(node_upd, 0.0)                            # residual

            edge_upd = (jnp.dot(he, w_eupd_e, preferred_element_type=F32)
                        + jnp.dot(msg, w_eupd_m, preferred_element_type=F32)
                        + b_eupd)
            he = he + jnp.maximum(edge_upd, 0.0)                            # residual
            # TODO(synk): fuse the K=nd/ed matmul pairs ([hn|agg]@w_upd, [he|msg]@w_eupd)
            #             into single wider-K MXU pushes once lane-concat cost is measured.

        # ---- per-graph mean pooling (in-kernel masks + exact f32 normalization) ----
        dn = (((0,), (0,)), ((), ()))
        ones_n = jnp.ones((N, 1), F32)
        ones_e = jnp.ones((E, 1), F32)
        pn = lax.dot_general(node_assign, hn, dn, preferred_element_type=F32)        # (G, nd)
        pe = lax.dot_general(edge_assign, he, dn, preferred_element_type=F32)        # (G, ed)
        cnt_n = lax.dot_general(node_assign, ones_n, dn, preferred_element_type=F32)  # (G, 1)
        cnt_e = lax.dot_general(edge_assign, ones_e, dn, preferred_element_type=F32)  # (G, 1)
        pn = pn / jnp.maximum(cnt_n, 1.0)
        pe = pe / jnp.maximum(cnt_e, 1.0)

        # ---- final 2-layer MLP from the packed, lane-dense blob ----
        w1n = final_blob[0:nd, :]                                # (nd, 128) node rows of W1
        w1e = final_blob[nd:hdim, :]                             # (ed, 128) edge rows of W1
        b1 = final_blob[hdim:hdim + 1, :]                        # (1, 128)
        w2 = final_blob[hdim + 8:hdim + 8 + PRED_PAD, :]         # (128, 128) row/col padded W2
        b2 = final_blob[hdim + 8 + PRED_PAD:hdim + 9 + PRED_PAD, :]
        hidden = jnp.maximum(jnp.dot(pn, w1n, preferred_element_type=F32)
                             + jnp.dot(pe, w1e, preferred_element_type=F32) + b1, 0.0)
        # lane-dense (G, 128) store; wrapper slices back to output_dim.
        pred_out[...] = jnp.dot(hidden, w2, preferred_element_type=F32) + b2

    return kernel


class PropertyPredictorWithEdgePallas:
    def __init__(self, num_node_types, num_edge_types, node_dim, edge_dim,
                 time_dim, num_timesteps, output_dim=1, num_encoder_layers=2, seed=0):
        assert output_dim <= PRED_PAD
        assert node_dim % 8 == 0 and edge_dim % 8 == 0, "8-aligned in-kernel slicing"
        assert edge_dim <= node_dim, "param blobs are packed at node_dim lane width"
        assert 2 <= time_dim < node_dim
        assert num_timesteps > 0  # TODO(synk): num_timesteps == 0 path (no time embedding) not implemented
        self.num_node_types = num_node_types
        self.num_edge_types = num_edge_types
        self.node_dim = node_dim
        self.edge_dim = edge_dim
        self.time_dim = time_dim
        self.num_timesteps = num_timesteps
        self.output_dim = output_dim
        self.num_encoder_layers = num_encoder_layers
        self.tpad = _round_up(num_node_types, 8)
        self.epad = _round_up(num_edge_types, 8)

        key = jax.random.PRNGKey(seed)

        def nxt():
            nonlocal key
            key, sub = jax.random.split(key)
            return sub

        def init(shape):
            return (jax.random.normal(nxt(), shape, F32) * 0.1).astype(F32)

        nd, ed = node_dim, edge_dim
        emb_dim = node_dim - time_dim

        # ---- emb_blob: [node embedder (rows 0:tpad) ; smearing (rows tpad:tpad+8) ;
        #                 edge embedder (rows tpad+8:tpad+8+epad)] at node_dim lane width ----
        w_node = init((num_node_types, emb_dim))           # nn.Linear(types, node_dim - time_dim, bias=False)
        w_node_blob = jnp.zeros((self.tpad, nd), F32).at[:num_node_types, :emb_dim].set(w_node)
        # GaussianSmearing(stop=num_timesteps, num_gaussians=time_dim, type_='linear'),
        # packed into the padded lanes [emb_dim:node_dim]: rows = [offsets, coeff, 0/1 mask].
        offsets = jnp.linspace(0.0, float(num_timesteps), time_dim).astype(F32)
        step = offsets[1] - offsets[0]
        coeff = (-0.5 / (step * step)) * jnp.ones((time_dim,), F32)
        smear = jnp.zeros((8, nd), F32)
        smear = smear.at[0, emb_dim:].set(offsets)
        smear = smear.at[1, emb_dim:].set(coeff)
        smear = smear.at[2, emb_dim:].set(1.0)
        w_edge = init((num_edge_types, ed))                # nn.Linear(edge_types, edge_dim, bias=False)
        w_edge_blob = jnp.zeros((self.epad, nd), F32).at[:num_edge_types, :ed].set(w_edge)
        self.emb_blob = jnp.concatenate([w_node_blob, smear, w_edge_blob], axis=0)

        # ---- layer_blob: all 13 per-layer encoder params packed at 8-aligned row offsets ----
        L = num_encoder_layers
        r1 = 2 * nd + ed
        r2 = r1 + 2 * nd
        r3 = r2 + _round_up(nd + ed, 8)
        rpl = r3 + 8
        lb = jnp.zeros((L, rpl, nd), F32)
        lb = lb.at[:, 0:r1, :].set(init((L, r1, nd)))                        # [W_src; W_dst; W_edge]
        lb = lb.at[:, r1:r2, :].set(init((L, 2 * nd, nd)))                   # [W_self; W_agg]
        lb = lb.at[:, r2:r2 + nd + ed, :ed].set(init((L, nd + ed, ed)))      # [W_eupd_edge; W_eupd_msg]
        lb = lb.at[:, r3 + 0, :].set(init((L, nd)))                          # w_msg_dist
        lb = lb.at[:, r3 + 1, :].set(init((L, nd)))                          # w_msg_time
        lb = lb.at[:, r3 + 3, :].set(init((L, nd)))                          # w_upd_time
        # rows r3+2 (b_msg), r3+4 (b_upd), r3+5 (b_eupd) remain zero
        self.layer_blob = lb

        # ---- final_blob: MLP(node_dim+edge_dim, output_dim, hidden=hdim, num_layer=2),
        #      lane-padded to 128 so the MXU path stays lane-dense and exact ----
        hdim = nd + ed
        fb = jnp.zeros((hdim + 8 + PRED_PAD + 8, PRED_PAD), F32)
        fb = fb.at[0:hdim, 0:hdim].set(init((hdim, hdim)))                   # W1 rows = [node; edge]
        # b1 (row hdim) zero
        fb = fb.at[hdim + 8:hdim + 8 + hdim, 0:output_dim].set(init((hdim, output_dim)))  # W2 (padded)
        # b2 (row hdim+8+128) zero
        self.final_blob = fb

        # TODO(synk): edge_decoder / diffusion transitions / loss heads exist in __init__
        #             but are unused by forward(); skipped.

        self._kernel = _make_fused_kernel(
            L, nd, ed, self.tpad, self.epad, 1.0 / float(max(num_timesteps, 1)))

    def __call__(self, h_node, pos_node, batch_node, h_edge, edge_index, batch_edge, t,
                 num_graphs=None):
        N0, E0 = h_node.shape[0], h_edge.shape[0]
        # graph count is static (t carries one timestep per graph) -> no host sync.
        G = int(num_graphs) if num_graphs is not None else int(t.shape[0])
        # bucket N/E to multiples of 8: padded rows use -1 sentinels (never match any
        # node / graph id in the in-kernel masks) so they are numerically inert.
        N, E = _round_up(N0, 8), _round_up(E0, 8)

        h_node_p = jnp.zeros((N, self.tpad), F32).at[:N0, :self.num_node_types].set(h_node.astype(F32))
        h_edge_p = jnp.zeros((E, self.epad), F32).at[:E0, :self.num_edge_types].set(h_edge.astype(F32))
        pos_p = jnp.zeros((N, 8), F32).at[:N0, :3].set(pos_node.astype(F32))
        bn = jnp.full((N, 1), -1, jnp.int32).at[:N0, 0].set(batch_node.astype(jnp.int32))
        eints = jnp.full((E, 4), -1, jnp.int32)
        eints = eints.at[:E0, 0].set(edge_index[0].astype(jnp.int32))
        eints = eints.at[:E0, 1].set(edge_index[1].astype(jnp.int32))
        eints = eints.at[:E0, 2].set(batch_edge.astype(jnp.int32))
        t_g = t.astype(F32).reshape(G, 1)

        pred_pad = pl.pallas_call(
            self._kernel,
            out_shape=jax.ShapeDtypeStruct((G, PRED_PAD), F32),
            in_specs=_vmem_specs(9),
            out_specs=VMEM_SPEC,
            compiler_params=pltpu.CompilerParams(vmem_limit_bytes=VMEM_LIMIT_BYTES),
        )(eints, bn, t_g, h_node_p, h_edge_p, pos_p,
          self.emb_blob, self.layer_blob, self.final_blob)

        return pred_pad[:, :self.output_dim]


if __name__ == "__main__":
    num_node_types, num_edge_types = 8, 4
    node_dim, edge_dim, time_dim = 32, 16, 8
    num_timesteps = 100
    N, HE, G = 16, 8, 2

    key = jax.random.PRNGKey(0)
    k1, k2, k3, k4 = jax.random.split(key, 4)

    node_types = jax.random.randint(k1, (N,), 0, num_node_types)
    h_node = jax.nn.one_hot(node_types, num_node_types, dtype=F32)           # (N, num_node_types)
    pos_node = jax.random.normal(k2, (N, 3), F32)                            # (N, 3)
    batch_node = jnp.array([0] * 8 + [1] * 8, dtype=jnp.int32)               # (N,)

    src = jnp.array([0, 1, 2, 3, 8, 9, 10, 11], dtype=jnp.int32)
    dst = jnp.array([4, 5, 6, 7, 12, 13, 14, 15], dtype=jnp.int32)
    halfedge_index = jnp.stack([src, dst], axis=0)                           # (2, HE)
    batch_halfedge = jnp.array([0] * 4 + [1] * 4, dtype=jnp.int32)
    halfedge_types = jax.random.randint(k3, (HE,), 0, num_edge_types)
    h_halfedge = jax.nn.one_hot(halfedge_types, num_edge_types, dtype=F32)

    # both directions, as in get_loss()
    edge_index = jnp.concatenate([halfedge_index, halfedge_index[::-1]], axis=1)  # (2, 2*HE)
    batch_edge = jnp.concatenate([batch_halfedge, batch_halfedge], axis=0)        # (2*HE,)
    h_edge = jnp.concatenate([h_halfedge, h_halfedge], axis=0)                    # (2*HE, num_edge_types)

    t = jax.random.randint(k4, (G,), 0, num_timesteps)                            # per-graph timestep

    model = PropertyPredictorWithEdgePallas(
        num_node_types, num_edge_types, node_dim, edge_dim, time_dim,
        num_timesteps, output_dim=1, num_encoder_layers=2, seed=0)

    pred = model(h_node, pos_node, batch_node, h_edge, edge_index, batch_edge, t)
    jax.block_until_ready(pred)
    assert pred.shape == (G, 1) and pred.dtype == F32
    print("KERNEL_OK")
</pallas_src>

<mosaic_0001>
module attributes {stable_mosaic.version = 11 : i64} {
  func.func @kernel(%arg0: memref<16x4xi32, #tpu.memory_space<vmem>>, %arg1: memref<16x1xi32, #tpu.memory_space<vmem>>, %arg2: memref<2x1xf32, #tpu.memory_space<vmem>>, %arg3: memref<16x8xf32, #tpu.memory_space<vmem>>, %arg4: memref<16x8xf32, #tpu.memory_space<vmem>>, %arg5: memref<16x8xf32, #tpu.memory_space<vmem>>, %arg6: memref<24x32xf32, #tpu.memory_space<vmem>>, %arg7: memref<2x200x32xf32, #tpu.memory_space<vmem>>, %arg8: memref<192x128xf32, #tpu.memory_space<vmem>>, %arg9: memref<2x128xf32, #tpu.memory_space<vmem>>) attributes {dimension_semantics = [], scalar_prefetch = 0 : i64, scratch_operands = 0 : i64, tpu.core_type = #tpu.core_type<tc>} {
    %c0 = arith.constant 0 : index
    %c0_0 = arith.constant 0 : index
    %0 = vector.load %arg0[%c0, %c0_0] : memref<16x4xi32, #tpu.memory_space<vmem>>, vector<16x4xi32>
    %1 = vector.extract_strided_slice %0 {offsets = [0, 0], sizes = [16, 1], strides = [1, 1]} : vector<16x4xi32> to vector<16x1xi32>
    %2 = vector.extract_strided_slice %0 {offsets = [0, 1], sizes = [16, 1], strides = [1, 1]} : vector<16x4xi32> to vector<16x1xi32>
    %3 = vector.extract_strided_slice %0 {offsets = [0, 2], sizes = [16, 1], strides = [1, 1]} : vector<16x4xi32> to vector<16x1xi32>
    %4 = tpu.iota {dimensions = array<i32: 1>} : vector<16x16xi32>
    %5 = vector.broadcast %1 : vector<16x1xi32> to vector<16x16xi32>
    %6 = arith.cmpi eq, %4, %5 : vector<16x16xi32>
    %7 = arith.extui %6 : vector<16x16xi1> to vector<16x16xi32>
    %8 = arith.sitofp %7 : vector<16x16xi32> to vector<16x16xf32>
    %9 = vector.broadcast %2 : vector<16x1xi32> to vector<16x16xi32>
    %10 = arith.cmpi eq, %4, %9 : vector<16x16xi32>
    %11 = arith.extui %10 : vector<16x16xi1> to vector<16x16xi32>
    %12 = arith.sitofp %11 : vector<16x16xi32> to vector<16x16xf32>
    %13 = tpu.iota {dimensions = array<i32: 1>} : vector<16x2xi32>
    %14 = vector.broadcast %3 : vector<16x1xi32> to vector<16x2xi32>
    %15 = arith.cmpi eq, %13, %14 : vector<16x2xi32>
    %16 = arith.extui %15 : vector<16x2xi1> to vector<16x2xi32>
    %17 = arith.sitofp %16 : vector<16x2xi32> to vector<16x2xf32>
    %c0_1 = arith.constant 0 : index
    %c0_2 = arith.constant 0 : index
    %18 = vector.load %arg1[%c0_1, %c0_2] : memref<16x1xi32, #tpu.memory_space<vmem>>, vector<16x1xi32>
    %19 = tpu.iota {dimensions = array<i32: 1>} : vector<16x2xi32>
    %20 = vector.broadcast %18 : vector<16x1xi32> to vector<16x2xi32>
    %21 = arith.cmpi eq, %19, %20 : vector<16x2xi32>
    %22 = arith.extui %21 : vector<16x2xi1> to vector<16x2xi32>
    %23 = arith.sitofp %22 : vector<16x2xi32> to vector<16x2xf32>
    %c0_3 = arith.constant 0 : index
    %c0_4 = arith.constant 0 : index
    %24 = vector.load %arg2[%c0_3, %c0_4] : memref<2x1xf32, #tpu.memory_space<vmem>>, vector<2x1xf32>
    %cst = arith.constant dense<0.000000e+00> : vector<16x1xf32>
    %25 = tpu.matmul %23, %24, %cst {dimension_numbers = #tpu.dot_dimension_numbers<[1], [0], [0], [1], [0, 0, 1, 1], [], []>} : vector<16x2xf32>, vector<2x1xf32>, vector<16x1xf32> -> vector<16x1xf32>
    %cst_5 = arith.constant dense<0.000000e+00> : vector<16x1xf32>
    %26 = tpu.matmul %17, %24, %cst_5 {dimension_numbers = #tpu.dot_dimension_numbers<[1], [0], [0], [1], [0, 0, 1, 1], [], []>} : vector<16x2xf32>, vector<2x1xf32>, vector<16x1xf32> -> vector<16x1xf32>
    %cst_6 = arith.constant 0.00999999977 : f32
    %27 = vector.broadcast %cst_6 : f32 to vector<16x1xf32>
    %28 = arith.mulf %25, %27 : vector<16x1xf32>
    %cst_7 = arith.constant 0.00999999977 : f32
    %29 = vector.broadcast %cst_7 : f32 to vector<16x1xf32>
    %30 = arith.mulf %26, %29 : vector<16x1xf32>
    %c0_8 = arith.constant 0 : index
    %c0_9 = arith.constant 0 : index
    %31 = vector.load %arg6[%c0_8, %c0_9] : memref<24x32xf32, #tpu.memory_space<vmem>>, vector<8x32xf32>
    %c8 = arith.constant 8 : index
    %c0_10 = arith.constant 0 : index
    %32 = vector.load %arg6[%c8, %c0_10] : memref<24x32xf32, #tpu.memory_space<vmem>>, vector<1x32xf32>
    %c9 = arith.constant 9 : index
    %c0_11 = arith.constant 0 : index
    %33 = vector.load %arg6[%c9, %c0_11] : memref<24x32xf32, #tpu.memory_space<vmem>>, vector<1x32xf32>
    %c10 = arith.constant 10 : index
    %c0_12 = arith.constant 0 : index
    %34 = vector.load %arg6[%c10, %c0_12] : memref<24x32xf32, #tpu.memory_space<vmem>>, vector<1x32xf32>
    %c16 = arith.constant 16 : index
    %c0_13 = arith.constant 0 : index
    %35 = vector.load %arg6[%c16, %c0_13] : memref<24x32xf32, #tpu.memory_space<vmem>>, vector<8x16xf32>
    %36 = vector.broadcast %25 : vector<16x1xf32> to vector<16x32xf32>
    %37 = vector.broadcast %32 : vector<1x32xf32> to vector<16x32xf32>
    %38 = arith.subf %36, %37 : vector<16x32xf32>
    %39 = vector.broadcast %33 : vector<1x32xf32> to vector<16x32xf32>
    %40 = arith.mulf %39, %38 : vector<16x32xf32>
    %41 = arith.mulf %40, %38 : vector<16x32xf32>
    %42 = math.exp %41 : vector<16x32xf32>
    %43 = vector.broadcast %34 : vector<1x32xf32> to vector<16x32xf32>
    %44 = arith.mulf %43, %42 : vector<16x32xf32>
    %c0_14 = arith.constant 0 : index
    %c0_15 = arith.constant 0 : index
    %45 = vector.load %arg3[%c0_14, %c0_15] : memref<16x8xf32, #tpu.memory_space<vmem>>, vector<16x8xf32>
    %cst_16 = arith.constant dense<0.000000e+00> : vector<16x32xf32>
    %46 = tpu.matmul %45, %31, %cst_16 {dimension_numbers = #tpu.dot_dimension_numbers<[1], [0], [0], [1], [0, 0, 1, 1], [], []>} : vector<16x8xf32>, vector<8x32xf32>, vector<16x32xf32> -> vector<16x32xf32>
    %47 = arith.addf %46, %44 : vector<16x32xf32>
    %c0_17 = arith.constant 0 : index
    %c0_18 = arith.constant 0 : index
    %48 = vector.load %arg4[%c0_17, %c0_18] : memref<16x8xf32, #tpu.memory_space<vmem>>, vector<16x8xf32>
    %cst_19 = arith.constant dense<0.000000e+00> : vector<16x16xf32>
    %49 = tpu.matmul %48, %35, %cst_19 {dimension_numbers = #tpu.dot_dimension_numbers<[1], [0], [0], [1], [0, 0, 1, 1], [], []>} : vector<16x8xf32>, vector<8x16xf32>, vector<16x16xf32> -> vector<16x16xf32>
    %50 = arith.subf %8, %12 : vector<16x16xf32>
    %c0_20 = arith.constant 0 : index
    %c0_21 = arith.constant 0 : index
    %51 = vector.load %arg5[%c0_20, %c0_21] : memref<16x8xf32, #tpu.memory_space<vmem>>, vector<16x8xf32>
    %cst_22 = arith.constant dense<0.000000e+00> : vector<16x8xf32>
    %52 = tpu.matmul %50, %51, %cst_22 {dimension_numbers = #tpu.dot_dimension_numbers<[1], [0], [0], [1], [0, 0, 1, 1], [], []>} : vector<16x16xf32>, vector<16x8xf32>, vector<16x8xf32> -> vector<16x8xf32>
    %53 = arith.mulf %52, %52 : vector<16x8xf32>
    %cst_23 = arith.constant dense<0.000000e+00> : vector<16xf32>
    %54 = vector.multi_reduction <add>, %53, %cst_23 [1] : vector<16x8xf32> to vector<16xf32>
    %55 = vector.shape_cast %54 : vector<16xf32> to vector<16x1xf32>
    %56 = math.sqrt %55 : vector<16x1xf32>
    %c0_24 = arith.constant 0 : index
    %c0_25 = arith.constant 0 : index
    %c0_26 = arith.constant 0 : index
    %57 = vector.load %arg7[%c0_24, %c0_25, %c0_26] : memref<2x200x32xf32, #tpu.memory_space<vmem>>, vector<1x200x32xf32>
    %58 = vector.shape_cast %57 : vector<1x200x32xf32> to vector<200x32xf32>
    %59 = vector.extract_strided_slice %58 {offsets = [0, 0], sizes = [32, 32], strides = [1, 1]} : vector<200x32xf32> to vector<32x32xf32>
    %60 = vector.extract_strided_slice %58 {offsets = [32, 0], sizes = [32, 32], strides = [1, 1]} : vector<200x32xf32> to vector<32x32xf32>
    %61 = vector.extract_strided_slice %58 {offsets = [64, 0], sizes = [16, 32], strides = [1, 1]} : vector<200x32xf32> to vector<16x32xf32>
    %62 = vector.extract_strided_slice %58 {offsets = [80, 0], sizes = [32, 32], strides = [1, 1]} : vector<200x32xf32> to vector<32x32xf32>
    %63 = vector.extract_strided_slice %58 {offsets = [112, 0], sizes = [32, 32], strides = [1, 1]} : vector<200x32xf32> to vector<32x32xf32>
    %64 = vector.extract_strided_slice %58 {offsets = [144, 0], sizes = [16, 16], strides = [1, 1]} : vector<200x32xf32> to vector<16x16xf32>
    %65 = vector.extract_strided_slice %58 {offsets = [160, 0], sizes = [32, 16], strides = [1, 1]} : vector<200x32xf32> to vector<32x16xf32>
    %66 = vector.extract_strided_slice %58 {offsets = [192, 0], sizes = [1, 32], strides = [1, 1]} : vector<200x32xf32> to vector<1x32xf32>
    %67 = vector.extract_strided_slice %58 {offsets = [193, 0], sizes = [1, 32], strides = [1, 1]} : vector<200x32xf32> to vector<1x32xf32>
    %68 = vector.extract_strided_slice %58 {offsets = [194, 0], sizes = [1, 32], strides = [1, 1]} : vector<200x32xf32> to vector<1x32xf32>
    %69 = vector.extract_strided_slice %58 {offsets = [195, 0], sizes = [1, 32], strides = [1, 1]} : vector<200x32xf32> to vector<1x32xf32>
    %70 = vector.extract_strided_slice %58 {offsets = [196, 0], sizes = [1, 32], strides = [1, 1]} : vector<200x32xf32> to vector<1x32xf32>
    %71 = vector.extract_strided_slice %58 {offsets = [197, 0], sizes = [1, 16], strides = [1, 1]} : vector<200x32xf32> to vector<1x16xf32>
    %cst_27 = arith.constant dense<0.000000e+00> : vector<16x32xf32>
    %72 = tpu.matmul %47, %59, %cst_27 {dimension_numbers = #tpu.dot_dimension_numbers<[1], [0], [0], [1], [0, 0, 1, 1], [], []>} : vector<16x32xf32>, vector<32x32xf32>, vector<16x32xf32> -> vector<16x32xf32>
    %cst_28 = arith.constant dense<0.000000e+00> : vector<16x32xf32>
    %73 = tpu.matmul %47, %60, %cst_28 {dimension_numbers = #tpu.dot_dimension_numbers<[1], [0], [0], [1], [0, 0, 1, 1], [], []>} : vector<16x32xf32>, vector<32x32xf32>, vector<16x32xf32> -> vector<16x32xf32>
    %cst_29 = arith.constant dense<0.000000e+00> : vector<16x32xf32>
    %74 = tpu.matmul %8, %72, %cst_29 {dimension_numbers = #tpu.dot_dimension_numbers<[1], [0], [0], [1], [0, 0, 1, 1], [], []>} : vector<16x16xf32>, vector<16x32xf32>, vector<16x32xf32> -> vector<16x32xf32>
    %cst_30 = arith.constant dense<0.000000e+00> : vector<16x32xf32>
    %75 = tpu.matmul %12, %73, %cst_30 {dimension_numbers = #tpu.dot_dimension_numbers<[1], [0], [0], [1], [0, 0, 1, 1], [], []>} : vector<16x16xf32>, vector<16x32xf32>, vector<16x32xf32> -> vector<16x32xf32>
    %76 = arith.addf %74, %75 : vector<16x32xf32>
    %cst_31 = arith.constant dense<0.000000e+00> : vector<16x32xf32>
    %77 = tpu.matmul %49, %61, %cst_31 {dimension_numbers = #tpu.dot_dimension_numbers<[1], [0], [0], [1], [0, 0, 1, 1], [], []>} : vector<16x16xf32>, vector<16x32xf32>, vector<16x32xf32> -> vector<16x32xf32>
    %78 = arith.addf %76, %77 : vector<16x32xf32>
    %79 = vector.broadcast %56 : vector<16x1xf32> to vector<16x32xf32>
    %80 = vector.broadcast %66 : vector<1x32xf32> to vector<16x32xf32>
    %81 = arith.mulf %79, %80 : vector<16x32xf32>
    %82 = arith.addf %78, %81 : vector<16x32xf32>
    %83 = vector.broadcast %30 : vector<16x1xf32> to vector<16x32xf32>
    %84 = vector.broadcast %67 : vector<1x32xf32> to vector<16x32xf32>
    %85 = arith.mulf %83, %84 : vector<16x32xf32>
    %86 = arith.addf %82, %85 : vector<16x32xf32>
    %87 = vector.broadcast %68 : vector<1x32xf32> to vector<16x32xf32>
    %88 = arith.addf %86, %87 : vector<16x32xf32>
    %cst_32 = arith.constant 0.000000e+00 : f32
    %89 = vector.broadcast %cst_32 : f32 to vector<16x32xf32>
    %90 = arith.maximumf %88, %89 : vector<16x32xf32>
    %cst_33 = arith.constant dense<0.000000e+00> : vector<16x32xf32>
    %91 = tpu.matmul %12, %90, %cst_33 {dimension_numbers = #tpu.dot_dimension_numbers<[0], [0], [1], [1], [0, 1, 1, 1], [], []>} : vector<16x16xf32>, vector<16x32xf32>, vector<16x32xf32> -> vector<16x32xf32>
    %cst_34 = arith.constant dense<0.000000e+00> : vector<16x32xf32>
    %92 = tpu.matmul %47, %62, %cst_34 {dimension_numbers = #tpu.dot_dimension_numbers<[1], [0], [0], [1], [0, 0, 1, 1], [], []>} : vector<16x32xf32>, vector<32x32xf32>, vector<16x32xf32> -> vector<16x32xf32>
    %cst_35 = arith.constant dense<0.000000e+00> : vector<16x32xf32>
    %93 = tpu.matmul %91, %63, %cst_35 {dimension_numbers = #tpu.dot_dimension_numbers<[1], [0], [0], [1], [0, 0, 1, 1], [], []>} : vector<16x32xf32>, vector<32x32xf32>, vector<16x32xf32> -> vector<16x32xf32>
    %94 = arith.addf %92, %93 : vector<16x32xf32>
    %95 = vector.broadcast %28 : vector<16x1xf32> to vector<16x32xf32>
    %96 = vector.broadcast %69 : vector<1x32xf32> to vector<16x32xf32>
    %97 = arith.mulf %95, %96 : vector<16x32xf32>
    %98 = arith.addf %94, %97 : vector<16x32xf32>
    %99 = vector.broadcast %70 : vector<1x32xf32> to vector<16x32xf32>
    %100 = arith.addf %98, %99 : vector<16x32xf32>
    %cst_36 = arith.constant 0.000000e+00 : f32
    %101 = vector.broadcast %cst_36 : f32 to vector<16x32xf32>
    %102 = arith.maximumf %100, %101 : vector<16x32xf32>
    %103 = arith.addf %47, %102 : vector<16x32xf32>
    %cst_37 = arith.constant dense<0.000000e+00> : vector<16x16xf32>
    %104 = tpu.matmul %49, %64, %cst_37 {dimension_numbers = #tpu.dot_dimension_numbers<[1], [0], [0], [1], [0, 0, 1, 1], [], []>} : vector<16x16xf32>, vector<16x16xf32>, vector<16x16xf32> -> vector<16x16xf32>
    %cst_38 = arith.constant dense<0.000000e+00> : vector<16x16xf32>
    %105 = tpu.matmul %90, %65, %cst_38 {dimension_numbers = #tpu.dot_dimension_numbers<[1], [0], [0], [1], [0, 0, 1, 1], [], []>} : vector<16x32xf32>, vector<32x16xf32>, vector<16x16xf32> -> vector<16x16xf32>
    %106 = arith.addf %104, %105 : vector<16x16xf32>
    %107 = vector.broadcast %71 : vector<1x16xf32> to vector<16x16xf32>
    %108 = arith.addf %106, %107 : vector<16x16xf32>
    %cst_39 = arith.constant 0.000000e+00 : f32
    %109 = vector.broadcast %cst_39 : f32 to vector<16x16xf32>
    %110 = arith.maximumf %108, %109 : vector<16x16xf32>
    %111 = arith.addf %49, %110 : vector<16x16xf32>
    %c1 = arith.constant 1 : index
    %c0_40 = arith.constant 0 : index
    %c0_41 = arith.constant 0 : index
    %112 = vector.load %arg7[%c1, %c0_40, %c0_41] : memref<2x200x32xf32, #tpu.memory_space<vmem>>, vector<1x200x32xf32>
    %113 = vector.shape_cast %112 : vector<1x200x32xf32> to vector<200x32xf32>
    %114 = vector.extract_strided_slice %113 {offsets = [0, 0], sizes = [32, 32], strides = [1, 1]} : vector<200x32xf32> to vector<32x32xf32>
    %115 = vector.extract_strided_slice %113 {offsets = [32, 0], sizes = [32, 32], strides = [1, 1]} : vector<200x32xf32> to vector<32x32xf32>
    %116 = vector.extract_strided_slice %113 {offsets = [64, 0], sizes = [16, 32], strides = [1, 1]} : vector<200x32xf32> to vector<16x32xf32>
    %117 = vector.extract_strided_slice %113 {offsets = [80, 0], sizes = [32, 32], strides = [1, 1]} : vector<200x32xf32> to vector<32x32xf32>
    %118 = vector.extract_strided_slice %113 {offsets = [112, 0], sizes = [32, 32], strides = [1, 1]} : vector<200x32xf32> to vector<32x32xf32>
    %119 = vector.extract_strided_slice %113 {offsets = [144, 0], sizes = [16, 16], strides = [1, 1]} : vector<200x32xf32> to vector<16x16xf32>
    %120 = vector.extract_strided_slice %113 {offsets = [160, 0], sizes = [32, 16], strides = [1, 1]} : vector<200x32xf32> to vector<32x16xf32>
    %121 = vector.extract_strided_slice %113 {offsets = [192, 0], sizes = [1, 32], strides = [1, 1]} : vector<200x32xf32> to vector<1x32xf32>
    %122 = vector.extract_strided_slice %113 {offsets = [193, 0], sizes = [1, 32], strides = [1, 1]} : vector<200x32xf32> to vector<1x32xf32>
    %123 = vector.extract_strided_slice %113 {offsets = [194, 0], sizes = [1, 32], strides = [1, 1]} : vector<200x32xf32> to vector<1x32xf32>
    %124 = vector.extract_strided_slice %113 {offsets = [195, 0], sizes = [1, 32], strides = [1, 1]} : vector<200x32xf32> to vector<1x32xf32>
    %125 = vector.extract_strided_slice %113 {offsets = [196, 0], sizes = [1, 32], strides = [1, 1]} : vector<200x32xf32> to vector<1x32xf32>
    %126 = vector.extract_strided_slice %113 {offsets = [197, 0], sizes = [1, 16], strides = [1, 1]} : vector<200x32xf32> to vector<1x16xf32>
    %cst_42 = arith.constant dense<0.000000e+00> : vector<16x32xf32>
    %127 = tpu.matmul %103, %114, %cst_42 {dimension_numbers = #tpu.dot_dimension_numbers<[1], [0], [0], [1], [0, 0, 1, 1], [], []>} : vector<16x32xf32>, vector<32x32xf32>, vector<16x32xf32> -> vector<16x32xf32>
    %cst_43 = arith.constant dense<0.000000e+00> : vector<16x32xf32>
    %128 = tpu.matmul %103, %115, %cst_43 {dimension_numbers = #tpu.dot_dimension_numbers<[1], [0], [0], [1], [0, 0, 1, 1], [], []>} : vector<16x32xf32>, vector<32x32xf32>, vector<16x32xf32> -> vector<16x32xf32>
    %cst_44 = arith.constant dense<0.000000e+00> : vector<16x32xf32>
    %129 = tpu.matmul %8, %127, %cst_44 {dimension_numbers = #tpu.dot_dimension_numbers<[1], [0], [0], [1], [0, 0, 1, 1], [], []>} : vector<16x16xf32>, vector<16x32xf32>, vector<16x32xf32> -> vector<16x32xf32>
    %cst_45 = arith.constant dense<0.000000e+00> : vector<16x32xf32>
    %130 = tpu.matmul %12, %128, %cst_45 {dimension_numbers = #tpu.dot_dimension_numbers<[1], [0], [0], [1], [0, 0, 1, 1], [], []>} : vector<16x16xf32>, vector<16x32xf32>, vector<16x32xf32> -> vector<16x32xf32>
    %131 = arith.addf %129, %130 : vector<16x32xf32>
    %cst_46 = arith.constant dense<0.000000e+00> : vector<16x32xf32>
    %132 = tpu.matmul %111, %116, %cst_46 {dimension_numbers = #tpu.dot_dimension_numbers<[1], [0], [0], [1], [0, 0, 1, 1], [], []>} : vector<16x16xf32>, vector<16x32xf32>, vector<16x32xf32> -> vector<16x32xf32>
    %133 = arith.addf %131, %132 : vector<16x32xf32>
    %134 = vector.broadcast %56 : vector<16x1xf32> to vector<16x32xf32>
    %135 = vector.broadcast %121 : vector<1x32xf32> to vector<16x32xf32>
    %136 = arith.mulf %134, %135 : vector<16x32xf32>
    %137 = arith.addf %133, %136 : vector<16x32xf32>
    %138 = vector.broadcast %30 : vector<16x1xf32> to vector<16x32xf32>
    %139 = vector.broadcast %122 : vector<1x32xf32> to vector<16x32xf32>
    %140 = arith.mulf %138, %139 : vector<16x32xf32>
    %141 = arith.addf %137, %140 : vector<16x32xf32>
    %142 = vector.broadcast %123 : vector<1x32xf32> to vector<16x32xf32>
    %143 = arith.addf %141, %142 : vector<16x32xf32>
    %cst_47 = arith.constant 0.000000e+00 : f32
    %144 = vector.broadcast %cst_47 : f32 to vector<16x32xf32>
    %145 = arith.maximumf %143, %144 : vector<16x32xf32>
    %cst_48 = arith.constant dense<0.000000e+00> : vector<16x32xf32>
    %146 = tpu.matmul %12, %145, %cst_48 {dimension_numbers = #tpu.dot_dimension_numbers<[0], [0], [1], [1], [0, 1, 1, 1], [], []>} : vector<16x16xf32>, vector<16x32xf32>, vector<16x32xf32> -> vector<16x32xf32>
    %cst_49 = arith.constant dense<0.000000e+00> : vector<16x32xf32>
    %147 = tpu.matmul %103, %117, %cst_49 {dimension_numbers = #tpu.dot_dimension_numbers<[1], [0], [0], [1], [0, 0, 1, 1], [], []>} : vector<16x32xf32>, vector<32x32xf32>, vector<16x32xf32> -> vector<16x32xf32>
    %cst_50 = arith.constant dense<0.000000e+00> : vector<16x32xf32>
    %148 = tpu.matmul %146, %118, %cst_50 {dimension_numbers = #tpu.dot_dimension_numbers<[1], [0], [0], [1], [0, 0, 1, 1], [], []>} : vector<16x32xf32>, vector<32x32xf32>, vector<16x32xf32> -> vector<16x32xf32>
    %149 = arith.addf %147, %148 : vector<16x32xf32>
    %150 = vector.broadcast %28 : vector<16x1xf32> to vector<16x32xf32>
    %151 = vector.broadcast %124 : vector<1x32xf32> to vector<16x32xf32>
    %152 = arith.mulf %150, %151 : vector<16x32xf32>
    %153 = arith.addf %149, %152 : vector<16x32xf32>
    %154 = vector.broadcast %125 : vector<1x32xf32> to vector<16x32xf32>
    %155 = arith.addf %153, %154 : vector<16x32xf32>
    %cst_51 = arith.constant 0.000000e+00 : f32
    %156 = vector.broadcast %cst_51 : f32 to vector<16x32xf32>
    %157 = arith.maximumf %155, %156 : vector<16x32xf32>
    %158 = arith.addf %103, %157 : vector<16x32xf32>
    %cst_52 = arith.constant dense<0.000000e+00> : vector<16x16xf32>
    %159 = tpu.matmul %111, %119, %cst_52 {dimension_numbers = #tpu.dot_dimension_numbers<[1], [0], [0], [1], [0, 0, 1, 1], [], []>} : vector<16x16xf32>, vector<16x16xf32>, vector<16x16xf32> -> vector<16x16xf32>
    %cst_53 = arith.constant dense<0.000000e+00> : vector<16x16xf32>
    %160 = tpu.matmul %145, %120, %cst_53 {dimension_numbers = #tpu.dot_dimension_numbers<[1], [0], [0], [1], [0, 0, 1, 1], [], []>} : vector<16x32xf32>, vector<32x16xf32>, vector<16x16xf32> -> vector<16x16xf32>
    %161 = arith.addf %159, %160 : vector<16x16xf32>
    %162 = vector.broadcast %126 : vector<1x16xf32> to vector<16x16xf32>
    %163 = arith.addf %161, %162 : vector<16x16xf32>
    %cst_54 = arith.constant 0.000000e+00 : f32
    %164 = vector.broadcast %cst_54 : f32 to vector<16x16xf32>
    %165 = arith.maximumf %163, %164 : vector<16x16xf32>
    %166 = arith.addf %111, %165 : vector<16x16xf32>
    %cst_55 = arith.constant 1.000000e+00 : f32
    %167 = vector.broadcast %cst_55 : f32 to vector<16x1xf32>
    %cst_56 = arith.constant 1.000000e+00 : f32
    %168 = vector.broadcast %cst_56 : f32 to vector<16x1xf32>
    %cst_57 = arith.constant dense<0.000000e+00> : vector<2x32xf32>
    %169 = tpu.matmul %23, %158, %cst_57 {dimension_numbers = #tpu.dot_dimension_numbers<[0], [0], [1], [1], [0, 1, 1, 1], [], []>} : vector<16x2xf32>, vector<16x32xf32>, vector<2x32xf32> -> vector<2x32xf32>
    %cst_58 = arith.constant dense<0.000000e+00> : vector<2x16xf32>
    %170 = tpu.matmul %17, %166, %cst_58 {dimension_numbers = #tpu.dot_dimension_numbers<[0], [0], [1], [1], [0, 1, 1, 1], [], []>} : vector<16x2xf32>, vector<16x16xf32>, vector<2x16xf32> -> vector<2x16xf32>
    %cst_59 = arith.constant dense<0.000000e+00> : vector<2x1xf32>
    %171 = tpu.matmul %23, %167, %cst_59 {dimension_numbers = #tpu.dot_dimension_numbers<[0], [0], [1], [1], [0, 1, 1, 1], [], []>} : vector<16x2xf32>, vector<16x1xf32>, vector<2x1xf32> -> vector<2x1xf32>
    %cst_60 = arith.constant dense<0.000000e+00> : vector<2x1xf32>
    %172 = tpu.matmul %17, %168, %cst_60 {dimension_numbers = #tpu.dot_dimension_numbers<[0], [0], [1], [1], [0, 1, 1, 1], [], []>} : vector<16x2xf32>, vector<16x1xf32>, vector<2x1xf32> -> vector<2x1xf32>
    %cst_61 = arith.constant 1.000000e+00 : f32
    %173 = vector.broadcast %cst_61 : f32 to vector<2x1xf32>
    %174 = arith.maximumf %171, %173 : vector<2x1xf32>
    %175 = vector.broadcast %174 : vector<2x1xf32> to vector<2x32xf32>
    %176 = arith.divf %169, %175 : vector<2x32xf32>
    %cst_62 = arith.constant 1.000000e+00 : f32
    %177 = vector.broadcast %cst_62 : f32 to vector<2x1xf32>
    %178 = arith.maximumf %172, %177 : vector<2x1xf32>
    %179 = vector.broadcast %178 : vector<2x1xf32> to vector<2x16xf32>
    %180 = arith.divf %170, %179 : vector<2x16xf32>
    %c0_63 = arith.constant 0 : index
    %c0_64 = arith.constant 0 : index
    %181 = vector.load %arg8[%c0_63, %c0_64] : memref<192x128xf32, #tpu.memory_space<vmem>>, vector<32x128xf32>
    %c32 = arith.constant 32 : index
    %c0_65 = arith.constant 0 : index
    %182 = vector.load %arg8[%c32, %c0_65] : memref<192x128xf32, #tpu.memory_space<vmem>>, vector<16x128xf32>
    %c48 = arith.constant 48 : index
    %c0_66 = arith.constant 0 : index
    %183 = vector.load %arg8[%c48, %c0_66] : memref<192x128xf32, #tpu.memory_space<vmem>>, vector<1x128xf32>
    %c56 = arith.constant 56 : index
    %c0_67 = arith.constant 0 : index
    %184 = vector.load %arg8[%c56, %c0_67] : memref<192x128xf32, #tpu.memory_space<vmem>>, vector<128x128xf32>
    %c184 = arith.constant 184 : index
    %c0_68 = arith.constant 0 : index
    %185 = vector.load %arg8[%c184, %c0_68] : memref<192x128xf32, #tpu.memory_space<vmem>>, vector<1x128xf32>
    %cst_69 = arith.constant dense<0.000000e+00> : vector<2x128xf32>
    %186 = tpu.matmul %176, %181, %cst_69 {dimension_numbers = #tpu.dot_dimension_numbers<[1], [0], [0], [1], [0, 0, 1, 1], [], []>} : vector<2x32xf32>, vector<32x128xf32>, vector<2x128xf32> -> vector<2x128xf32>
    %cst_70 = arith.constant dense<0.000000e+00> : vector<2x128xf32>
    %187 = tpu.matmul %180, %182, %cst_70 {dimension_numbers = #tpu.dot_dimension_numbers<[1], [0], [0], [1], [0, 0, 1, 1], [], []>} : vector<2x16xf32>, vector<16x128xf32>, vector<2x128xf32> -> vector<2x128xf32>
    %188 = arith.addf %186, %187 : vector<2x128xf32>
    %189 = vector.broadcast %183 : vector<1x128xf32> to vector<2x128xf32>
    %190 = arith.addf %188, %189 : vector<2x128xf32>
    %cst_71 = arith.constant 0.000000e+00 : f32
    %191 = vector.broadcast %cst_71 : f32 to vector<2x128xf32>
    %192 = arith.maximumf %190, %191 : vector<2x128xf32>
    %cst_72 = arith.constant dense<0.000000e+00> : vector<2x128xf32>
    %193 = tpu.matmul %192, %184, %cst_72 {dimension_numbers = #tpu.dot_dimension_numbers<[1], [0], [0], [1], [0, 0, 1, 1], [], []>} : vector<2x128xf32>, vector<128x128xf32>, vector<2x128xf32> -> vector<2x128xf32>
    %194 = vector.broadcast %185 : vector<1x128xf32> to vector<2x128xf32>
    %195 = arith.addf %193, %194 : vector<2x128xf32>
    %c0_73 = arith.constant 0 : index
    %c0_74 = arith.constant 0 : index
    %196 = vector.load %arg9[%c0_73, %c0_74] : memref<2x128xf32, #tpu.memory_space<vmem>>, vector<2x128xf32>
    tpu.vector_store %arg9[%c0_73, %c0_74], %195 {strides = array<i32>} : memref<2x128xf32, #tpu.memory_space<vmem>>, vector<2x128xf32>,
    return
  }
}

</mosaic_0001>

<llo_original>
// kernel: tpu_custom_call.1
$region0: #{tpu_custom_call.1}
  #allocation0 [shape = 'u32[]', space=smem, size = 0x4, offset = 0x4, fixed_abs, tag = 'smem constant byte address 0x4 - core index']
  #allocation1 [shape = 'u32[144,128]{1,0:T(1,128)}', space=vmem, size = 0x12000, scoped, tag = 'internal scratch']
  %s0 = inlined_call_operand.vmem [shape: s32[16,4], index: 0, kind: input, shape index: {}]
  %s1 = inlined_call_operand.vmem [shape: s32[16,1], index: 1, kind: input, shape index: {}]
  %s2 = inlined_call_operand.vmem [shape: f32[2,1], index: 2, kind: input, shape index: {}]
  %s3 = inlined_call_operand.vmem [shape: f32[16,8], index: 3, kind: input, shape index: {}]
  %s4 = inlined_call_operand.vmem [shape: f32[16,8], index: 4, kind: input, shape index: {}]
  %s5 = inlined_call_operand.vmem [shape: f32[16,8], index: 5, kind: input, shape index: {}]
  %s6 = inlined_call_operand.vmem [shape: f32[24,32], index: 6, kind: input, shape index: {}]
  %s7 = inlined_call_operand.vmem [shape: f32[2,200,32], index: 7, kind: input, shape index: {}]
  %s8 = inlined_call_operand.vmem [shape: f32[192,128], index: 8, kind: input, shape index: {}]
  %s9 = inlined_call_operand.hbm [shape: f32[2,128], index: 9, kind: output, shape index: {}]
  %s10 = sld [smem:[#allocation0]]
  $region46: #{tpu_custom_call.1} parent=0
    _
  %s12 = ssub.s32 1, %s10
  %s13 = scalar_select 0, %s12, %s10
  $region1: #{tpu_custom_call.1} parent=0
    #allocation2 [shape = 'u8[1024]{0}', space=vmem, size = 0x400, scoped, tag = 'output window, operand 0, single buffered']
    #allocation3 [shape = 's32[1]{0}', space=sflag, size = 0x4, scoped, tag = 'scoped memory for tpu_custom_call.1']
    %14 = vsyncpa [#allocation3], 0
    // Predicated region
    $region2: #{tpu_custom_call.1} parent=1 // pred_check
      _
    $region3: #{tpu_custom_call.1} parent=1 // pred_check_branch
      %16 = sbr.rel (0) target = $region5
    $region4: #{tpu_custom_call.1} parent=1 // pred_region
      _
    $region5: #{tpu_custom_call.1} parent=1 // pred_fallthru
      _
    // Predicated region
    $region6: #{tpu_custom_call.1} parent=1 // pred_check
      _
    $region7: #{tpu_custom_call.1} parent=1 // pred_check_branch
      %18 = sbr.rel (0) target = $region9
    $region8: #{tpu_custom_call.1} parent=1 // pred_region
      _
    $region9: #{tpu_custom_call.1} parent=1 // pred_fallthru
      _
    // Predicated region
    $region10: #{tpu_custom_call.1} parent=1 // pred_check
      _
    $region11: #{tpu_custom_call.1} parent=1 // pred_check_branch
      %20 = sbr.rel (0) target = $region13
    $region12: #{tpu_custom_call.1} parent=1 // pred_region
      _
    $region13: #{tpu_custom_call.1} parent=1 // pred_fallthru
      _
    // Predicated region
    $region14: #{tpu_custom_call.1} parent=1 // pred_check
      _
    $region15: #{tpu_custom_call.1} parent=1 // pred_check_branch
      %22 = sbr.rel (0) target = $region17
    $region16: #{tpu_custom_call.1} parent=1 // pred_region
      _
    $region17: #{tpu_custom_call.1} parent=1 // pred_fallthru
      _
    // Predicated region
    $region18: #{tpu_custom_call.1} parent=1 // pred_check
      _
    $region19: #{tpu_custom_call.1} parent=1 // pred_check_branch
      %24 = sbr.rel (0) target = $region21
    $region20: #{tpu_custom_call.1} parent=1 // pred_region
      _
    $region21: #{tpu_custom_call.1} parent=1 // pred_fallthru
      _
    // Predicated region
    $region22: #{tpu_custom_call.1} parent=1 // pred_check
      _
    $region23: #{tpu_custom_call.1} parent=1 // pred_check_branch
      %26 = sbr.rel (0) target = $region25
    $region24: #{tpu_custom_call.1} parent=1 // pred_region
      _
    $region25: #{tpu_custom_call.1} parent=1 // pred_fallthru
      _
    // Predicated region
    $region26: #{tpu_custom_call.1} parent=1 // pred_check
      _
    $region27: #{tpu_custom_call.1} parent=1 // pred_check_branch
      %28 = sbr.rel (0) target = $region29
    $region28: #{tpu_custom_call.1} parent=1 // pred_region
      _
    $region29: #{tpu_custom_call.1} parent=1 // pred_fallthru
      _
    // Predicated region
    $region30: #{tpu_custom_call.1} parent=1 // pred_check
      _
    $region31: #{tpu_custom_call.1} parent=1 // pred_check_branch
      %30 = sbr.rel (0) target = $region33
    $region32: #{tpu_custom_call.1} parent=1 // pred_region
      _
    $region33: #{tpu_custom_call.1} parent=1 // pred_fallthru
      _
    // Predicated region
    $region34: #{tpu_custom_call.1} parent=1 // pred_check
      _
    $region35: #{tpu_custom_call.1} parent=1 // pred_check_branch
      %32 = sbr.rel (0) target = $region37
    $region36: #{tpu_custom_call.1} parent=1 // pred_region
      _
    $region37: #{tpu_custom_call.1} parent=1 // pred_fallthru
      _
    %v33 = vld [vmem:[%s0] sm:$0xff]
    %v34 = vld [vmem:[%s0 + $0x8] sm:$0xff]
    %v35 = vlaneseq
    %v36 = vand.u32 %v35, 127
    %37 = vset.pattern.permute.xlu0 0
    %38 = vperm.xlu0 %37, %v33
    %v39 = vpop.permute.xlu0 %38
    %40 = vset.pattern.permute.xlu0 0
    %41 = vperm.xlu0 %40, %v34
    %v42 = vpop.permute.xlu0 %41
    %vm43 = vcmp.eq.s32.totalorder %v36, %v39
    %vm44 = vcmp.eq.s32.totalorder %v36, %v42
    %v45 = vsel %vm43, 1, 0
    %v46 = vsel %vm44, 1, 0
    %v47 = vcvt.s32.f32 %v45
    %v48 = vcvt.s32.f32 %v46
    %49 = vset.pattern.permute.xlu0 1
    %50 = vperm.xlu0 %49, %v33
    %v51 = vpop.permute.xlu0 %50
    %52 = vset.pattern.permute.xlu0 1
    %53 = vperm.xlu0 %52, %v34
    %v54 = vpop.permute.xlu0 %53
    %vm55 = vcmp.eq.s32.totalorder %v36, %v51
    %vm56 = vcmp.eq.s32.totalorder %v36, %v54
    %v57 = vsel %vm55, 1, 0
    %v58 = vsel %vm56, 1, 0
    %v59 = vcvt.s32.f32 %v57
    %v60 = vcvt.s32.f32 %v58
    %61 = vset.pattern.permute.xlu0 2
    %62 = vperm.xlu0 %61, %v33
    %v63 = vpop.permute.xlu0 %62
    %64 = vset.pattern.permute.xlu0 2
    %65 = vperm.xlu0 %64, %v34
    %v66 = vpop.permute.xlu0 %65
    %vm67 = vcmp.eq.s32.totalorder %v36, %v63
    %vm68 = vcmp.eq.s32.totalorder %v36, %v66
    %v69 = vsel %vm67, 1, 0
    %v70 = vsel %vm68, 1, 0
    %v71 = vcvt.s32.f32 %v69
    %v72 = vcvt.s32.f32 %v70
    %v73 = vld [vmem:[%s1] sm:$0xff]
    %v74 = vld [vmem:[%s1 + $0x8] sm:$0xff]
    %75 = vset.pattern.permute.xlu0 0
    %76 = vperm.xlu0 %75, %v73
    %v77 = vpop.permute.xlu0 %76
    %78 = vset.pattern.permute.xlu0 0
    %79 = vperm.xlu0 %78, %v74
    %v80 = vpop.permute.xlu0 %79
    %vm81 = vcmp.eq.s32.totalorder %v36, %v77
    %vm82 = vcmp.eq.s32.totalorder %v36, %v80
    %v83 = vsel %vm81, 1, 0
    %v84 = vsel %vm82, 1, 0
    %v85 = vcvt.s32.f32 %v83
    %v86 = vcvt.s32.f32 %v84
    %v87 = vld [vmem:[%s2] sm:$0x3]
    %vm88 = vcmask 15360
    %v90 = vsel %vm88, %v85, 0
    %v93 = vsel %vm88, %v86, 0
    %vm95 = vcmask 1041408
    %v97 = vsel %vm95, %v87, 0
    %99 = vmatprep.subr.mxu0 0.0
    %100 = vmatpush1.msra.mxu0 0.0
    %101 = vmatprep.subr.mxu0 0.0
    %102 = vmatpush1.msra.mxu0 0.0
    %103 = vmatprep.subr.mxu0 0.0
    %104 = vmatpush1.msra.mxu0 0.0
    %105 = vmatprep.subr.mxu0 0.0
    %106 = vmatpush1.msra.mxu0 0.0
    %107 = vmatprep.subr.mxu0 0.0
    %108 = vmatpush1.msra.mxu0 0.0
    %109 = vmatprep.subr.mxu0 0.0
    %110 = vmatpush1.msra.mxu0 0.0
    %111 = vmatprep.subr.mxu0 0.0
    %112 = vmatpush1.msra.mxu0 0.0
    %113 = vmatprep.subr.mxu0 0.0
    %114 = vmatpush1.msra.mxu0 0.0
    %115 = vmatprep.subr.mxu0 0.0
    %116 = vmatpush1.msra.mxu0 0.0
    %117 = vmatprep.subr.mxu0 0.0
    %118 = vmatpush1.msra.mxu0 0.0
    %119 = vmatprep.subr.mxu0 0.0
    %120 = vmatpush1.msra.mxu0 0.0
    %121 = vmatprep.subr.mxu0 0.0
    %122 = vmatpush1.msra.mxu0 0.0
    %123 = vmatprep.subr.mxu0 0.0
    %124 = vmatpush1.msra.mxu0 0.0
    %125 = vmatprep.subr.mxu0 0.0
    %126 = vmatpush1.msra.mxu0 0.0
    %127 = vmatprep.subr.mxu0 0.0
    %128 = vmatpush1.msra.mxu0 0.0
    %129 = vmatprep.subr.mxu0 0.0
    %130 = vmatpush1.msra.mxu0 %v97
    %131 = vmatprep.subr.mxu0 0.0
    %132 = vmatpush2.msra.mxu0 0.0
    %133 = vmatprep.subr.mxu0 0.0
    %134 = vmatpush2.msra.mxu0 0.0
    %135 = vmatprep.subr.mxu0 0.0
    %136 = vmatpush2.msra.mxu0 0.0
    %137 = vmatprep.subr.mxu0 0.0
    %138 = vmatpush2.msra.mxu0 0.0
    %139 = vmatprep.subr.mxu0 0.0
    %140 = vmatpush2.msra.mxu0 0.0
    %141 = vmatprep.subr.mxu0 0.0
    %142 = vmatpush2.msra.mxu0 0.0
    %143 = vmatprep.subr.mxu0 0.0
    %144 = vmatpush2.msra.mxu0 0.0
    %145 = vmatprep.subr.mxu0 0.0
    %146 = vmatpush2.msra.mxu0 0.0
    %147 = vmatprep.subr.mxu0 0.0
    %148 = vmatpush2.msra.mxu0 0.0
    %149 = vmatprep.subr.mxu0 0.0
    %150 = vmatpush2.msra.mxu0 0.0
    %151 = vmatprep.subr.mxu0 0.0
    %152 = vmatpush2.msra.mxu0 0.0
    %153 = vmatprep.subr.mxu0 0.0
    %154 = vmatpush2.msra.mxu0 0.0
    %155 = vmatprep.subr.mxu0 0.0
    %156 = vmatpush2.msra.mxu0 0.0
    %157 = vmatprep.subr.mxu0 0.0
    %158 = vmatpush2.msra.mxu0 0.0
    %159 = vmatprep.subr.mxu0 0.0
    %160 = vmatpush2.msra.mxu0 0.0
    %161 = vmatprep.subr.mxu0 0.0
    %162 = vmatpush2.msra.mxu0 0.0
    %163 = vmatprep.mubr.f32.mxu0 0.0
    %164 = vmatmul.mubr.f32.gmra.mxu0 %v90
    %v165 = vpop.f32.mrf.mxu0
    %v166 = vadd.f32 0.0, %v165
    %v167 = vpop.f32.mrf.mxu0
    %168 = vmatprep.mubr.f32.mxu0 0.0
    %169 = vmatmul.mubr.f32.gmra.mxu0 %v93
    %v170 = vpop.f32.mrf.mxu0
    %v171 = vadd.f32 0.0, %v170
    %v172 = vpop.f32.mrf.mxu0
    %173 = vdwg.mxu0
    %v175 = vsel %vm88, %v71, 0
    %v178 = vsel %vm88, %v72, 0
    %180 = vmatprep.subr.mxu0 0.0
    %181 = vmatpush1.msra.mxu0 0.0
    %182 = vmatprep.subr.mxu0 0.0
    %183 = vmatpush1.msra.mxu0 0.0
    %184 = vmatprep.subr.mxu0 0.0
    %185 = vmatpush1.msra.mxu0 0.0
    %186 = vmatprep.subr.mxu0 0.0
    %187 = vmatpush1.msra.mxu0 0.0
    %188 = vmatprep.subr.mxu0 0.0
    %189 = vmatpush1.msra.mxu0 0.0
    %190 = vmatprep.subr.mxu0 0.0
    %191 = vmatpush1.msra.mxu0 0.0
    %192 = vmatprep.subr.mxu0 0.0
    %193 = vmatpush1.msra.mxu0 0.0
    %194 = vmatprep.subr.mxu0 0.0
    %195 = vmatpush1.msra.mxu0 0.0
    %196 = vmatprep.subr.mxu0 0.0
    %197 = vmatpush1.msra.mxu0 0.0
    %198 = vmatprep.subr.mxu0 0.0
    %199 = vmatpush1.msra.mxu0 0.0
    %200 = vmatprep.subr.mxu0 0.0
    %201 = vmatpush1.msra.mxu0 0.0
    %202 = vmatprep.subr.mxu0 0.0
    %203 = vmatpush1.msra.mxu0 0.0
    %204 = vmatprep.subr.mxu0 0.0
    %205 = vmatpush1.msra.mxu0 0.0
    %206 = vmatprep.subr.mxu0 0.0
    %207 = vmatpush1.msra.mxu0 0.0
    %208 = vmatprep.subr.mxu0 0.0
    %209 = vmatpush1.msra.mxu0 0.0
    %210 = vmatprep.subr.mxu0 0.0
    %211 = vmatpush1.msra.mxu0 %v97
    %212 = vmatprep.subr.mxu0 0.0
    %213 = vmatpush2.msra.mxu0 0.0
    %214 = vmatprep.subr.mxu0 0.0
    %215 = vmatpush2.msra.mxu0 0.0
    %216 = vmatprep.subr.mxu0 0.0
    %217 = vmatpush2.msra.mxu0 0.0
    %218 = vmatprep.subr.mxu0 0.0
    %219 = vmatpush2.msra.mxu0 0.0
    %220 = vmatprep.subr.mxu0 0.0
    %221 = vmatpush2.msra.mxu0 0.0
    %222 = vmatprep.subr.mxu0 0.0
    %223 = vmatpush2.msra.mxu0 0.0
    %224 = vmatprep.subr.mxu0 0.0
    %225 = vmatpush2.msra.mxu0 0.0
    %226 = vmatprep.subr.mxu0 0.0
    %227 = vmatpush2.msra.mxu0 0.0
    %228 = vmatprep.subr.mxu0 0.0
    %229 = vmatpush2.msra.mxu0 0.0
    %230 = vmatprep.subr.mxu0 0.0
    %231 = vmatpush2.msra.mxu0 0.0
    %232 = vmatprep.subr.mxu0 0.0
    %233 = vmatpush2.msra.mxu0 0.0
    %234 = vmatprep.subr.mxu0 0.0
    %235 = vmatpush2.msra.mxu0 0.0
    %236 = vmatprep.subr.mxu0 0.0
    %237 = vmatpush2.msra.mxu0 0.0
    %238 = vmatprep.subr.mxu0 0.0
    %239 = vmatpush2.msra.mxu0 0.0
    %240 = vmatprep.subr.mxu0 0.0
    %241 = vmatpush2.msra.mxu0 0.0
    %242 = vmatprep.subr.mxu0 0.0
    %243 = vmatpush2.msra.mxu0 0.0
    %244 = vmatprep.mubr.f32.mxu0 0.0
    %245 = vmatmul.mubr.f32.gmra.mxu0 %v175
    %v246 = vpop.f32.mrf.mxu0
    %v247 = vadd.f32 0.0, %v246
    %v248 = vpop.f32.mrf.mxu0
    %249 = vmatprep.mubr.f32.mxu0 0.0
    %250 = vmatmul.mubr.f32.gmra.mxu0 %v178
    %v251 = vpop.f32.mrf.mxu0
    %v252 = vadd.f32 0.0, %v251
    %v253 = vpop.f32.mrf.mxu0
    %254 = vdwg.mxu0
    %v255 = vmul.f32 %v166, 0.01
    %v256 = vmul.f32 %v171, 0.01
    %v257 = vmul.f32 %v247, 0.01
    %v258 = vmul.f32 %v252, 0.01
    %v259 = vld [vmem:[%s6] sm:$0xff]
    %v260 = vld [vmem:[%s6 + $0x8] sm:$0x1]
    %v261 = vld [vmem:[%s6 + $0x9] sm:$0x1]
    %v262 = vld [vmem:[%s6 + $0xa] sm:$0x1]
    %v263 = vld [vmem:[%s6 + $0x10] sm:$0xff]
    %265 = vset.pattern.permute.xlu0 0
    %266 = vperm.xlu0 %265, %v166
    %v267 = vpop.permute.xlu0 %266
    %270 = vset.pattern.permute.xlu0 0
    %271 = vperm.xlu0 %270, %v171
    %v272 = vpop.permute.xlu0 %271
    %v274 = vlaneseq
    %v275 = vshrl.u32 %v274, 7
    %v276 = vsub.s32 0, %v275
    %v277 = vrot.slane %v260, %v276
    %v278 = vsub.f32 %v267, %v277
    %v279 = vsub.f32 %v272, %v277
    %v280 = vlaneseq
    %v281 = vshrl.u32 %v280, 7
    %v282 = vsub.s32 0, %v281
    %v283 = vrot.slane %v261, %v282
    %v284 = vmul.f32 %v283, %v278
    %v285 = vmul.f32 %v283, %v279
    %v286 = vmul.f32 %v284, %v278
    %v287 = vmul.f32 %v285, %v279
    %v288 = vmul.f32 %v286, 1.442695
    %v289 = vpow.pop %v288
    %v290 = vmul.f32 %v287, 1.442695
    %v291 = vpow.pop %v290
    %v292 = vlaneseq
    %v293 = vshrl.u32 %v292, 7
    %v294 = vsub.s32 0, %v293
    %v295 = vrot.slane %v262, %v294
    %v296 = vmul.f32 %v295, %v289
    %v297 = vmul.f32 %v295, %v291
    %v298 = vld [vmem:[%s3] sm:$0xff]
    %v299 = vld [vmem:[%s3 + $0x8] sm:$0xff]
    %vm300 = vcmask 64512
    %v302 = vsel %vm300, %v298, 0
    %v305 = vsel %vm300, %v299, 0
    %307 = vmatprep.subr.mxu0 0.0
    %308 = vmatpush1.msra.mxu0 0.0
    %309 = vmatprep.subr.mxu0 0.0
    %310 = vmatpush1.msra.mxu0 0.0
    %311 = vmatprep.subr.mxu0 0.0
    %312 = vmatpush1.msra.mxu0 0.0
    %313 = vmatprep.subr.mxu0 0.0
    %314 = vmatpush1.msra.mxu0 0.0
    %315 = vmatprep.subr.mxu0 0.0
    %316 = vmatpush1.msra.mxu0 0.0
    %317 = vmatprep.subr.mxu0 0.0
    %318 = vmatpush1.msra.mxu0 0.0
    %319 = vmatprep.subr.mxu0 0.0
    %320 = vmatpush1.msra.mxu0 0.0
    %321 = vmatprep.subr.mxu0 0.0
    %322 = vmatpush1.msra.mxu0 0.0
    %323 = vmatprep.subr.mxu0 0.0
    %324 = vmatpush1.msra.mxu0 0.0
    %325 = vmatprep.subr.mxu0 0.0
    %326 = vmatpush1.msra.mxu0 0.0
    %327 = vmatprep.subr.mxu0 0.0
    %328 = vmatpush1.msra.mxu0 0.0
    %329 = vmatprep.subr.mxu0 0.0
    %330 = vmatpush1.msra.mxu0 0.0
    %331 = vmatprep.subr.mxu0 0.0
    %332 = vmatpush1.msra.mxu0 0.0
    %333 = vmatprep.subr.mxu0 0.0
    %334 = vmatpush1.msra.mxu0 0.0
    %335 = vmatprep.subr.mxu0 0.0
    %336 = vmatpush1.msra.mxu0 0.0
    %337 = vmatprep.subr.mxu0 0.0
    %338 = vmatpush1.msra.mxu0 %v259
    %339 = vmatprep.subr.mxu0 0.0
    %340 = vmatpush2.msra.mxu0 0.0
    %341 = vmatprep.subr.mxu0 0.0
    %342 = vmatpush2.msra.mxu0 0.0
    %343 = vmatprep.subr.mxu0 0.0
    %344 = vmatpush2.msra.mxu0 0.0
    %345 = vmatprep.subr.mxu0 0.0
    %346 = vmatpush2.msra.mxu0 0.0
    %347 = vmatprep.subr.mxu0 0.0
    %348 = vmatpush2.msra.mxu0 0.0
    %349 = vmatprep.subr.mxu0 0.0
    %350 = vmatpush2.msra.mxu0 0.0
    %351 = vmatprep.subr.mxu0 0.0
    %352 = vmatpush2.msra.mxu0 0.0
    %353 = vmatprep.subr.mxu0 0.0
    %354 = vmatpush2.msra.mxu0 0.0
    %355 = vmatprep.subr.mxu0 0.0
    %356 = vmatpush2.msra.mxu0 0.0
    %357 = vmatprep.subr.mxu0 0.0
    %358 = vmatpush2.msra.mxu0 0.0
    %359 = vmatprep.subr.mxu0 0.0
    %360 = vmatpush2.msra.mxu0 0.0
    %361 = vmatprep.subr.mxu0 0.0
    %362 = vmatpush2.msra.mxu0 0.0
    %363 = vmatprep.subr.mxu0 0.0
    %364 = vmatpush2.msra.mxu0 0.0
    %365 = vmatprep.subr.mxu0 0.0
    %366 = vmatpush2.msra.mxu0 0.0
    %367 = vmatprep.subr.mxu0 0.0
    %368 = vmatpush2.msra.mxu0 0.0
    %369 = vmatprep.subr.mxu0 0.0
    %370 = vmatpush2.msra.mxu0 0.0
    %371 = vmatprep.mubr.f32.mxu0 0.0
    %372 = vmatmul.mubr.f32.gmra.mxu0 %v302
    %v373 = vpop.f32.mrf.mxu0
    %v374 = vadd.f32 %v296, %v373
    %v375 = vpop.f32.mrf.mxu0
    %376 = vmatprep.mubr.f32.mxu0 0.0
    %377 = vmatmul.mubr.f32.gmra.mxu0 %v305
    %v378 = vpop.f32.mrf.mxu0
    %v379 = vadd.f32 %v297, %v378
    %v380 = vpop.f32.mrf.mxu0
    %381 = vdwg.mxu0
    %v382 = vld [vmem:[%s4] sm:$0xff]
    %v383 = vld [vmem:[%s4 + $0x8] sm:$0xff]
    %v385 = vsel %vm300, %v382, 0
    %v388 = vsel %vm300, %v383, 0
    %390 = vmatprep.subr.mxu0 0.0
    %391 = vmatpush1.msra.mxu0 0.0
    %392 = vmatprep.subr.mxu0 0.0
    %393 = vmatpush1.msra.mxu0 0.0
    %394 = vmatprep.subr.mxu0 0.0
    %395 = vmatpush1.msra.mxu0 0.0
    %396 = vmatprep.subr.mxu0 0.0
    %397 = vmatpush1.msra.mxu0 0.0
    %398 = vmatprep.subr.mxu0 0.0
    %399 = vmatpush1.msra.mxu0 0.0
    %400 = vmatprep.subr.mxu0 0.0
    %401 = vmatpush1.msra.mxu0 0.0
    %402 = vmatprep.subr.mxu0 0.0
    %403 = vmatpush1.msra.mxu0 0.0
    %404 = vmatprep.subr.mxu0 0.0
    %405 = vmatpush1.msra.mxu0 0.0
    %406 = vmatprep.subr.mxu0 0.0
    %407 = vmatpush1.msra.mxu0 0.0
    %408 = vmatprep.subr.mxu0 0.0
    %409 = vmatpush1.msra.mxu0 0.0
    %410 = vmatprep.subr.mxu0 0.0
    %411 = vmatpush1.msra.mxu0 0.0
    %412 = vmatprep.subr.mxu0 0.0
    %413 = vmatpush1.msra.mxu0 0.0
    %414 = vmatprep.subr.mxu0 0.0
    %415 = vmatpush1.msra.mxu0 0.0
    %416 = vmatprep.subr.mxu0 0.0
    %417 = vmatpush1.msra.mxu0 0.0
    %418 = vmatprep.subr.mxu0 0.0
    %419 = vmatpush1.msra.mxu0 0.0
    %420 = vmatprep.subr.mxu0 0.0
    %421 = vmatpush1.msra.mxu0 %v263
    %422 = vmatprep.subr.mxu0 0.0
    %423 = vmatpush2.msra.mxu0 0.0
    %424 = vmatprep.subr.mxu0 0.0
    %425 = vmatpush2.msra.mxu0 0.0
    %426 = vmatprep.subr.mxu0 0.0
    %427 = vmatpush2.msra.mxu0 0.0
    %428 = vmatprep.subr.mxu0 0.0
    %429 = vmatpush2.msra.mxu0 0.0
    %430 = vmatprep.subr.mxu0 0.0
    %431 = vmatpush2.msra.mxu0 0.0
    %432 = vmatprep.subr.mxu0 0.0
    %433 = vmatpush2.msra.mxu0 0.0
    %434 = vmatprep.subr.mxu0 0.0
    %435 = vmatpush2.msra.mxu0 0.0
    %436 = vmatprep.subr.mxu0 0.0
    %437 = vmatpush2.msra.mxu0 0.0
    %438 = vmatprep.subr.mxu0 0.0
    %439 = vmatpush2.msra.mxu0 0.0
    %440 = vmatprep.subr.mxu0 0.0
    %441 = vmatpush2.msra.mxu0 0.0
    %442 = vmatprep.subr.mxu0 0.0
    %443 = vmatpush2.msra.mxu0 0.0
    %444 = vmatprep.subr.mxu0 0.0
    %445 = vmatpush2.msra.mxu0 0.0
    %446 = vmatprep.subr.mxu0 0.0
    %447 = vmatpush2.msra.mxu0 0.0
    %448 = vmatprep.subr.mxu0 0.0
    %449 = vmatpush2.msra.mxu0 0.0
    %450 = vmatprep.subr.mxu0 0.0
    %451 = vmatpush2.msra.mxu0 0.0
    %452 = vmatprep.subr.mxu0 0.0
    %453 = vmatpush2.msra.mxu0 0.0
    %454 = vmatprep.mubr.f32.mxu0 0.0
    %455 = vmatmul.mubr.f32.gmra.mxu0 %v385
    %v456 = vpop.f32.mrf.mxu0
    %v457 = vadd.f32 0.0, %v456
    %v458 = vpop.f32.mrf.mxu0
    %459 = vmatprep.mubr.f32.mxu0 0.0
    %460 = vmatmul.mubr.f32.gmra.mxu0 %v388
    %v461 = vpop.f32.mrf.mxu0
    %v462 = vadd.f32 0.0, %v461
    %v463 = vpop.f32.mrf.mxu0
    %464 = vdwg.mxu0
    %v465 = vsub.f32 %v47, %v59
    %v466 = vsub.f32 %v48, %v60
    %v467 = vld [vmem:[%s5] sm:$0xff]
    %v468 = vld [vmem:[%s5 + $0x8] sm:$0xff]
    %vm469 = vcmask 130048
    %v471 = vsel %vm469, %v465, 0
    %v474 = vsel %vm469, %v466, 0
    %476 = vmatprep.subr.mxu0 0.0
    %477 = vmatpush1.msra.mxu0 0.0
    %478 = vmatprep.subr.mxu0 0.0
    %479 = vmatpush1.msra.mxu0 0.0
    %480 = vmatprep.subr.mxu0 0.0
    %481 = vmatpush1.msra.mxu0 0.0
    %482 = vmatprep.subr.mxu0 0.0
    %483 = vmatpush1.msra.mxu0 0.0
    %484 = vmatprep.subr.mxu0 0.0
    %485 = vmatpush1.msra.mxu0 0.0
    %486 = vmatprep.subr.mxu0 0.0
    %487 = vmatpush1.msra.mxu0 0.0
    %488 = vmatprep.subr.mxu0 0.0
    %489 = vmatpush1.msra.mxu0 0.0
    %490 = vmatprep.subr.mxu0 0.0
    %491 = vmatpush1.msra.mxu0 0.0
    %492 = vmatprep.subr.mxu0 0.0
    %493 = vmatpush1.msra.mxu0 0.0
    %494 = vmatprep.subr.mxu0 0.0
    %495 = vmatpush1.msra.mxu0 0.0
    %496 = vmatprep.subr.mxu0 0.0
    %497 = vmatpush1.msra.mxu0 0.0
    %498 = vmatprep.subr.mxu0 0.0
    %499 = vmatpush1.msra.mxu0 0.0
    %500 = vmatprep.subr.mxu0 0.0
    %501 = vmatpush1.msra.mxu0 0.0
    %502 = vmatprep.subr.mxu0 0.0
    %503 = vmatpush1.msra.mxu0 0.0
    %504 = vmatprep.subr.mxu0 0.0
    %505 = vmatpush1.msra.mxu0 %v468
    %506 = vmatprep.subr.mxu0 0.0
    %507 = vmatpush1.msra.mxu0 %v467
    %508 = vmatprep.subr.mxu0 0.0
    %509 = vmatpush2.msra.mxu0 0.0
    %510 = vmatprep.subr.mxu0 0.0
    %511 = vmatpush2.msra.mxu0 0.0
    %512 = vmatprep.subr.mxu0 0.0
    %513 = vmatpush2.msra.mxu0 0.0
    %514 = vmatprep.subr.mxu0 0.0
    %515 = vmatpush2.msra.mxu0 0.0
    %516 = vmatprep.subr.mxu0 0.0
    %517 = vmatpush2.msra.mxu0 0.0
    %518 = vmatprep.subr.mxu0 0.0
    %519 = vmatpush2.msra.mxu0 0.0
    %520 = vmatprep.subr.mxu0 0.0
    %521 = vmatpush2.msra.mxu0 0.0
    %522 = vmatprep.subr.mxu0 0.0
    %523 = vmatpush2.msra.mxu0 0.0
    %524 = vmatprep.subr.mxu0 0.0
    %525 = vmatpush2.msra.mxu0 0.0
    %526 = vmatprep.subr.mxu0 0.0
    %527 = vmatpush2.msra.mxu0 0.0
    %528 = vmatprep.subr.mxu0 0.0
    %529 = vmatpush2.msra.mxu0 0.0
    %530 = vmatprep.subr.mxu0 0.0
    %531 = vmatpush2.msra.mxu0 0.0
    %532 = vmatprep.subr.mxu0 0.0
    %533 = vmatpush2.msra.mxu0 0.0
    %534 = vmatprep.subr.mxu0 0.0
    %535 = vmatpush2.msra.mxu0 0.0
    %536 = vmatprep.subr.mxu0 0.0
    %537 = vmatpush2.msra.mxu0 0.0
    %538 = vmatprep.subr.mxu0 0.0
    %539 = vmatpush2.msra.mxu0 0.0
    %540 = vmatprep.mubr.f32.mxu0 0.0
    %541 = vmatmul.mubr.f32.gmra.mxu0 %v471
    %v542 = vpop.f32.mrf.mxu0
    %v543 = vadd.f32 0.0, %v542
    %v544 = vpop.f32.mrf.mxu0
    %545 = vmatprep.mubr.f32.mxu0 0.0
    %546 = vmatmul.mubr.f32.gmra.mxu0 %v474
    %v547 = vpop.f32.mrf.mxu0
    %v548 = vadd.f32 0.0, %v547
    %v549 = vpop.f32.mrf.mxu0
    %550 = vdwg.mxu0
    %v551 = vmul.f32 %v543, %v543
    %v552 = vmul.f32 %v548, %v548
    %v553 = vsel %vm300, %v551, 0.0
    %554 = vadd.xlane.f32.xlu0 %v553
    %v555 = vpop.xlane.xlu0 %554
    %v556 = vsel %vm300, %v552, 0.0
    %557 = vadd.xlane.f32.xlu0 %v556
    %v558 = vpop.xlane.xlu0 %557
    %v559 = vrsqrt.pop %v555
    %v560 = vmul.f32 %v555, %v559
    %vm561 = vcmp.eq.f32.partialorder %v555, inf
    %v562 = vsel %vm561, %v555, %v560
    %vm563 = vcmp.eq.f32.partialorder %v555, 0.0
    %v564 = vand.u32 %v555, 2147483648
    %v565 = vsel %vm563, %v564, %v562
    %v566 = vrsqrt.pop %v558
    %v567 = vmul.f32 %v558, %v566
    %vm568 = vcmp.eq.f32.partialorder %v558, inf
    %v569 = vsel %vm568, %v558, %v567
    %vm570 = vcmp.eq.f32.partialorder %v558, 0.0
    %v571 = vand.u32 %v558, 2147483648
    %v572 = vsel %vm570, %v571, %v569
    %v573 = vld [vmem:[%s7] sm:$0xff]
    %v574 = vld [vmem:[%s7 + $0x8] sm:$0xff]
    %v575 = vld [vmem:[%s7 + $0x10] sm:$0xff]
    %v576 = vld [vmem:[%s7 + $0x18] sm:$0xff]
    %v577 = vld [vmem:[%s7 + $0x20] sm:$0xff]
    %v578 = vld [vmem:[%s7 + $0x28] sm:$0xff]
    %v579 = vld [vmem:[%s7 + $0x30] sm:$0xff]
    %v580 = vld [vmem:[%s7 + $0x38] sm:$0xff]
    %v581 = vld [vmem:[%s7 + $0x40] sm:$0xff]
    %v582 = vld [vmem:[%s7 + $0x48] sm:$0xff]
    %v583 = vld [vmem:[%s7 + $0x50] sm:$0xff]
    %v584 = vld [vmem:[%s7 + $0x58] sm:$0xff]
    %v585 = vld [vmem:[%s7 + $0x60] sm:$0xff]
    %v586 = vld [vmem:[%s7 + $0x68] sm:$0xff]
    %v587 = vld [vmem:[%s7 + $0x70] sm:$0xff]
    %v588 = vld [vmem:[%s7 + $0x78] sm:$0xff]
    %v589 = vld [vmem:[%s7 + $0x80] sm:$0xff]
    %v590 = vld [vmem:[%s7 + $0x88] sm:$0xff]
    %v591 = vld [vmem:[%s7 + $0x90] sm:$0xff]
    %v592 = vld [vmem:[%s7 + $0x98] sm:$0xff]
    %v593 = vld [vmem:[%s7 + $0xa0] sm:$0xff]
    %v594 = vld [vmem:[%s7 + $0xa8] sm:$0xff]
    %v595 = vld [vmem:[%s7 + $0xb0] sm:$0xff]
    %v596 = vld [vmem:[%s7 + $0xb8] sm:$0xff]
    %v597 = vld [vmem:[%s7 + $0xc0] sm:$0xff]
    %vm598 = vcmask 261120
    %v600 = vsel %vm598, %v374, 0
    %v603 = vsel %vm598, %v379, 0
    %605 = vmatprep.subr.mxu0 0.0
    %606 = vmatpush1.msra.mxu0 0.0
    %607 = vmatprep.subr.mxu0 0.0
    %608 = vmatpush1.msra.mxu0 0.0
    %609 = vmatprep.subr.mxu0 0.0
    %610 = vmatpush1.msra.mxu0 0.0
    %611 = vmatprep.subr.mxu0 0.0
    %612 = vmatpush1.msra.mxu0 0.0
    %613 = vmatprep.subr.mxu0 0.0
    %614 = vmatpush1.msra.mxu0 0.0
    %615 = vmatprep.subr.mxu0 0.0
    %616 = vmatpush1.msra.mxu0 0.0
    %617 = vmatprep.subr.mxu0 0.0
    %618 = vmatpush1.msra.mxu0 0.0
    %619 = vmatprep.subr.mxu0 0.0
    %620 = vmatpush1.msra.mxu0 0.0
    %621 = vmatprep.subr.mxu0 0.0
    %622 = vmatpush1.msra.mxu0 0.0
    %623 = vmatprep.subr.mxu0 0.0
    %624 = vmatpush1.msra.mxu0 0.0
    %625 = vmatprep.subr.mxu0 0.0
    %626 = vmatpush1.msra.mxu0 0.0
    %627 = vmatprep.subr.mxu0 0.0
    %628 = vmatpush1.msra.mxu0 0.0
    %629 = vmatprep.subr.mxu0 0.0
    %630 = vmatpush1.msra.mxu0 %v576
    %631 = vmatprep.subr.mxu0 0.0
    %632 = vmatpush1.msra.mxu0 %v575
    %633 = vmatprep.subr.mxu0 0.0
    %634 = vmatpush1.msra.mxu0 %v574
    %635 = vmatprep.subr.mxu0 0.0
    %636 = vmatpush1.msra.mxu0 %v573
    %637 = vmatprep.subr.mxu0 0.0
    %638 = vmatpush2.msra.mxu0 0.0
    %639 = vmatprep.subr.mxu0 0.0
    %640 = vmatpush2.msra.mxu0 0.0
    %641 = vmatprep.subr.mxu0 0.0
    %642 = vmatpush2.msra.mxu0 0.0
    %643 = vmatprep.subr.mxu0 0.0
    %644 = vmatpush2.msra.mxu0 0.0
    %645 = vmatprep.subr.mxu0 0.0
    %646 = vmatpush2.msra.mxu0 0.0
    %647 = vmatprep.subr.mxu0 0.0
    %648 = vmatpush2.msra.mxu0 0.0
    %649 = vmatprep.subr.mxu0 0.0
    %650 = vmatpush2.msra.mxu0 0.0
    %651 = vmatprep.subr.mxu0 0.0
    %652 = vmatpush2.msra.mxu0 0.0
    %653 = vmatprep.subr.mxu0 0.0
    %654 = vmatpush2.msra.mxu0 0.0
    %655 = vmatprep.subr.mxu0 0.0
    %656 = vmatpush2.msra.mxu0 0.0
    %657 = vmatprep.subr.mxu0 0.0
    %658 = vmatpush2.msra.mxu0 0.0
    %659 = vmatprep.subr.mxu0 0.0
    %660 = vmatpush2.msra.mxu0 0.0
    %661 = vmatprep.subr.mxu0 0.0
    %662 = vmatpush2.msra.mxu0 0.0
    %663 = vmatprep.subr.mxu0 0.0
    %664 = vmatpush2.msra.mxu0 0.0
    %665 = vmatprep.subr.mxu0 0.0
    %666 = vmatpush2.msra.mxu0 0.0
    %667 = vmatprep.subr.mxu0 0.0
    %668 = vmatpush2.msra.mxu0 0.0
    %669 = vmatprep.mubr.f32.mxu0 0.0
    %670 = vmatmul.mubr.f32.gmra.mxu0 %v600
    %v671 = vpop.f32.mrf.mxu0
    %v672 = vadd.f32 0.0, %v671
    %v673 = vpop.f32.mrf.mxu0
    %674 = vmatprep.mubr.f32.mxu0 0.0
    %675 = vmatmul.mubr.f32.gmra.mxu0 %v603
    %v676 = vpop.f32.mrf.mxu0
    %v677 = vadd.f32 0.0, %v676
    %v678 = vpop.f32.mrf.mxu0
    %679 = vdwg.mxu0
    %680 = vmatprep.subr.mxu0 0.0
    %681 = vmatpush1.msra.mxu0 0.0
    %682 = vmatprep.subr.mxu0 0.0
    %683 = vmatpush1.msra.mxu0 0.0
    %684 = vmatprep.subr.mxu0 0.0
    %685 = vmatpush1.msra.mxu0 0.0
    %686 = vmatprep.subr.mxu0 0.0
    %687 = vmatpush1.msra.mxu0 0.0
    %688 = vmatprep.subr.mxu0 0.0
    %689 = vmatpush1.msra.mxu0 0.0
    %690 = vmatprep.subr.mxu0 0.0
    %691 = vmatpush1.msra.mxu0 0.0
    %692 = vmatprep.subr.mxu0 0.0
    %693 = vmatpush1.msra.mxu0 0.0
    %694 = vmatprep.subr.mxu0 0.0
    %695 = vmatpush1.msra.mxu0 0.0
    %696 = vmatprep.subr.mxu0 0.0
    %697 = vmatpush1.msra.mxu0 0.0
    %698 = vmatprep.subr.mxu0 0.0
    %699 = vmatpush1.msra.mxu0 0.0
    %700 = vmatprep.subr.mxu0 0.0
    %701 = vmatpush1.msra.mxu0 0.0
    %702 = vmatprep.subr.mxu0 0.0
    %703 = vmatpush1.msra.mxu0 0.0
    %704 = vmatprep.subr.mxu0 0.0
    %705 = vmatpush1.msra.mxu0 %v580
    %706 = vmatprep.subr.mxu0 0.0
    %707 = vmatpush1.msra.mxu0 %v579
    %708 = vmatprep.subr.mxu0 0.0
    %709 = vmatpush1.msra.mxu0 %v578
    %710 = vmatprep.subr.mxu0 0.0
    %711 = vmatpush1.msra.mxu0 %v577
    %712 = vmatprep.subr.mxu0 0.0
    %713 = vmatpush2.msra.mxu0 0.0
    %714 = vmatprep.subr.mxu0 0.0
    %715 = vmatpush2.msra.mxu0 0.0
    %716 = vmatprep.subr.mxu0 0.0
    %717 = vmatpush2.msra.mxu0 0.0
    %718 = vmatprep.subr.mxu0 0.0
    %719 = vmatpush2.msra.mxu0 0.0
    %720 = vmatprep.subr.mxu0 0.0
    %721 = vmatpush2.msra.mxu0 0.0
    %722 = vmatprep.subr.mxu0 0.0
    %723 = vmatpush2.msra.mxu0 0.0
    %724 = vmatprep.subr.mxu0 0.0
    %725 = vmatpush2.msra.mxu0 0.0
    %726 = vmatprep.subr.mxu0 0.0
    %727 = vmatpush2.msra.mxu0 0.0
    %728 = vmatprep.subr.mxu0 0.0
    %729 = vmatpush2.msra.mxu0 0.0
    %730 = vmatprep.subr.mxu0 0.0
    %731 = vmatpush2.msra.mxu0 0.0
    %732 = vmatprep.subr.mxu0 0.0
    %733 = vmatpush2.msra.mxu0 0.0
    %734 = vmatprep.subr.mxu0 0.0
    %735 = vmatpush2.msra.mxu0 0.0
    %736 = vmatprep.subr.mxu0 0.0
    %737 = vmatpush2.msra.mxu0 0.0
    %738 = vmatprep.subr.mxu0 0.0
    %739 = vmatpush2.msra.mxu0 0.0
    %740 = vmatprep.subr.mxu0 0.0
    %741 = vmatpush2.msra.mxu0 0.0
    %742 = vmatprep.subr.mxu0 0.0
    %743 = vmatpush2.msra.mxu0 0.0
    %744 = vmatprep.mubr.f32.mxu0 0.0
    %745 = vmatmul.mubr.f32.gmra.mxu0 %v600
    %v746 = vpop.f32.mrf.mxu0
    %v747 = vadd.f32 0.0, %v746
    %v748 = vpop.f32.mrf.mxu0
    %749 = vmatprep.mubr.f32.mxu0 0.0
    %750 = vmatmul.mubr.f32.gmra.mxu0 %v603
    %v751 = vpop.f32.mrf.mxu0
    %v752 = vadd.f32 0.0, %v751
    %v753 = vpop.f32.mrf.mxu0
    %754 = vdwg.mxu0
    %v756 = vsel %vm469, %v59, 0
    %v759 = vsel %vm469, %v60, 0
    %761 = vmatprep.subr.mxu0 0.0
    %762 = vmatpush1.msra.mxu0 0.0
    %763 = vmatprep.subr.mxu0 0.0
    %764 = vmatpush1.msra.mxu0 0.0
    %765 = vmatprep.subr.mxu0 0.0
    %766 = vmatpush1.msra.mxu0 0.0
    %767 = vmatprep.subr.mxu0 0.0
    %768 = vmatpush1.msra.mxu0 0.0
    %769 = vmatprep.subr.mxu0 0.0
    %770 = vmatpush1.msra.mxu0 0.0
    %771 = vmatprep.subr.mxu0 0.0
    %772 = vmatpush1.msra.mxu0 0.0
    %773 = vmatprep.subr.mxu0 0.0
    %774 = vmatpush1.msra.mxu0 0.0
    %775 = vmatprep.subr.mxu0 0.0
    %776 = vmatpush1.msra.mxu0 0.0
    %777 = vmatprep.subr.mxu0 0.0
    %778 = vmatpush1.msra.mxu0 0.0
    %779 = vmatprep.subr.mxu0 0.0
    %780 = vmatpush1.msra.mxu0 0.0
    %781 = vmatprep.subr.mxu0 0.0
    %782 = vmatpush1.msra.mxu0 0.0
    %783 = vmatprep.subr.mxu0 0.0
    %784 = vmatpush1.msra.mxu0 0.0
    %785 = vmatprep.subr.mxu0 0.0
    %786 = vmatpush1.msra.mxu0 0.0
    %787 = vmatprep.subr.mxu0 0.0
    %788 = vmatpush1.msra.mxu0 0.0
    %789 = vmatprep.subr.mxu0 0.0
    %790 = vmatpush1.msra.mxu0 %v752
    %791 = vmatprep.subr.mxu0 0.0
    %792 = vmatpush1.msra.mxu0 %v747
    %793 = vmatprep.subr.mxu0 0.0
    %794 = vmatpush2.msra.mxu0 0.0
    %795 = vmatprep.subr.mxu0 0.0
    %796 = vmatpush2.msra.mxu0 0.0
    %797 = vmatprep.subr.mxu0 0.0
    %798 = vmatpush2.msra.mxu0 0.0
    %799 = vmatprep.subr.mxu0 0.0
    %800 = vmatpush2.msra.mxu0 0.0
    %801 = vmatprep.subr.mxu0 0.0
    %802 = vmatpush2.msra.mxu0 0.0
    %803 = vmatprep.subr.mxu0 0.0
    %804 = vmatpush2.msra.mxu0 0.0
    %805 = vmatprep.subr.mxu0 0.0
    %806 = vmatpush2.msra.mxu0 0.0
    %807 = vmatprep.subr.mxu0 0.0
    %808 = vmatpush2.msra.mxu0 0.0
    %809 = vmatprep.subr.mxu0 0.0
    %810 = vmatpush2.msra.mxu0 0.0
    %811 = vmatprep.subr.mxu0 0.0
    %812 = vmatpush2.msra.mxu0 0.0
    %813 = vmatprep.subr.mxu0 0.0
    %814 = vmatpush2.msra.mxu0 0.0
    %815 = vmatprep.subr.mxu0 0.0
    %816 = vmatpush2.msra.mxu0 0.0
    %817 = vmatprep.subr.mxu0 0.0
    %818 = vmatpush2.msra.mxu0 0.0
    %819 = vmatprep.subr.mxu0 0.0
    %820 = vmatpush2.msra.mxu0 0.0
    %821 = vmatprep.subr.mxu0 0.0
    %822 = vmatpush2.msra.mxu0 0.0
    %823 = vmatprep.subr.mxu0 0.0
    %824 = vmatpush2.msra.mxu0 0.0
    %825 = vmatprep.mubr.f32.mxu0 0.0
    %826 = vmatmul.mubr.f32.gmra.mxu0 %v756
    %v827 = vpop.f32.mrf.mxu0
    %v828 = vadd.f32 0.0, %v827
    %v829 = vpop.f32.mrf.mxu0
    %830 = vmatprep.mubr.f32.mxu0 0.0
    %831 = vmatmul.mubr.f32.gmra.mxu0 %v759
    %v832 = vpop.f32.mrf.mxu0
    %v833 = vadd.f32 0.0, %v832
    %v834 = vpop.f32.mrf.mxu0
    %835 = vdwg.mxu0
    %v837 = vsel %vm469, %v47, 0
    %v840 = vsel %vm469, %v48, 0
    %842 = vmatprep.subr.mxu0 0.0
    %843 = vmatpush1.msra.mxu0 0.0
    %844 = vmatprep.subr.mxu0 0.0
    %845 = vmatpush1.msra.mxu0 0.0
    %846 = vmatprep.subr.mxu0 0.0
    %847 = vmatpush1.msra.mxu0 0.0
    %848 = vmatprep.subr.mxu0 0.0
    %849 = vmatpush1.msra.mxu0 0.0
    %850 = vmatprep.subr.mxu0 0.0
    %851 = vmatpush1.msra.mxu0 0.0
    %852 = vmatprep.subr.mxu0 0.0
    %853 = vmatpush1.msra.mxu0 0.0
    %854 = vmatprep.subr.mxu0 0.0
    %855 = vmatpush1.msra.mxu0 0.0
    %856 = vmatprep.subr.mxu0 0.0
    %857 = vmatpush1.msra.mxu0 0.0
    %858 = vmatprep.subr.mxu0 0.0
    %859 = vmatpush1.msra.mxu0 0.0
    %860 = vmatprep.subr.mxu0 0.0
    %861 = vmatpush1.msra.mxu0 0.0
    %862 = vmatprep.subr.mxu0 0.0
    %863 = vmatpush1.msra.mxu0 0.0
    %864 = vmatprep.subr.mxu0 0.0
    %865 = vmatpush1.msra.mxu0 0.0
    %866 = vmatprep.subr.mxu0 0.0
    %867 = vmatpush1.msra.mxu0 0.0
    %868 = vmatprep.subr.mxu0 0.0
    %869 = vmatpush1.msra.mxu0 0.0
    %870 = vmatprep.subr.mxu0 0.0
    %871 = vmatpush1.msra.mxu0 %v677
    %872 = vmatprep.subr.mxu0 0.0
    %873 = vmatpush1.msra.mxu0 %v672
    %874 = vmatprep.subr.mxu0 0.0
    %875 = vmatpush2.msra.mxu0 0.0
    %876 = vmatprep.subr.mxu0 0.0
    %877 = vmatpush2.msra.mxu0 0.0
    %878 = vmatprep.subr.mxu0 0.0
    %879 = vmatpush2.msra.mxu0 0.0
    %880 = vmatprep.subr.mxu0 0.0
    %881 = vmatpush2.msra.mxu0 0.0
    %882 = vmatprep.subr.mxu0 0.0
    %883 = vmatpush2.msra.mxu0 0.0
    %884 = vmatprep.subr.mxu0 0.0
    %885 = vmatpush2.msra.mxu0 0.0
    %886 = vmatprep.subr.mxu0 0.0
    %887 = vmatpush2.msra.mxu0 0.0
    %888 = vmatprep.subr.mxu0 0.0
    %889 = vmatpush2.msra.mxu0 0.0
    %890 = vmatprep.subr.mxu0 0.0
    %891 = vmatpush2.msra.mxu0 0.0
    %892 = vmatprep.subr.mxu0 0.0
    %893 = vmatpush2.msra.mxu0 0.0
    %894 = vmatprep.subr.mxu0 0.0
    %895 = vmatpush2.msra.mxu0 0.0
    %896 = vmatprep.subr.mxu0 0.0
    %897 = vmatpush2.msra.mxu0 0.0
    %898 = vmatprep.subr.mxu0 0.0
    %899 = vmatpush2.msra.mxu0 0.0
    %900 = vmatprep.subr.mxu0 0.0
    %901 = vmatpush2.msra.mxu0 0.0
    %902 = vmatprep.subr.mxu0 0.0
    %903 = vmatpush2.msra.mxu0 0.0
    %904 = vmatprep.subr.mxu0 0.0
    %905 = vmatpush2.msra.mxu0 0.0
    %906 = vmatprep.mubr.f32.mxu0 0.0
    %907 = vmatmul.mubr.f32.gmra.mxu0 %v837
    %v908 = vpop.f32.mrf.mxu0
    %v909 = vadd.f32 %v828, %v908
    %v910 = vpop.f32.mrf.mxu0
    %911 = vmatprep.mubr.f32.mxu0 0.0
    %912 = vmatmul.mubr.f32.gmra.mxu0 %v840
    %v913 = vpop.f32.mrf.mxu0
    %v914 = vadd.f32 %v833, %v913
    %v915 = vpop.f32.mrf.mxu0
    %916 = vdwg.mxu0
    %v918 = vsel %vm469, %v457, 0
    %v921 = vsel %vm469, %v462, 0
    %923 = vmatprep.subr.mxu0 0.0
    %924 = vmatpush1.msra.mxu0 0.0
    %925 = vmatprep.subr.mxu0 0.0
    %926 = vmatpush1.msra.mxu0 0.0
    %927 = vmatprep.subr.mxu0 0.0
    %928 = vmatpush1.msra.mxu0 0.0
    %929 = vmatprep.subr.mxu0 0.0
    %930 = vmatpush1.msra.mxu0 0.0
    %931 = vmatprep.subr.mxu0 0.0
    %932 = vmatpush1.msra.mxu0 0.0
    %933 = vmatprep.subr.mxu0 0.0
    %934 = vmatpush1.msra.mxu0 0.0
    %935 = vmatprep.subr.mxu0 0.0
    %936 = vmatpush1.msra.mxu0 0.0
    %937 = vmatprep.subr.mxu0 0.0
    %938 = vmatpush1.msra.mxu0 0.0
    %939 = vmatprep.subr.mxu0 0.0
    %940 = vmatpush1.msra.mxu0 0.0
    %941 = vmatprep.subr.mxu0 0.0
    %942 = vmatpush1.msra.mxu0 0.0
    %943 = vmatprep.subr.mxu0 0.0
    %944 = vmatpush1.msra.mxu0 0.0
    %945 = vmatprep.subr.mxu0 0.0
    %946 = vmatpush1.msra.mxu0 0.0
    %947 = vmatprep.subr.mxu0 0.0
    %948 = vmatpush1.msra.mxu0 0.0
    %949 = vmatprep.subr.mxu0 0.0
    %950 = vmatpush1.msra.mxu0 0.0
    %951 = vmatprep.subr.mxu0 0.0
    %952 = vmatpush1.msra.mxu0 %v582
    %953 = vmatprep.subr.mxu0 0.0
    %954 = vmatpush1.msra.mxu0 %v581
    %955 = vmatprep.subr.mxu0 0.0
    %956 = vmatpush2.msra.mxu0 0.0
    %957 = vmatprep.subr.mxu0 0.0
    %958 = vmatpush2.msra.mxu0 0.0
    %959 = vmatprep.subr.mxu0 0.0
    %960 = vmatpush2.msra.mxu0 0.0
    %961 = vmatprep.subr.mxu0 0.0
    %962 = vmatpush2.msra.mxu0 0.0
    %963 = vmatprep.subr.mxu0 0.0
    %964 = vmatpush2.msra.mxu0 0.0
    %965 = vmatprep.subr.mxu0 0.0
    %966 = vmatpush2.msra.mxu0 0.0
    %967 = vmatprep.subr.mxu0 0.0
    %968 = vmatpush2.msra.mxu0 0.0
    %969 = vmatprep.subr.mxu0 0.0
    %970 = vmatpush2.msra.mxu0 0.0
    %971 = vmatprep.subr.mxu0 0.0
    %972 = vmatpush2.msra.mxu0 0.0
    %973 = vmatprep.subr.mxu0 0.0
    %974 = vmatpush2.msra.mxu0 0.0
    %975 = vmatprep.subr.mxu0 0.0
    %976 = vmatpush2.msra.mxu0 0.0
    %977 = vmatprep.subr.mxu0 0.0
    %978 = vmatpush2.msra.mxu0 0.0
    %979 = vmatprep.subr.mxu0 0.0
    %980 = vmatpush2.msra.mxu0 0.0
    %981 = vmatprep.subr.mxu0 0.0
    %982 = vmatpush2.msra.mxu0 0.0
    %983 = vmatprep.subr.mxu0 0.0
    %984 = vmatpush2.msra.mxu0 0.0
    %985 = vmatprep.subr.mxu0 0.0
    %986 = vmatpush2.msra.mxu0 0.0
    %987 = vmatprep.mubr.f32.mxu0 0.0
    %988 = vmatmul.mubr.f32.gmra.mxu0 %v918
    %v989 = vpop.f32.mrf.mxu0
    %v990 = vadd.f32 0.0, %v989
    %v991 = vpop.f32.mrf.mxu0
    %992 = vmatprep.mubr.f32.mxu0 0.0
    %993 = vmatmul.mubr.f32.gmra.mxu0 %v921
    %v994 = vpop.f32.mrf.mxu0
    %v995 = vadd.f32 0.0, %v994
    %v996 = vpop.f32.mrf.mxu0
    %997 = vdwg.mxu0
    %v998 = vadd.f32 %v909, %v990
    %v999 = vadd.f32 %v914, %v995
    %v1000 = vlaneseq
    %v1001 = vshrl.u32 %v1000, 7
    %v1002 = vsub.s32 0, %v1001
    %v1003 = vrot.slane %v597, %v1002
    %v1004 = vmul.f32 %v565, %v1003
    %v1005 = vmul.f32 %v572, %v1003
    %v1006 = vadd.f32 %v998, %v1004
    %v1007 = vadd.f32 %v999, %v1005
    %1009 = vset.pattern.permute.xlu0 0
    %1010 = vperm.xlu0 %1009, %v257
    %v1011 = vpop.permute.xlu0 %1010
    %1014 = vset.pattern.permute.xlu0 0
    %1015 = vperm.xlu0 %1014, %v258
    %v1016 = vpop.permute.xlu0 %1015
    %v1018 = vlaneseq
    %v1019 = vshrl.u32 %v1018, 7
    %v1020 = vsub.s32 1, %v1019
    %v1021 = vrot.slane %v597, %v1020
    %v1022 = vmul.f32 %v1011, %v1021
    %v1023 = vmul.f32 %v1016, %v1021
    %v1024 = vadd.f32 %v1006, %v1022
    %v1025 = vadd.f32 %v1007, %v1023
    %v1026 = vlaneseq
    %v1027 = vshrl.u32 %v1026, 7
    %v1028 = vsub.s32 2, %v1027
    %v1029 = vrot.slane %v597, %v1028
    %v1030 = vadd.f32 %v1024, %v1029
    %v1031 = vadd.f32 %v1025, %v1029
    %v1032 = vmax.f32 %v1030, 0.0
    %v1033 = vmax.f32 %v1031, 0.0
    %1034 = vxpose.xlu0.b32.start [1/16] %v59, 128
    %1035 = vxpose.xlu0.b32.cont [2/16] %v60, 128
    %1036 = vxpose.xlu0.b32.cont [3/16] 0.0, 128
    %1037 = vxpose.xlu0.b32.cont [4/16] 0.0, 128
    %1038 = vxpose.xlu0.b32.cont [5/16] 0.0, 128
    %1039 = vxpose.xlu0.b32.cont [6/16] 0.0, 128
    %1040 = vxpose.xlu0.b32.cont [7/16] 0.0, 128
    %1041 = vxpose.xlu0.b32.cont [8/16] 0.0, 128
    %1042 = vxpose.xlu0.b32.cont [9/16] 0.0, 128
    %1043 = vxpose.xlu0.b32.cont [10/16] 0.0, 128
    %1044 = vxpose.xlu0.b32.cont [11/16] 0.0, 128
    %1045 = vxpose.xlu0.b32.cont [12/16] 0.0, 128
    %1046 = vxpose.xlu0.b32.cont [13/16] 0.0, 128
    %1047 = vxpose.xlu0.b32.cont [14/16] 0.0, 128
    %1048 = vxpose.xlu0.b32.cont [15/16] 0.0, 128
    %1049 = vxpose.xlu0.b32.end [16/16] 0.0, 128
    %v1050 = vpop.trf.xlu0
    %v1051 = vpop.trf.xlu0
    %v1052 = vpop.trf.xlu0
    %v1053 = vpop.trf.xlu0
    %v1054 = vpop.trf.xlu0
    %v1055 = vpop.trf.xlu0
    %v1056 = vpop.trf.xlu0
    %v1057 = vpop.trf.xlu0
    %v1058 = vpop.trf.xlu0
    %v1059 = vpop.trf.xlu0
    %v1060 = vpop.trf.xlu0
    %v1061 = vpop.trf.xlu0
    %v1062 = vpop.trf.xlu0
    %v1063 = vpop.trf.xlu0
    %v1064 = vpop.trf.xlu0
    %v1065 = vpop.trf.xlu0
    %v1067 = vsel %vm469, %v1050, 0
    %v1070 = vsel %vm469, %v1051, 0
    %1072 = vmatprep.subr.mxu0 0.0
    %1073 = vmatpush1.msra.mxu0 0.0
    %1074 = vmatprep.subr.mxu0 0.0
    %1075 = vmatpush1.msra.mxu0 0.0
    %1076 = vmatprep.subr.mxu0 0.0
    %1077 = vmatpush1.msra.mxu0 0.0
    %1078 = vmatprep.subr.mxu0 0.0
    %1079 = vmatpush1.msra.mxu0 0.0
    %1080 = vmatprep.subr.mxu0 0.0
    %1081 = vmatpush1.msra.mxu0 0.0
    %1082 = vmatprep.subr.mxu0 0.0
    %1083 = vmatpush1.msra.mxu0 0.0
    %1084 = vmatprep.subr.mxu0 0.0
    %1085 = vmatpush1.msra.mxu0 0.0
    %1086 = vmatprep.subr.mxu0 0.0
    %1087 = vmatpush1.msra.mxu0 0.0
    %1088 = vmatprep.subr.mxu0 0.0
    %1089 = vmatpush1.msra.mxu0 0.0
    %1090 = vmatprep.subr.mxu0 0.0
    %1091 = vmatpush1.msra.mxu0 0.0
    %1092 = vmatprep.subr.mxu0 0.0
    %1093 = vmatpush1.msra.mxu0 0.0
    %1094 = vmatprep.subr.mxu0 0.0
    %1095 = vmatpush1.msra.mxu0 0.0
    %1096 = vmatprep.subr.mxu0 0.0
    %1097 = vmatpush1.msra.mxu0 0.0
    %1098 = vmatprep.subr.mxu0 0.0
    %1099 = vmatpush1.msra.mxu0 0.0
    %1100 = vmatprep.subr.mxu0 0.0
    %1101 = vmatpush1.msra.mxu0 %v1033
    %1102 = vmatprep.subr.mxu0 0.0
    %1103 = vmatpush1.msra.mxu0 %v1032
    %1104 = vmatprep.subr.mxu0 0.0
    %1105 = vmatpush2.msra.mxu0 0.0
    %1106 = vmatprep.subr.mxu0 0.0
    %1107 = vmatpush2.msra.mxu0 0.0
    %1108 = vmatprep.subr.mxu0 0.0
    %1109 = vmatpush2.msra.mxu0 0.0
    %1110 = vmatprep.subr.mxu0 0.0
    %1111 = vmatpush2.msra.mxu0 0.0
    %1112 = vmatprep.subr.mxu0 0.0
    %1113 = vmatpush2.msra.mxu0 0.0
    %1114 = vmatprep.subr.mxu0 0.0
    %1115 = vmatpush2.msra.mxu0 0.0
    %1116 = vmatprep.subr.mxu0 0.0
    %1117 = vmatpush2.msra.mxu0 0.0
    %1118 = vmatprep.subr.mxu0 0.0
    %1119 = vmatpush2.msra.mxu0 0.0
    %1120 = vmatprep.subr.mxu0 0.0
    %1121 = vmatpush2.msra.mxu0 0.0
    %1122 = vmatprep.subr.mxu0 0.0
    %1123 = vmatpush2.msra.mxu0 0.0
    %1124 = vmatprep.subr.mxu0 0.0
    %1125 = vmatpush2.msra.mxu0 0.0
    %1126 = vmatprep.subr.mxu0 0.0
    %1127 = vmatpush2.msra.mxu0 0.0
    %1128 = vmatprep.subr.mxu0 0.0
    %1129 = vmatpush2.msra.mxu0 0.0
    %1130 = vmatprep.subr.mxu0 0.0
    %1131 = vmatpush2.msra.mxu0 0.0
    %1132 = vmatprep.subr.mxu0 0.0
    %1133 = vmatpush2.msra.mxu0 0.0
    %1134 = vmatprep.subr.mxu0 0.0
    %1135 = vmatpush2.msra.mxu0 0.0
    %1136 = vmatprep.mubr.f32.mxu0 0.0
    %1137 = vmatmul.mubr.f32.gmra.mxu0 %v1067
    %v1138 = vpop.f32.mrf.mxu0
    %v1139 = vadd.f32 0.0, %v1138
    %v1140 = vpop.f32.mrf.mxu0
    %1141 = vmatprep.mubr.f32.mxu0 0.0
    %1142 = vmatmul.mubr.f32.gmra.mxu0 %v1070
    %v1143 = vpop.f32.mrf.mxu0
    %v1144 = vadd.f32 0.0, %v1143
    %v1145 = vpop.f32.mrf.mxu0
    %1146 = vdwg.mxu0
    %v1148 = vsel %vm598, %v1139, 0
    %v1151 = vsel %vm598, %v1144, 0
    %1153 = vmatprep.subr.mxu0 0.0
    %1154 = vmatpush1.msra.mxu0 0.0
    %1155 = vmatprep.subr.mxu0 0.0
    %1156 = vmatpush1.msra.mxu0 0.0
    %1157 = vmatprep.subr.mxu0 0.0
    %1158 = vmatpush1.msra.mxu0 0.0
    %1159 = vmatprep.subr.mxu0 0.0
    %1160 = vmatpush1.msra.mxu0 0.0
    %1161 = vmatprep.subr.mxu0 0.0
    %1162 = vmatpush1.msra.mxu0 0.0
    %1163 = vmatprep.subr.mxu0 0.0
    %1164 = vmatpush1.msra.mxu0 0.0
    %1165 = vmatprep.subr.mxu0 0.0
    %1166 = vmatpush1.msra.mxu0 0.0
    %1167 = vmatprep.subr.mxu0 0.0
    %1168 = vmatpush1.msra.mxu0 0.0
    %1169 = vmatprep.subr.mxu0 0.0
    %1170 = vmatpush1.msra.mxu0 0.0
    %1171 = vmatprep.subr.mxu0 0.0
    %1172 = vmatpush1.msra.mxu0 0.0
    %1173 = vmatprep.subr.mxu0 0.0
    %1174 = vmatpush1.msra.mxu0 0.0
    %1175 = vmatprep.subr.mxu0 0.0
    %1176 = vmatpush1.msra.mxu0 0.0
    %1177 = vmatprep.subr.mxu0 0.0
    %1178 = vmatpush1.msra.mxu0 %v590
    %1179 = vmatprep.subr.mxu0 0.0
    %1180 = vmatpush1.msra.mxu0 %v589
    %1181 = vmatprep.subr.mxu0 0.0
    %1182 = vmatpush1.msra.mxu0 %v588
    %1183 = vmatprep.subr.mxu0 0.0
    %1184 = vmatpush1.msra.mxu0 %v587
    %1185 = vmatprep.subr.mxu0 0.0
    %1186 = vmatpush2.msra.mxu0 0.0
    %1187 = vmatprep.subr.mxu0 0.0
    %1188 = vmatpush2.msra.mxu0 0.0
    %1189 = vmatprep.subr.mxu0 0.0
    %1190 = vmatpush2.msra.mxu0 0.0
    %1191 = vmatprep.subr.mxu0 0.0
    %1192 = vmatpush2.msra.mxu0 0.0
    %1193 = vmatprep.subr.mxu0 0.0
    %1194 = vmatpush2.msra.mxu0 0.0
    %1195 = vmatprep.subr.mxu0 0.0
    %1196 = vmatpush2.msra.mxu0 0.0
    %1197 = vmatprep.subr.mxu0 0.0
    %1198 = vmatpush2.msra.mxu0 0.0
    %1199 = vmatprep.subr.mxu0 0.0
    %1200 = vmatpush2.msra.mxu0 0.0
    %1201 = vmatprep.subr.mxu0 0.0
    %1202 = vmatpush2.msra.mxu0 0.0
    %1203 = vmatprep.subr.mxu0 0.0
    %1204 = vmatpush2.msra.mxu0 0.0
    %1205 = vmatprep.subr.mxu0 0.0
    %1206 = vmatpush2.msra.mxu0 0.0
    %1207 = vmatprep.subr.mxu0 0.0
    %1208 = vmatpush2.msra.mxu0 0.0
    %1209 = vmatprep.subr.mxu0 0.0
    %1210 = vmatpush2.msra.mxu0 0.0
    %1211 = vmatprep.subr.mxu0 0.0
    %1212 = vmatpush2.msra.mxu0 0.0
    %1213 = vmatprep.subr.mxu0 0.0
    %1214 = vmatpush2.msra.mxu0 0.0
    %1215 = vmatprep.subr.mxu0 0.0
    %1216 = vmatpush2.msra.mxu0 0.0
    %1217 = vmatprep.mubr.f32.mxu0 0.0
    %1218 = vmatmul.mubr.f32.gmra.mxu0 %v1148
    %v1219 = vpop.f32.mrf.mxu0
    %v1220 = vadd.f32 0.0, %v1219
    %v1221 = vpop.f32.mrf.mxu0
    %1222 = vmatprep.mubr.f32.mxu0 0.0
    %1223 = vmatmul.mubr.f32.gmra.mxu0 %v1151
    %v1224 = vpop.f32.mrf.mxu0
    %v1225 = vadd.f32 0.0, %v1224
    %v1226 = vpop.f32.mrf.mxu0
    %1227 = vdwg.mxu0
    %1228 = vmatprep.subr.mxu0 0.0
    %1229 = vmatpush1.msra.mxu0 0.0
    %1230 = vmatprep.subr.mxu0 0.0
    %1231 = vmatpush1.msra.mxu0 0.0
    %1232 = vmatprep.subr.mxu0 0.0
    %1233 = vmatpush1.msra.mxu0 0.0
    %1234 = vmatprep.subr.mxu0 0.0
    %1235 = vmatpush1.msra.mxu0 0.0
    %1236 = vmatprep.subr.mxu0 0.0
    %1237 = vmatpush1.msra.mxu0 0.0
    %1238 = vmatprep.subr.mxu0 0.0
    %1239 = vmatpush1.msra.mxu0 0.0
    %1240 = vmatprep.subr.mxu0 0.0
    %1241 = vmatpush1.msra.mxu0 0.0
    %1242 = vmatprep.subr.mxu0 0.0
    %1243 = vmatpush1.msra.mxu0 0.0
    %1244 = vmatprep.subr.mxu0 0.0
    %1245 = vmatpush1.msra.mxu0 0.0
    %1246 = vmatprep.subr.mxu0 0.0
    %1247 = vmatpush1.msra.mxu0 0.0
    %1248 = vmatprep.subr.mxu0 0.0
    %1249 = vmatpush1.msra.mxu0 0.0
    %1250 = vmatprep.subr.mxu0 0.0
    %1251 = vmatpush1.msra.mxu0 0.0
    %1252 = vmatprep.subr.mxu0 0.0
    %1253 = vmatpush1.msra.mxu0 %v586
    %1254 = vmatprep.subr.mxu0 0.0
    %1255 = vmatpush1.msra.mxu0 %v585
    %1256 = vmatprep.subr.mxu0 0.0
    %1257 = vmatpush1.msra.mxu0 %v584
    %1258 = vmatprep.subr.mxu0 0.0
    %1259 = vmatpush1.msra.mxu0 %v583
    %1260 = vmatprep.subr.mxu0 0.0
    %1261 = vmatpush2.msra.mxu0 0.0
    %1262 = vmatprep.subr.mxu0 0.0
    %1263 = vmatpush2.msra.mxu0 0.0
    %1264 = vmatprep.subr.mxu0 0.0
    %1265 = vmatpush2.msra.mxu0 0.0
    %1266 = vmatprep.subr.mxu0 0.0
    %1267 = vmatpush2.msra.mxu0 0.0
    %1268 = vmatprep.subr.mxu0 0.0
    %1269 = vmatpush2.msra.mxu0 0.0
    %1270 = vmatprep.subr.mxu0 0.0
    %1271 = vmatpush2.msra.mxu0 0.0
    %1272 = vmatprep.subr.mxu0 0.0
    %1273 = vmatpush2.msra.mxu0 0.0
    %1274 = vmatprep.subr.mxu0 0.0
    %1275 = vmatpush2.msra.mxu0 0.0
    %1276 = vmatprep.subr.mxu0 0.0
    %1277 = vmatpush2.msra.mxu0 0.0
    %1278 = vmatprep.subr.mxu0 0.0
    %1279 = vmatpush2.msra.mxu0 0.0
    %1280 = vmatprep.subr.mxu0 0.0
    %1281 = vmatpush2.msra.mxu0 0.0
    %1282 = vmatprep.subr.mxu0 0.0
    %1283 = vmatpush2.msra.mxu0 0.0
    %1284 = vmatprep.subr.mxu0 0.0
    %1285 = vmatpush2.msra.mxu0 0.0
    %1286 = vmatprep.subr.mxu0 0.0
    %1287 = vmatpush2.msra.mxu0 0.0
    %1288 = vmatprep.subr.mxu0 0.0
    %1289 = vmatpush2.msra.mxu0 0.0
    %1290 = vmatprep.subr.mxu0 0.0
    %1291 = vmatpush2.msra.mxu0 0.0
    %1292 = vmatprep.mubr.f32.mxu0 0.0
    %1293 = vmatmul.mubr.f32.gmra.mxu0 %v600
    %v1294 = vpop.f32.mrf.mxu0
    %v1295 = vadd.f32 %v1220, %v1294
    %v1296 = vpop.f32.mrf.mxu0
    %1297 = vmatprep.mubr.f32.mxu0 0.0
    %1298 = vmatmul.mubr.f32.gmra.mxu0 %v603
    %v1299 = vpop.f32.mrf.mxu0
    %v1300 = vadd.f32 %v1225, %v1299
    %v1301 = vpop.f32.mrf.mxu0
    %1302 = vdwg.mxu0
    %1304 = vset.pattern.permute.xlu0 0
    %1305 = vperm.xlu0 %1304, %v255
    %v1306 = vpop.permute.xlu0 %1305
    %1309 = vset.pattern.permute.xlu0 0
    %1310 = vperm.xlu0 %1309, %v256
    %v1311 = vpop.permute.xlu0 %1310
    %v1313 = vlaneseq
    %v1314 = vshrl.u32 %v1313, 7
    %v1315 = vsub.s32 3, %v1314
    %v1316 = vrot.slane %v597, %v1315
    %v1317 = vmul.f32 %v1306, %v1316
    %v1318 = vmul.f32 %v1311, %v1316
    %v1319 = vadd.f32 %v1295, %v1317
    %v1320 = vadd.f32 %v1300, %v1318
    %v1321 = vlaneseq
    %v1322 = vshrl.u32 %v1321, 7
    %v1323 = vsub.s32 4, %v1322
    %v1324 = vrot.slane %v597, %v1323
    %v1325 = vadd.f32 %v1319, %v1324
    %v1326 = vadd.f32 %v1320, %v1324
    %v1327 = vmax.f32 %v1325, 0.0
    %v1328 = vmax.f32 %v1326, 0.0
    %v1329 = vadd.f32 %v374, %v1327
    %v1330 = vadd.f32 %v379, %v1328
    %v1332 = vsel %vm598, %v1032, 0
    %v1335 = vsel %vm598, %v1033, 0
    %1337 = vmatprep.subr.mxu0 0.0
    %1338 = vmatpush1.msra.mxu0 0.0
    %1339 = vmatprep.subr.mxu0 0.0
    %1340 = vmatpush1.msra.mxu0 0.0
    %1341 = vmatprep.subr.mxu0 0.0
    %1342 = vmatpush1.msra.mxu0 0.0
    %1343 = vmatprep.subr.mxu0 0.0
    %1344 = vmatpush1.msra.mxu0 0.0
    %1345 = vmatprep.subr.mxu0 0.0
    %1346 = vmatpush1.msra.mxu0 0.0
    %1347 = vmatprep.subr.mxu0 0.0
    %1348 = vmatpush1.msra.mxu0 0.0
    %1349 = vmatprep.subr.mxu0 0.0
    %1350 = vmatpush1.msra.mxu0 0.0
    %1351 = vmatprep.subr.mxu0 0.0
    %1352 = vmatpush1.msra.mxu0 0.0
    %1353 = vmatprep.subr.mxu0 0.0
    %1354 = vmatpush1.msra.mxu0 0.0
    %1355 = vmatprep.subr.mxu0 0.0
    %1356 = vmatpush1.msra.mxu0 0.0
    %1357 = vmatprep.subr.mxu0 0.0
    %1358 = vmatpush1.msra.mxu0 0.0
    %1359 = vmatprep.subr.mxu0 0.0
    %1360 = vmatpush1.msra.mxu0 0.0
    %1361 = vmatprep.subr.mxu0 0.0
    %1362 = vmatpush1.msra.mxu0 %v596
    %1363 = vmatprep.subr.mxu0 0.0
    %1364 = vmatpush1.msra.mxu0 %v595
    %1365 = vmatprep.subr.mxu0 0.0
    %1366 = vmatpush1.msra.mxu0 %v594
    %1367 = vmatprep.subr.mxu0 0.0
    %1368 = vmatpush1.msra.mxu0 %v593
    %1369 = vmatprep.subr.mxu0 0.0
    %1370 = vmatpush2.msra.mxu0 0.0
    %1371 = vmatprep.subr.mxu0 0.0
    %1372 = vmatpush2.msra.mxu0 0.0
    %1373 = vmatprep.subr.mxu0 0.0
    %1374 = vmatpush2.msra.mxu0 0.0
    %1375 = vmatprep.subr.mxu0 0.0
    %1376 = vmatpush2.msra.mxu0 0.0
    %1377 = vmatprep.subr.mxu0 0.0
    %1378 = vmatpush2.msra.mxu0 0.0
    %1379 = vmatprep.subr.mxu0 0.0
    %1380 = vmatpush2.msra.mxu0 0.0
    %1381 = vmatprep.subr.mxu0 0.0
    %1382 = vmatpush2.msra.mxu0 0.0
    %1383 = vmatprep.subr.mxu0 0.0
    %1384 = vmatpush2.msra.mxu0 0.0
    %1385 = vmatprep.subr.mxu0 0.0
    %1386 = vmatpush2.msra.mxu0 0.0
    %1387 = vmatprep.subr.mxu0 0.0
    %1388 = vmatpush2.msra.mxu0 0.0
    %1389 = vmatprep.subr.mxu0 0.0
    %1390 = vmatpush2.msra.mxu0 0.0
    %1391 = vmatprep.subr.mxu0 0.0
    %1392 = vmatpush2.msra.mxu0 0.0
    %1393 = vmatprep.subr.mxu0 0.0
    %1394 = vmatpush2.msra.mxu0 0.0
    %1395 = vmatprep.subr.mxu0 0.0
    %1396 = vmatpush2.msra.mxu0 0.0
    %1397 = vmatprep.subr.mxu0 0.0
    %1398 = vmatpush2.msra.mxu0 0.0
    %1399 = vmatprep.subr.mxu0 0.0
    %1400 = vmatpush2.msra.mxu0 0.0
    %1401 = vmatprep.mubr.f32.mxu0 0.0
    %1402 = vmatmul.mubr.f32.gmra.mxu0 %v1332
    %v1403 = vpop.f32.mrf.mxu0
    %v1404 = vadd.f32 0.0, %v1403
    %v1405 = vpop.f32.mrf.mxu0
    %1406 = vmatprep.mubr.f32.mxu0 0.0
    %1407 = vmatmul.mubr.f32.gmra.mxu0 %v1335
    %v1408 = vpop.f32.mrf.mxu0
    %v1409 = vadd.f32 0.0, %v1408
    %v1410 = vpop.f32.mrf.mxu0
    %1411 = vdwg.mxu0
    %1412 = vmatprep.subr.mxu0 0.0
    %1413 = vmatpush1.msra.mxu0 0.0
    %1414 = vmatprep.subr.mxu0 0.0
    %1415 = vmatpush1.msra.mxu0 0.0
    %1416 = vmatprep.subr.mxu0 0.0
    %1417 = vmatpush1.msra.mxu0 0.0
    %1418 = vmatprep.subr.mxu0 0.0
    %1419 = vmatpush1.msra.mxu0 0.0
    %1420 = vmatprep.subr.mxu0 0.0
    %1421 = vmatpush1.msra.mxu0 0.0
    %1422 = vmatprep.subr.mxu0 0.0
    %1423 = vmatpush1.msra.mxu0 0.0
    %1424 = vmatprep.subr.mxu0 0.0
    %1425 = vmatpush1.msra.mxu0 0.0
    %1426 = vmatprep.subr.mxu0 0.0
    %1427 = vmatpush1.msra.mxu0 0.0
    %1428 = vmatprep.subr.mxu0 0.0
    %1429 = vmatpush1.msra.mxu0 0.0
    %1430 = vmatprep.subr.mxu0 0.0
    %1431 = vmatpush1.msra.mxu0 0.0
    %1432 = vmatprep.subr.mxu0 0.0
    %1433 = vmatpush1.msra.mxu0 0.0
    %1434 = vmatprep.subr.mxu0 0.0
    %1435 = vmatpush1.msra.mxu0 0.0
    %1436 = vmatprep.subr.mxu0 0.0
    %1437 = vmatpush1.msra.mxu0 0.0
    %1438 = vmatprep.subr.mxu0 0.0
    %1439 = vmatpush1.msra.mxu0 0.0
    %1440 = vmatprep.subr.mxu0 0.0
    %1441 = vmatpush1.msra.mxu0 %v592
    %1442 = vmatprep.subr.mxu0 0.0
    %1443 = vmatpush1.msra.mxu0 %v591
    %1444 = vmatprep.subr.mxu0 0.0
    %1445 = vmatpush2.msra.mxu0 0.0
    %1446 = vmatprep.subr.mxu0 0.0
    %1447 = vmatpush2.msra.mxu0 0.0
    %1448 = vmatprep.subr.mxu0 0.0
    %1449 = vmatpush2.msra.mxu0 0.0
    %1450 = vmatprep.subr.mxu0 0.0
    %1451 = vmatpush2.msra.mxu0 0.0
    %1452 = vmatprep.subr.mxu0 0.0
    %1453 = vmatpush2.msra.mxu0 0.0
    %1454 = vmatprep.subr.mxu0 0.0
    %1455 = vmatpush2.msra.mxu0 0.0
    %1456 = vmatprep.subr.mxu0 0.0
    %1457 = vmatpush2.msra.mxu0 0.0
    %1458 = vmatprep.subr.mxu0 0.0
    %1459 = vmatpush2.msra.mxu0 0.0
    %1460 = vmatprep.subr.mxu0 0.0
    %1461 = vmatpush2.msra.mxu0 0.0
    %1462 = vmatprep.subr.mxu0 0.0
    %1463 = vmatpush2.msra.mxu0 0.0
    %1464 = vmatprep.subr.mxu0 0.0
    %1465 = vmatpush2.msra.mxu0 0.0
    %1466 = vmatprep.subr.mxu0 0.0
    %1467 = vmatpush2.msra.mxu0 0.0
    %1468 = vmatprep.subr.mxu0 0.0
    %1469 = vmatpush2.msra.mxu0 0.0
    %1470 = vmatprep.subr.mxu0 0.0
    %1471 = vmatpush2.msra.mxu0 0.0
    %1472 = vmatprep.subr.mxu0 0.0
    %1473 = vmatpush2.msra.mxu0 0.0
    %1474 = vmatprep.subr.mxu0 0.0
    %1475 = vmatpush2.msra.mxu0 0.0
    %1476 = vmatprep.mubr.f32.mxu0 0.0
    %1477 = vmatmul.mubr.f32.gmra.mxu0 %v918
    %v1478 = vpop.f32.mrf.mxu0
    %v1479 = vadd.f32 %v1404, %v1478
    %v1480 = vpop.f32.mrf.mxu0
    %1481 = vmatprep.mubr.f32.mxu0 0.0
    %1482 = vmatmul.mubr.f32.gmra.mxu0 %v921
    %v1483 = vpop.f32.mrf.mxu0
    %v1484 = vadd.f32 %v1409, %v1483
    %v1485 = vpop.f32.mrf.mxu0
    %1486 = vdwg.mxu0
    %v1487 = vlaneseq
    %v1488 = vshrl.u32 %v1487, 7
    %v1489 = vsub.s32 5, %v1488
    %v1490 = vrot.slane %v597, %v1489
    %v1491 = vadd.f32 %v1479, %v1490
    %v1492 = vadd.f32 %v1484, %v1490
    %v1493 = vmax.f32 %v1491, 0.0
    %v1494 = vmax.f32 %v1492, 0.0
    %v1495 = vadd.f32 %v457, %v1493
    %v1496 = vadd.f32 %v462, %v1494
    %s1497 = scalar_lea.vmem %s7, 200
    %v1498 = vld [vmem:[%s1497] sm:$0xff]
    %v1499 = vld [vmem:[%s1497 + $0x8] sm:$0xff]
    %v1500 = vld [vmem:[%s1497 + $0x10] sm:$0xff]
    %v1501 = vld [vmem:[%s1497 + $0x18] sm:$0xff]
    %v1502 = vld [vmem:[%s1497 + $0x20] sm:$0xff]
    %v1503 = vld [vmem:[%s1497 + $0x28] sm:$0xff]
    %v1504 = vld [vmem:[%s1497 + $0x30] sm:$0xff]
    %v1505 = vld [vmem:[%s1497 + $0x38] sm:$0xff]
    %v1506 = vld [vmem:[%s1497 + $0x40] sm:$0xff]
    %v1507 = vld [vmem:[%s1497 + $0x48] sm:$0xff]
    %v1508 = vld [vmem:[%s1497 + $0x50] sm:$0xff]
    %v1509 = vld [vmem:[%s1497 + $0x58] sm:$0xff]
    %v1510 = vld [vmem:[%s1497 + $0x60] sm:$0xff]
    %v1511 = vld [vmem:[%s1497 + $0x68] sm:$0xff]
    %v1512 = vld [vmem:[%s1497 + $0x70] sm:$0xff]
    %v1513 = vld [vmem:[%s1497 + $0x78] sm:$0xff]
    %v1514 = vld [vmem:[%s1497 + $0x80] sm:$0xff]
    %v1515 = vld [vmem:[%s1497 + $0x88] sm:$0xff]
    %v1516 = vld [vmem:[%s1497 + $0x90] sm:$0xff]
    %v1517 = vld [vmem:[%s1497 + $0x98] sm:$0xff]
    %v1518 = vld [vmem:[%s1497 + $0xa0] sm:$0xff]
    %v1519 = vld [vmem:[%s1497 + $0xa8] sm:$0xff]
    %v1520 = vld [vmem:[%s1497 + $0xb0] sm:$0xff]
    %v1521 = vld [vmem:[%s1497 + $0xb8] sm:$0xff]
    %v1522 = vld [vmem:[%s1497 + $0xc0] sm:$0xff]
    %v1524 = vsel %vm598, %v1329, 0
    %v1527 = vsel %vm598, %v1330, 0
    %1529 = vmatprep.subr.mxu0 0.0
    %1530 = vmatpush1.msra.mxu0 0.0
    %1531 = vmatprep.subr.mxu0 0.0
    %1532 = vmatpush1.msra.mxu0 0.0
    %1533 = vmatprep.subr.mxu0 0.0
    %1534 = vmatpush1.msra.mxu0 0.0
    %1535 = vmatprep.subr.mxu0 0.0
    %1536 = vmatpush1.msra.mxu0 0.0
    %1537 = vmatprep.subr.mxu0 0.0
    %1538 = vmatpush1.msra.mxu0 0.0
    %1539 = vmatprep.subr.mxu0 0.0
    %1540 = vmatpush1.msra.mxu0 0.0
    %1541 = vmatprep.subr.mxu0 0.0
    %1542 = vmatpush1.msra.mxu0 0.0
    %1543 = vmatprep.subr.mxu0 0.0
    %1544 = vmatpush1.msra.mxu0 0.0
    %1545 = vmatprep.subr.mxu0 0.0
    %1546 = vmatpush1.msra.mxu0 0.0
    %1547 = vmatprep.subr.mxu0 0.0
    %1548 = vmatpush1.msra.mxu0 0.0
    %1549 = vmatprep.subr.mxu0 0.0
    %1550 = vmatpush1.msra.mxu0 0.0
    %1551 = vmatprep.subr.mxu0 0.0
    %1552 = vmatpush1.msra.mxu0 0.0
    %1553 = vmatprep.subr.mxu0 0.0
    %1554 = vmatpush1.msra.mxu0 %v1501
    %1555 = vmatprep.subr.mxu0 0.0
    %1556 = vmatpush1.msra.mxu0 %v1500
    %1557 = vmatprep.subr.mxu0 0.0
    %1558 = vmatpush1.msra.mxu0 %v1499
    %1559 = vmatprep.subr.mxu0 0.0
    %1560 = vmatpush1.msra.mxu0 %v1498
    %1561 = vmatprep.subr.mxu0 0.0
    %1562 = vmatpush2.msra.mxu0 0.0
    %1563 = vmatprep.subr.mxu0 0.0
    %1564 = vmatpush2.msra.mxu0 0.0
    %1565 = vmatprep.subr.mxu0 0.0
    %1566 = vmatpush2.msra.mxu0 0.0
    %1567 = vmatprep.subr.mxu0 0.0
    %1568 = vmatpush2.msra.mxu0 0.0
    %1569 = vmatprep.subr.mxu0 0.0
    %1570 = vmatpush2.msra.mxu0 0.0
    %1571 = vmatprep.subr.mxu0 0.0
    %1572 = vmatpush2.msra.mxu0 0.0
    %1573 = vmatprep.subr.mxu0 0.0
    %1574 = vmatpush2.msra.mxu0 0.0
    %1575 = vmatprep.subr.mxu0 0.0
    %1576 = vmatpush2.msra.mxu0 0.0
    %1577 = vmatprep.subr.mxu0 0.0
    %1578 = vmatpush2.msra.mxu0 0.0
    %1579 = vmatprep.subr.mxu0 0.0
    %1580 = vmatpush2.msra.mxu0 0.0
    %1581 = vmatprep.subr.mxu0 0.0
    %1582 = vmatpush2.msra.mxu0 0.0
    %1583 = vmatprep.subr.mxu0 0.0
    %1584 = vmatpush2.msra.mxu0 0.0
    %1585 = vmatprep.subr.mxu0 0.0
    %1586 = vmatpush2.msra.mxu0 0.0
    %1587 = vmatprep.subr.mxu0 0.0
    %1588 = vmatpush2.msra.mxu0 0.0
    %1589 = vmatprep.subr.mxu0 0.0
    %1590 = vmatpush2.msra.mxu0 0.0
    %1591 = vmatprep.subr.mxu0 0.0
    %1592 = vmatpush2.msra.mxu0 0.0
    %1593 = vmatprep.mubr.f32.mxu0 0.0
    %1594 = vmatmul.mubr.f32.gmra.mxu0 %v1524
    %v1595 = vpop.f32.mrf.mxu0
    %v1596 = vadd.f32 0.0, %v1595
    %v1597 = vpop.f32.mrf.mxu0
    %1598 = vmatprep.mubr.f32.mxu0 0.0
    %1599 = vmatmul.mubr.f32.gmra.mxu0 %v1527
    %v1600 = vpop.f32.mrf.mxu0
    %v1601 = vadd.f32 0.0, %v1600
    %v1602 = vpop.f32.mrf.mxu0
    %1603 = vdwg.mxu0
    %1604 = vmatprep.subr.mxu0 0.0
    %1605 = vmatpush1.msra.mxu0 0.0
    %1606 = vmatprep.subr.mxu0 0.0
    %1607 = vmatpush1.msra.mxu0 0.0
    %1608 = vmatprep.subr.mxu0 0.0
    %1609 = vmatpush1.msra.mxu0 0.0
    %1610 = vmatprep.subr.mxu0 0.0
    %1611 = vmatpush1.msra.mxu0 0.0
    %1612 = vmatprep.subr.mxu0 0.0
    %1613 = vmatpush1.msra.mxu0 0.0
    %1614 = vmatprep.subr.mxu0 0.0
    %1615 = vmatpush1.msra.mxu0 0.0
    %1616 = vmatprep.subr.mxu0 0.0
    %1617 = vmatpush1.msra.mxu0 0.0
    %1618 = vmatprep.subr.mxu0 0.0
    %1619 = vmatpush1.msra.mxu0 0.0
    %1620 = vmatprep.subr.mxu0 0.0
    %1621 = vmatpush1.msra.mxu0 0.0
    %1622 = vmatprep.subr.mxu0 0.0
    %1623 = vmatpush1.msra.mxu0 0.0
    %1624 = vmatprep.subr.mxu0 0.0
    %1625 = vmatpush1.msra.mxu0 0.0
    %1626 = vmatprep.subr.mxu0 0.0
    %1627 = vmatpush1.msra.mxu0 0.0
    %1628 = vmatprep.subr.mxu0 0.0
    %1629 = vmatpush1.msra.mxu0 %v1505
    %1630 = vmatprep.subr.mxu0 0.0
    %1631 = vmatpush1.msra.mxu0 %v1504
    %1632 = vmatprep.subr.mxu0 0.0
    %1633 = vmatpush1.msra.mxu0 %v1503
    %1634 = vmatprep.subr.mxu0 0.0
    %1635 = vmatpush1.msra.mxu0 %v1502
    %1636 = vmatprep.subr.mxu0 0.0
    %1637 = vmatpush2.msra.mxu0 0.0
    %1638 = vmatprep.subr.mxu0 0.0
    %1639 = vmatpush2.msra.mxu0 0.0
    %1640 = vmatprep.subr.mxu0 0.0
    %1641 = vmatpush2.msra.mxu0 0.0
    %1642 = vmatprep.subr.mxu0 0.0
    %1643 = vmatpush2.msra.mxu0 0.0
    %1644 = vmatprep.subr.mxu0 0.0
    %1645 = vmatpush2.msra.mxu0 0.0
    %1646 = vmatprep.subr.mxu0 0.0
    %1647 = vmatpush2.msra.mxu0 0.0
    %1648 = vmatprep.subr.mxu0 0.0
    %1649 = vmatpush2.msra.mxu0 0.0
    %1650 = vmatprep.subr.mxu0 0.0
    %1651 = vmatpush2.msra.mxu0 0.0
    %1652 = vmatprep.subr.mxu0 0.0
    %1653 = vmatpush2.msra.mxu0 0.0
    %1654 = vmatprep.subr.mxu0 0.0
    %1655 = vmatpush2.msra.mxu0 0.0
    %1656 = vmatprep.subr.mxu0 0.0
    %1657 = vmatpush2.msra.mxu0 0.0
    %1658 = vmatprep.subr.mxu0 0.0
    %1659 = vmatpush2.msra.mxu0 0.0
    %1660 = vmatprep.subr.mxu0 0.0
    %1661 = vmatpush2.msra.mxu0 0.0
    %1662 = vmatprep.subr.mxu0 0.0
    %1663 = vmatpush2.msra.mxu0 0.0
    %1664 = vmatprep.subr.mxu0 0.0
    %1665 = vmatpush2.msra.mxu0 0.0
    %1666 = vmatprep.subr.mxu0 0.0
    %1667 = vmatpush2.msra.mxu0 0.0
    %1668 = vmatprep.mubr.f32.mxu0 0.0
    %1669 = vmatmul.mubr.f32.gmra.mxu0 %v1524
    %v1670 = vpop.f32.mrf.mxu0
    %v1671 = vadd.f32 0.0, %v1670
    %v1672 = vpop.f32.mrf.mxu0
    %1673 = vmatprep.mubr.f32.mxu0 0.0
    %1674 = vmatmul.mubr.f32.gmra.mxu0 %v1527
    %v1675 = vpop.f32.mrf.mxu0
    %v1676 = vadd.f32 0.0, %v1675
    %v1677 = vpop.f32.mrf.mxu0
    %1678 = vdwg.mxu0
    %1679 = vmatprep.subr.mxu0 0.0
    %1680 = vmatpush1.msra.mxu0 0.0
    %1681 = vmatprep.subr.mxu0 0.0
    %1682 = vmatpush1.msra.mxu0 0.0
    %1683 = vmatprep.subr.mxu0 0.0
    %1684 = vmatpush1.msra.mxu0 0.0
    %1685 = vmatprep.subr.mxu0 0.0
    %1686 = vmatpush1.msra.mxu0 0.0
    %1687 = vmatprep.subr.mxu0 0.0
    %1688 = vmatpush1.msra.mxu0 0.0
    %1689 = vmatprep.subr.mxu0 0.0
    %1690 = vmatpush1.msra.mxu0 0.0
    %1691 = vmatprep.subr.mxu0 0.0
    %1692 = vmatpush1.msra.mxu0 0.0
    %1693 = vmatprep.subr.mxu0 0.0
    %1694 = vmatpush1.msra.mxu0 0.0
    %1695 = vmatprep.subr.mxu0 0.0
    %1696 = vmatpush1.msra.mxu0 0.0
    %1697 = vmatprep.subr.mxu0 0.0
    %1698 = vmatpush1.msra.mxu0 0.0
    %1699 = vmatprep.subr.mxu0 0.0
    %1700 = vmatpush1.msra.mxu0 0.0
    %1701 = vmatprep.subr.mxu0 0.0
    %1702 = vmatpush1.msra.mxu0 0.0
    %1703 = vmatprep.subr.mxu0 0.0
    %1704 = vmatpush1.msra.mxu0 0.0
    %1705 = vmatprep.subr.mxu0 0.0
    %1706 = vmatpush1.msra.mxu0 0.0
    %1707 = vmatprep.subr.mxu0 0.0
    %1708 = vmatpush1.msra.mxu0 %v1676
    %1709 = vmatprep.subr.mxu0 0.0
    %1710 = vmatpush1.msra.mxu0 %v1671
    %1711 = vmatprep.subr.mxu0 0.0
    %1712 = vmatpush2.msra.mxu0 0.0
    %1713 = vmatprep.subr.mxu0 0.0
    %1714 = vmatpush2.msra.mxu0 0.0
    %1715 = vmatprep.subr.mxu0 0.0
    %1716 = vmatpush2.msra.mxu0 0.0
    %1717 = vmatprep.subr.mxu0 0.0
    %1718 = vmatpush2.msra.mxu0 0.0
    %1719 = vmatprep.subr.mxu0 0.0
    %1720 = vmatpush2.msra.mxu0 0.0
    %1721 = vmatprep.subr.mxu0 0.0
    %1722 = vmatpush2.msra.mxu0 0.0
    %1723 = vmatprep.subr.mxu0 0.0
    %1724 = vmatpush2.msra.mxu0 0.0
    %1725 = vmatprep.subr.mxu0 0.0
    %1726 = vmatpush2.msra.mxu0 0.0
    %1727 = vmatprep.subr.mxu0 0.0
    %1728 = vmatpush2.msra.mxu0 0.0
    %1729 = vmatprep.subr.mxu0 0.0
    %1730 = vmatpush2.msra.mxu0 0.0
    %1731 = vmatprep.subr.mxu0 0.0
    %1732 = vmatpush2.msra.mxu0 0.0
    %1733 = vmatprep.subr.mxu0 0.0
    %1734 = vmatpush2.msra.mxu0 0.0
    %1735 = vmatprep.subr.mxu0 0.0
    %1736 = vmatpush2.msra.mxu0 0.0
    %1737 = vmatprep.subr.mxu0 0.0
    %1738 = vmatpush2.msra.mxu0 0.0
    %1739 = vmatprep.subr.mxu0 0.0
    %1740 = vmatpush2.msra.mxu0 0.0
    %1741 = vmatprep.subr.mxu0 0.0
    %1742 = vmatpush2.msra.mxu0 0.0
    %1743 = vmatprep.mubr.f32.mxu0 0.0
    %1744 = vmatmul.mubr.f32.gmra.mxu0 %v756
    %v1745 = vpop.f32.mrf.mxu0
    %v1746 = vadd.f32 0.0, %v1745
    %v1747 = vpop.f32.mrf.mxu0
    %1748 = vmatprep.mubr.f32.mxu0 0.0
    %1749 = vmatmul.mubr.f32.gmra.mxu0 %v759
    %v1750 = vpop.f32.mrf.mxu0
    %v1751 = vadd.f32 0.0, %v1750
    %v1752 = vpop.f32.mrf.mxu0
    %1753 = vdwg.mxu0
    %1754 = vmatprep.subr.mxu0 0.0
    %1755 = vmatpush1.msra.mxu0 0.0
    %1756 = vmatprep.subr.mxu0 0.0
    %1757 = vmatpush1.msra.mxu0 0.0
    %1758 = vmatprep.subr.mxu0 0.0
    %1759 = vmatpush1.msra.mxu0 0.0
    %1760 = vmatprep.subr.mxu0 0.0
    %1761 = vmatpush1.msra.mxu0 0.0
    %1762 = vmatprep.subr.mxu0 0.0
    %1763 = vmatpush1.msra.mxu0 0.0
    %1764 = vmatprep.subr.mxu0 0.0
    %1765 = vmatpush1.msra.mxu0 0.0
    %1766 = vmatprep.subr.mxu0 0.0
    %1767 = vmatpush1.msra.mxu0 0.0
    %1768 = vmatprep.subr.mxu0 0.0
    %1769 = vmatpush1.msra.mxu0 0.0
    %1770 = vmatprep.subr.mxu0 0.0
    %1771 = vmatpush1.msra.mxu0 0.0
    %1772 = vmatprep.subr.mxu0 0.0
    %1773 = vmatpush1.msra.mxu0 0.0
    %1774 = vmatprep.subr.mxu0 0.0
    %1775 = vmatpush1.msra.mxu0 0.0
    %1776 = vmatprep.subr.mxu0 0.0
    %1777 = vmatpush1.msra.mxu0 0.0
    %1778 = vmatprep.subr.mxu0 0.0
    %1779 = vmatpush1.msra.mxu0 0.0
    %1780 = vmatprep.subr.mxu0 0.0
    %1781 = vmatpush1.msra.mxu0 0.0
    %1782 = vmatprep.subr.mxu0 0.0
    %1783 = vmatpush1.msra.mxu0 %v1601
    %1784 = vmatprep.subr.mxu0 0.0
    %1785 = vmatpush1.msra.mxu0 %v1596
    %1786 = vmatprep.subr.mxu0 0.0
    %1787 = vmatpush2.msra.mxu0 0.0
    %1788 = vmatprep.subr.mxu0 0.0
    %1789 = vmatpush2.msra.mxu0 0.0
    %1790 = vmatprep.subr.mxu0 0.0
    %1791 = vmatpush2.msra.mxu0 0.0
    %1792 = vmatprep.subr.mxu0 0.0
    %1793 = vmatpush2.msra.mxu0 0.0
    %1794 = vmatprep.subr.mxu0 0.0
    %1795 = vmatpush2.msra.mxu0 0.0
    %1796 = vmatprep.subr.mxu0 0.0
    %1797 = vmatpush2.msra.mxu0 0.0
    %1798 = vmatprep.subr.mxu0 0.0
    %1799 = vmatpush2.msra.mxu0 0.0
    %1800 = vmatprep.subr.mxu0 0.0
    %1801 = vmatpush2.msra.mxu0 0.0
    %1802 = vmatprep.subr.mxu0 0.0
    %1803 = vmatpush2.msra.mxu0 0.0
    %1804 = vmatprep.subr.mxu0 0.0
    %1805 = vmatpush2.msra.mxu0 0.0
    %1806 = vmatprep.subr.mxu0 0.0
    %1807 = vmatpush2.msra.mxu0 0.0
    %1808 = vmatprep.subr.mxu0 0.0
    %1809 = vmatpush2.msra.mxu0 0.0
    %1810 = vmatprep.subr.mxu0 0.0
    %1811 = vmatpush2.msra.mxu0 0.0
    %1812 = vmatprep.subr.mxu0 0.0
    %1813 = vmatpush2.msra.mxu0 0.0
    %1814 = vmatprep.subr.mxu0 0.0
    %1815 = vmatpush2.msra.mxu0 0.0
    %1816 = vmatprep.subr.mxu0 0.0
    %1817 = vmatpush2.msra.mxu0 0.0
    %1818 = vmatprep.mubr.f32.mxu0 0.0
    %1819 = vmatmul.mubr.f32.gmra.mxu0 %v837
    %v1820 = vpop.f32.mrf.mxu0
    %v1821 = vadd.f32 %v1746, %v1820
    %v1822 = vpop.f32.mrf.mxu0
    %1823 = vmatprep.mubr.f32.mxu0 0.0
    %1824 = vmatmul.mubr.f32.gmra.mxu0 %v840
    %v1825 = vpop.f32.mrf.mxu0
    %v1826 = vadd.f32 %v1751, %v1825
    %v1827 = vpop.f32.mrf.mxu0
    %1828 = vdwg.mxu0
    %v1830 = vsel %vm469, %v1495, 0
    %v1833 = vsel %vm469, %v1496, 0
    %1835 = vmatprep.subr.mxu0 0.0
    %1836 = vmatpush1.msra.mxu0 0.0
    %1837 = vmatprep.subr.mxu0 0.0
    %1838 = vmatpush1.msra.mxu0 0.0
    %1839 = vmatprep.subr.mxu0 0.0
    %1840 = vmatpush1.msra.mxu0 0.0
    %1841 = vmatprep.subr.mxu0 0.0
    %1842 = vmatpush1.msra.mxu0 0.0
    %1843 = vmatprep.subr.mxu0 0.0
    %1844 = vmatpush1.msra.mxu0 0.0
    %1845 = vmatprep.subr.mxu0 0.0
    %1846 = vmatpush1.msra.mxu0 0.0
    %1847 = vmatprep.subr.mxu0 0.0
    %1848 = vmatpush1.msra.mxu0 0.0
    %1849 = vmatprep.subr.mxu0 0.0
    %1850 = vmatpush1.msra.mxu0 0.0
    %1851 = vmatprep.subr.mxu0 0.0
    %1852 = vmatpush1.msra.mxu0 0.0
    %1853 = vmatprep.subr.mxu0 0.0
    %1854 = vmatpush1.msra.mxu0 0.0
    %1855 = vmatprep.subr.mxu0 0.0
    %1856 = vmatpush1.msra.mxu0 0.0
    %1857 = vmatprep.subr.mxu0 0.0
    %1858 = vmatpush1.msra.mxu0 0.0
    %1859 = vmatprep.subr.mxu0 0.0
    %1860 = vmatpush1.msra.mxu0 0.0
    %1861 = vmatprep.subr.mxu0 0.0
    %1862 = vmatpush1.msra.mxu0 0.0
    %1863 = vmatprep.subr.mxu0 0.0
    %1864 = vmatpush1.msra.mxu0 %v1507
    %1865 = vmatprep.subr.mxu0 0.0
    %1866 = vmatpush1.msra.mxu0 %v1506
    %1867 = vmatprep.subr.mxu0 0.0
    %1868 = vmatpush2.msra.mxu0 0.0
    %1869 = vmatprep.subr.mxu0 0.0
    %1870 = vmatpush2.msra.mxu0 0.0
    %1871 = vmatprep.subr.mxu0 0.0
    %1872 = vmatpush2.msra.mxu0 0.0
    %1873 = vmatprep.subr.mxu0 0.0
    %1874 = vmatpush2.msra.mxu0 0.0
    %1875 = vmatprep.subr.mxu0 0.0
    %1876 = vmatpush2.msra.mxu0 0.0
    %1877 = vmatprep.subr.mxu0 0.0
    %1878 = vmatpush2.msra.mxu0 0.0
    %1879 = vmatprep.subr.mxu0 0.0
    %1880 = vmatpush2.msra.mxu0 0.0
    %1881 = vmatprep.subr.mxu0 0.0
    %1882 = vmatpush2.msra.mxu0 0.0
    %1883 = vmatprep.subr.mxu0 0.0
    %1884 = vmatpush2.msra.mxu0 0.0
    %1885 = vmatprep.subr.mxu0 0.0
    %1886 = vmatpush2.msra.mxu0 0.0
    %1887 = vmatprep.subr.mxu0 0.0
    %1888 = vmatpush2.msra.mxu0 0.0
    %1889 = vmatprep.subr.mxu0 0.0
    %1890 = vmatpush2.msra.mxu0 0.0
    %1891 = vmatprep.subr.mxu0 0.0
    %1892 = vmatpush2.msra.mxu0 0.0
    %1893 = vmatprep.subr.mxu0 0.0
    %1894 = vmatpush2.msra.mxu0 0.0
    %1895 = vmatprep.subr.mxu0 0.0
    %1896 = vmatpush2.msra.mxu0 0.0
    %1897 = vmatprep.subr.mxu0 0.0
    %1898 = vmatpush2.msra.mxu0 0.0
    %1899 = vmatprep.mubr.f32.mxu0 0.0
    %1900 = vmatmul.mubr.f32.gmra.mxu0 %v1830
    %v1901 = vpop.f32.mrf.mxu0
    %v1902 = vadd.f32 0.0, %v1901
    %v1903 = vpop.f32.mrf.mxu0
    %1904 = vmatprep.mubr.f32.mxu0 0.0
    %1905 = vmatmul.mubr.f32.gmra.mxu0 %v1833
    %v1906 = vpop.f32.mrf.mxu0
    %v1907 = vadd.f32 0.0, %v1906
    %v1908 = vpop.f32.mrf.mxu0
    %1909 = vdwg.mxu0
    %v1910 = vadd.f32 %v1821, %v1902
    %v1911 = vadd.f32 %v1826, %v1907
    %v1912 = vlaneseq
    %v1913 = vshrl.u32 %v1912, 7
    %v1914 = vsub.s32 0, %v1913
    %v1915 = vrot.slane %v1522, %v1914
    %v1916 = vmul.f32 %v565, %v1915
    %v1917 = vmul.f32 %v572, %v1915
    %v1918 = vadd.f32 %v1910, %v1916
    %v1919 = vadd.f32 %v1911, %v1917
    %v1920 = vlaneseq
    %v1921 = vshrl.u32 %v1920, 7
    %v1922 = vsub.s32 1, %v1921
    %v1923 = vrot.slane %v1522, %v1922
    %v1924 = vmul.f32 %v1011, %v1923
    %v1925 = vmul.f32 %v1016, %v1923
    %v1926 = vadd.f32 %v1918, %v1924
    %v1927 = vadd.f32 %v1919, %v1925
    %v1928 = vlaneseq
    %v1929 = vshrl.u32 %v1928, 7
    %v1930 = vsub.s32 2, %v1929
    %v1931 = vrot.slane %v1522, %v1930
    %v1932 = vadd.f32 %v1926, %v1931
    %v1933 = vadd.f32 %v1927, %v1931
    %v1934 = vmax.f32 %v1932, 0.0
    %v1935 = vmax.f32 %v1933, 0.0
    %1936 = vmatprep.subr.mxu0 0.0
    %1937 = vmatpush1.msra.mxu0 0.0
    %1938 = vmatprep.subr.mxu0 0.0
    %1939 = vmatpush1.msra.mxu0 0.0
    %1940 = vmatprep.subr.mxu0 0.0
    %1941 = vmatpush1.msra.mxu0 0.0
    %1942 = vmatprep.subr.mxu0 0.0
    %1943 = vmatpush1.msra.mxu0 0.0
    %1944 = vmatprep.subr.mxu0 0.0
    %1945 = vmatpush1.msra.mxu0 0.0
    %1946 = vmatprep.subr.mxu0 0.0
    %1947 = vmatpush1.msra.mxu0 0.0
    %1948 = vmatprep.subr.mxu0 0.0
    %1949 = vmatpush1.msra.mxu0 0.0
    %1950 = vmatprep.subr.mxu0 0.0
    %1951 = vmatpush1.msra.mxu0 0.0
    %1952 = vmatprep.subr.mxu0 0.0
    %1953 = vmatpush1.msra.mxu0 0.0
    %1954 = vmatprep.subr.mxu0 0.0
    %1955 = vmatpush1.msra.mxu0 0.0
    %1956 = vmatprep.subr.mxu0 0.0
    %1957 = vmatpush1.msra.mxu0 0.0
    %1958 = vmatprep.subr.mxu0 0.0
    %1959 = vmatpush1.msra.mxu0 0.0
    %1960 = vmatprep.subr.mxu0 0.0
    %1961 = vmatpush1.msra.mxu0 0.0
    %1962 = vmatprep.subr.mxu0 0.0
    %1963 = vmatpush1.msra.mxu0 0.0
    %1964 = vmatprep.subr.mxu0 0.0
    %1965 = vmatpush1.msra.mxu0 %v1935
    %1966 = vmatprep.subr.mxu0 0.0
    %1967 = vmatpush1.msra.mxu0 %v1934
    %1968 = vmatprep.subr.mxu0 0.0
    %1969 = vmatpush2.msra.mxu0 0.0
    %1970 = vmatprep.subr.mxu0 0.0
    %1971 = vmatpush2.msra.mxu0 0.0
    %1972 = vmatprep.subr.mxu0 0.0
    %1973 = vmatpush2.msra.mxu0 0.0
    %1974 = vmatprep.subr.mxu0 0.0
    %1975 = vmatpush2.msra.mxu0 0.0
    %1976 = vmatprep.subr.mxu0 0.0
    %1977 = vmatpush2.msra.mxu0 0.0
    %1978 = vmatprep.subr.mxu0 0.0
    %1979 = vmatpush2.msra.mxu0 0.0
    %1980 = vmatprep.subr.mxu0 0.0
    %1981 = vmatpush2.msra.mxu0 0.0
    %1982 = vmatprep.subr.mxu0 0.0
    %1983 = vmatpush2.msra.mxu0 0.0
    %1984 = vmatprep.subr.mxu0 0.0
    %1985 = vmatpush2.msra.mxu0 0.0
    %1986 = vmatprep.subr.mxu0 0.0
    %1987 = vmatpush2.msra.mxu0 0.0
    %1988 = vmatprep.subr.mxu0 0.0
    %1989 = vmatpush2.msra.mxu0 0.0
    %1990 = vmatprep.subr.mxu0 0.0
    %1991 = vmatpush2.msra.mxu0 0.0
    %1992 = vmatprep.subr.mxu0 0.0
    %1993 = vmatpush2.msra.mxu0 0.0
    %1994 = vmatprep.subr.mxu0 0.0
    %1995 = vmatpush2.msra.mxu0 0.0
    %1996 = vmatprep.subr.mxu0 0.0
    %1997 = vmatpush2.msra.mxu0 0.0
    %1998 = vmatprep.subr.mxu0 0.0
    %1999 = vmatpush2.msra.mxu0 0.0
    %2000 = vmatprep.mubr.f32.mxu0 0.0
    %2001 = vmatmul.mubr.f32.gmra.mxu0 %v1067
    %v2002 = vpop.f32.mrf.mxu0
    %v2003 = vadd.f32 0.0, %v2002
    %v2004 = vpop.f32.mrf.mxu0
    %2005 = vmatprep.mubr.f32.mxu0 0.0
    %2006 = vmatmul.mubr.f32.gmra.mxu0 %v1070
    %v2007 = vpop.f32.mrf.mxu0
    %v2008 = vadd.f32 0.0, %v2007
    %v2009 = vpop.f32.mrf.mxu0
    %2010 = vdwg.mxu0
    %v2012 = vsel %vm598, %v2003, 0
    %v2015 = vsel %vm598, %v2008, 0
    %2017 = vmatprep.subr.mxu0 0.0
    %2018 = vmatpush1.msra.mxu0 0.0
    %2019 = vmatprep.subr.mxu0 0.0
    %2020 = vmatpush1.msra.mxu0 0.0
    %2021 = vmatprep.subr.mxu0 0.0
    %2022 = vmatpush1.msra.mxu0 0.0
    %2023 = vmatprep.subr.mxu0 0.0
    %2024 = vmatpush1.msra.mxu0 0.0
    %2025 = vmatprep.subr.mxu0 0.0
    %2026 = vmatpush1.msra.mxu0 0.0
    %2027 = vmatprep.subr.mxu0 0.0
    %2028 = vmatpush1.msra.mxu0 0.0
    %2029 = vmatprep.subr.mxu0 0.0
    %2030 = vmatpush1.msra.mxu0 0.0
    %2031 = vmatprep.subr.mxu0 0.0
    %2032 = vmatpush1.msra.mxu0 0.0
    %2033 = vmatprep.subr.mxu0 0.0
    %2034 = vmatpush1.msra.mxu0 0.0
    %2035 = vmatprep.subr.mxu0 0.0
    %2036 = vmatpush1.msra.mxu0 0.0
    %2037 = vmatprep.subr.mxu0 0.0
    %2038 = vmatpush1.msra.mxu0 0.0
    %2039 = vmatprep.subr.mxu0 0.0
    %2040 = vmatpush1.msra.mxu0 0.0
    %2041 = vmatprep.subr.mxu0 0.0
    %2042 = vmatpush1.msra.mxu0 %v1515
    %2043 = vmatprep.subr.mxu0 0.0
    %2044 = vmatpush1.msra.mxu0 %v1514
    %2045 = vmatprep.subr.mxu0 0.0
    %2046 = vmatpush1.msra.mxu0 %v1513
    %2047 = vmatprep.subr.mxu0 0.0
    %2048 = vmatpush1.msra.mxu0 %v1512
    %2049 = vmatprep.subr.mxu0 0.0
    %2050 = vmatpush2.msra.mxu0 0.0
    %2051 = vmatprep.subr.mxu0 0.0
    %2052 = vmatpush2.msra.mxu0 0.0
    %2053 = vmatprep.subr.mxu0 0.0
    %2054 = vmatpush2.msra.mxu0 0.0
    %2055 = vmatprep.subr.mxu0 0.0
    %2056 = vmatpush2.msra.mxu0 0.0
    %2057 = vmatprep.subr.mxu0 0.0
    %2058 = vmatpush2.msra.mxu0 0.0
    %2059 = vmatprep.subr.mxu0 0.0
    %2060 = vmatpush2.msra.mxu0 0.0
    %2061 = vmatprep.subr.mxu0 0.0
    %2062 = vmatpush2.msra.mxu0 0.0
    %2063 = vmatprep.subr.mxu0 0.0
    %2064 = vmatpush2.msra.mxu0 0.0
    %2065 = vmatprep.subr.mxu0 0.0
    %2066 = vmatpush2.msra.mxu0 0.0
    %2067 = vmatprep.subr.mxu0 0.0
    %2068 = vmatpush2.msra.mxu0 0.0
    %2069 = vmatprep.subr.mxu0 0.0
    %2070 = vmatpush2.msra.mxu0 0.0
    %2071 = vmatprep.subr.mxu0 0.0
    %2072 = vmatpush2.msra.mxu0 0.0
    %2073 = vmatprep.subr.mxu0 0.0
    %2074 = vmatpush2.msra.mxu0 0.0
    %2075 = vmatprep.subr.mxu0 0.0
    %2076 = vmatpush2.msra.mxu0 0.0
    %2077 = vmatprep.subr.mxu0 0.0
    %2078 = vmatpush2.msra.mxu0 0.0
    %2079 = vmatprep.subr.mxu0 0.0
    %2080 = vmatpush2.msra.mxu0 0.0
    %2081 = vmatprep.mubr.f32.mxu0 0.0
    %2082 = vmatmul.mubr.f32.gmra.mxu0 %v2012
    %v2083 = vpop.f32.mrf.mxu0
    %v2084 = vadd.f32 0.0, %v2083
    %v2085 = vpop.f32.mrf.mxu0
    %2086 = vmatprep.mubr.f32.mxu0 0.0
    %2087 = vmatmul.mubr.f32.gmra.mxu0 %v2015
    %v2088 = vpop.f32.mrf.mxu0
    %v2089 = vadd.f32 0.0, %v2088
    %v2090 = vpop.f32.mrf.mxu0
    %2091 = vdwg.mxu0
    %2092 = vmatprep.subr.mxu0 0.0
    %2093 = vmatpush1.msra.mxu0 0.0
    %2094 = vmatprep.subr.mxu0 0.0
    %2095 = vmatpush1.msra.mxu0 0.0
    %2096 = vmatprep.subr.mxu0 0.0
    %2097 = vmatpush1.msra.mxu0 0.0
    %2098 = vmatprep.subr.mxu0 0.0
    %2099 = vmatpush1.msra.mxu0 0.0
    %2100 = vmatprep.subr.mxu0 0.0
    %2101 = vmatpush1.msra.mxu0 0.0
    %2102 = vmatprep.subr.mxu0 0.0
    %2103 = vmatpush1.msra.mxu0 0.0
    %2104 = vmatprep.subr.mxu0 0.0
    %2105 = vmatpush1.msra.mxu0 0.0
    %2106 = vmatprep.subr.mxu0 0.0
    %2107 = vmatpush1.msra.mxu0 0.0
    %2108 = vmatprep.subr.mxu0 0.0
    %2109 = vmatpush1.msra.mxu0 0.0
    %2110 = vmatprep.subr.mxu0 0.0
    %2111 = vmatpush1.msra.mxu0 0.0
    %2112 = vmatprep.subr.mxu0 0.0
    %2113 = vmatpush1.msra.mxu0 0.0
    %2114 = vmatprep.subr.mxu0 0.0
    %2115 = vmatpush1.msra.mxu0 0.0
    %2116 = vmatprep.subr.mxu0 0.0
    %2117 = vmatpush1.msra.mxu0 %v1511
    %2118 = vmatprep.subr.mxu0 0.0
    %2119 = vmatpush1.msra.mxu0 %v1510
    %2120 = vmatprep.subr.mxu0 0.0
    %2121 = vmatpush1.msra.mxu0 %v1509
    %2122 = vmatprep.subr.mxu0 0.0
    %2123 = vmatpush1.msra.mxu0 %v1508
    %2124 = vmatprep.subr.mxu0 0.0
    %2125 = vmatpush2.msra.mxu0 0.0
    %2126 = vmatprep.subr.mxu0 0.0
    %2127 = vmatpush2.msra.mxu0 0.0
    %2128 = vmatprep.subr.mxu0 0.0
    %2129 = vmatpush2.msra.mxu0 0.0
    %2130 = vmatprep.subr.mxu0 0.0
    %2131 = vmatpush2.msra.mxu0 0.0
    %2132 = vmatprep.subr.mxu0 0.0
    %2133 = vmatpush2.msra.mxu0 0.0
    %2134 = vmatprep.subr.mxu0 0.0
    %2135 = vmatpush2.msra.mxu0 0.0
    %2136 = vmatprep.subr.mxu0 0.0
    %2137 = vmatpush2.msra.mxu0 0.0
    %2138 = vmatprep.subr.mxu0 0.0
    %2139 = vmatpush2.msra.mxu0 0.0
    %2140 = vmatprep.subr.mxu0 0.0
    %2141 = vmatpush2.msra.mxu0 0.0
    %2142 = vmatprep.subr.mxu0 0.0
    %2143 = vmatpush2.msra.mxu0 0.0
    %2144 = vmatprep.subr.mxu0 0.0
    %2145 = vmatpush2.msra.mxu0 0.0
    %2146 = vmatprep.subr.mxu0 0.0
    %2147 = vmatpush2.msra.mxu0 0.0
    %2148 = vmatprep.subr.mxu0 0.0
    %2149 = vmatpush2.msra.mxu0 0.0
    %2150 = vmatprep.subr.mxu0 0.0
    %2151 = vmatpush2.msra.mxu0 0.0
    %2152 = vmatprep.subr.mxu0 0.0
    %2153 = vmatpush2.msra.mxu0 0.0
    %2154 = vmatprep.subr.mxu0 0.0
    %2155 = vmatpush2.msra.mxu0 0.0
    %2156 = vmatprep.mubr.f32.mxu0 0.0
    %2157 = vmatmul.mubr.f32.gmra.mxu0 %v1524
    %v2158 = vpop.f32.mrf.mxu0
    %v2159 = vadd.f32 %v2084, %v2158
    %v2160 = vpop.f32.mrf.mxu0
    %2161 = vmatprep.mubr.f32.mxu0 0.0
    %2162 = vmatmul.mubr.f32.gmra.mxu0 %v1527
    %v2163 = vpop.f32.mrf.mxu0
    %v2164 = vadd.f32 %v2089, %v2163
    %v2165 = vpop.f32.mrf.mxu0
    %2166 = vdwg.mxu0
    %v2167 = vlaneseq
    %v2168 = vshrl.u32 %v2167, 7
    %v2169 = vsub.s32 3, %v2168
    %v2170 = vrot.slane %v1522, %v2169
    %v2171 = vmul.f32 %v1306, %v2170
    %v2172 = vmul.f32 %v1311, %v2170
    %v2173 = vadd.f32 %v2159, %v2171
    %v2174 = vadd.f32 %v2164, %v2172
    %v2175 = vlaneseq
    %v2176 = vshrl.u32 %v2175, 7
    %v2177 = vsub.s32 4, %v2176
    %v2178 = vrot.slane %v1522, %v2177
    %v2179 = vadd.f32 %v2173, %v2178
    %v2180 = vadd.f32 %v2174, %v2178
    %v2181 = vmax.f32 %v2179, 0.0
    %v2182 = vmax.f32 %v2180, 0.0
    %v2183 = vadd.f32 %v1329, %v2181
    %v2184 = vadd.f32 %v1330, %v2182
    %v2186 = vsel %vm598, %v1934, 0
    %v2189 = vsel %vm598, %v1935, 0
    %2191 = vmatprep.subr.mxu0 0.0
    %2192 = vmatpush1.msra.mxu0 0.0
    %2193 = vmatprep.subr.mxu0 0.0
    %2194 = vmatpush1.msra.mxu0 0.0
    %2195 = vmatprep.subr.mxu0 0.0
    %2196 = vmatpush1.msra.mxu0 0.0
    %2197 = vmatprep.subr.mxu0 0.0
    %2198 = vmatpush1.msra.mxu0 0.0
    %2199 = vmatprep.subr.mxu0 0.0
    %2200 = vmatpush1.msra.mxu0 0.0
    %2201 = vmatprep.subr.mxu0 0.0
    %2202 = vmatpush1.msra.mxu0 0.0
    %2203 = vmatprep.subr.mxu0 0.0
    %2204 = vmatpush1.msra.mxu0 0.0
    %2205 = vmatprep.subr.mxu0 0.0
    %2206 = vmatpush1.msra.mxu0 0.0
    %2207 = vmatprep.subr.mxu0 0.0
    %2208 = vmatpush1.msra.mxu0 0.0
    %2209 = vmatprep.subr.mxu0 0.0
    %2210 = vmatpush1.msra.mxu0 0.0
    %2211 = vmatprep.subr.mxu0 0.0
    %2212 = vmatpush1.msra.mxu0 0.0
    %2213 = vmatprep.subr.mxu0 0.0
    %2214 = vmatpush1.msra.mxu0 0.0
    %2215 = vmatprep.subr.mxu0 0.0
    %2216 = vmatpush1.msra.mxu0 %v1521
    %2217 = vmatprep.subr.mxu0 0.0
    %2218 = vmatpush1.msra.mxu0 %v1520
    %2219 = vmatprep.subr.mxu0 0.0
    %2220 = vmatpush1.msra.mxu0 %v1519
    %2221 = vmatprep.subr.mxu0 0.0
    %2222 = vmatpush1.msra.mxu0 %v1518
    %2223 = vmatprep.subr.mxu0 0.0
    %2224 = vmatpush2.msra.mxu0 0.0
    %2225 = vmatprep.subr.mxu0 0.0
    %2226 = vmatpush2.msra.mxu0 0.0
    %2227 = vmatprep.subr.mxu0 0.0
    %2228 = vmatpush2.msra.mxu0 0.0
    %2229 = vmatprep.subr.mxu0 0.0
    %2230 = vmatpush2.msra.mxu0 0.0
    %2231 = vmatprep.subr.mxu0 0.0
    %2232 = vmatpush2.msra.mxu0 0.0
    %2233 = vmatprep.subr.mxu0 0.0
    %2234 = vmatpush2.msra.mxu0 0.0
    %2235 = vmatprep.subr.mxu0 0.0
    %2236 = vmatpush2.msra.mxu0 0.0
    %2237 = vmatprep.subr.mxu0 0.0
    %2238 = vmatpush2.msra.mxu0 0.0
    %2239 = vmatprep.subr.mxu0 0.0
    %2240 = vmatpush2.msra.mxu0 0.0
    %2241 = vmatprep.subr.mxu0 0.0
    %2242 = vmatpush2.msra.mxu0 0.0
    %2243 = vmatprep.subr.mxu0 0.0
    %2244 = vmatpush2.msra.mxu0 0.0
    %2245 = vmatprep.subr.mxu0 0.0
    %2246 = vmatpush2.msra.mxu0 0.0
    %2247 = vmatprep.subr.mxu0 0.0
    %2248 = vmatpush2.msra.mxu0 0.0
    %2249 = vmatprep.subr.mxu0 0.0
    %2250 = vmatpush2.msra.mxu0 0.0
    %2251 = vmatprep.subr.mxu0 0.0
    %2252 = vmatpush2.msra.mxu0 0.0
    %2253 = vmatprep.subr.mxu0 0.0
    %2254 = vmatpush2.msra.mxu0 0.0
    %2255 = vmatprep.mubr.f32.mxu0 0.0
    %2256 = vmatmul.mubr.f32.gmra.mxu0 %v2186
    %v2257 = vpop.f32.mrf.mxu0
    %v2258 = vadd.f32 0.0, %v2257
    %v2259 = vpop.f32.mrf.mxu0
    %2260 = vmatprep.mubr.f32.mxu0 0.0
    %2261 = vmatmul.mubr.f32.gmra.mxu0 %v2189
    %v2262 = vpop.f32.mrf.mxu0
    %v2263 = vadd.f32 0.0, %v2262
    %v2264 = vpop.f32.mrf.mxu0
    %2265 = vdwg.mxu0
    %2266 = vmatprep.subr.mxu0 0.0
    %2267 = vmatpush1.msra.mxu0 0.0
    %2268 = vmatprep.subr.mxu0 0.0
    %2269 = vmatpush1.msra.mxu0 0.0
    %2270 = vmatprep.subr.mxu0 0.0
    %2271 = vmatpush1.msra.mxu0 0.0
    %2272 = vmatprep.subr.mxu0 0.0
    %2273 = vmatpush1.msra.mxu0 0.0
    %2274 = vmatprep.subr.mxu0 0.0
    %2275 = vmatpush1.msra.mxu0 0.0
    %2276 = vmatprep.subr.mxu0 0.0
    %2277 = vmatpush1.msra.mxu0 0.0
    %2278 = vmatprep.subr.mxu0 0.0
    %2279 = vmatpush1.msra.mxu0 0.0
    %2280 = vmatprep.subr.mxu0 0.0
    %2281 = vmatpush1.msra.mxu0 0.0
    %2282 = vmatprep.subr.mxu0 0.0
    %2283 = vmatpush1.msra.mxu0 0.0
    %2284 = vmatprep.subr.mxu0 0.0
    %2285 = vmatpush1.msra.mxu0 0.0
    %2286 = vmatprep.subr.mxu0 0.0
    %2287 = vmatpush1.msra.mxu0 0.0
    %2288 = vmatprep.subr.mxu0 0.0
    %2289 = vmatpush1.msra.mxu0 0.0
    %2290 = vmatprep.subr.mxu0 0.0
    %2291 = vmatpush1.msra.mxu0 0.0
    %2292 = vmatprep.subr.mxu0 0.0
    %2293 = vmatpush1.msra.mxu0 0.0
    %2294 = vmatprep.subr.mxu0 0.0
    %2295 = vmatpush1.msra.mxu0 %v1517
    %2296 = vmatprep.subr.mxu0 0.0
    %2297 = vmatpush1.msra.mxu0 %v1516
    %2298 = vmatprep.subr.mxu0 0.0
    %2299 = vmatpush2.msra.mxu0 0.0
    %2300 = vmatprep.subr.mxu0 0.0
    %2301 = vmatpush2.msra.mxu0 0.0
    %2302 = vmatprep.subr.mxu0 0.0
    %2303 = vmatpush2.msra.mxu0 0.0
    %2304 = vmatprep.subr.mxu0 0.0
    %2305 = vmatpush2.msra.mxu0 0.0
    %2306 = vmatprep.subr.mxu0 0.0
    %2307 = vmatpush2.msra.mxu0 0.0
    %2308 = vmatprep.subr.mxu0 0.0
    %2309 = vmatpush2.msra.mxu0 0.0
    %2310 = vmatprep.subr.mxu0 0.0
    %2311 = vmatpush2.msra.mxu0 0.0
    %2312 = vmatprep.subr.mxu0 0.0
    %2313 = vmatpush2.msra.mxu0 0.0
    %2314 = vmatprep.subr.mxu0 0.0
    %2315 = vmatpush2.msra.mxu0 0.0
    %2316 = vmatprep.subr.mxu0 0.0
    %2317 = vmatpush2.msra.mxu0 0.0
    %2318 = vmatprep.subr.mxu0 0.0
    %2319 = vmatpush2.msra.mxu0 0.0
    %2320 = vmatprep.subr.mxu0 0.0
    %2321 = vmatpush2.msra.mxu0 0.0
    %2322 = vmatprep.subr.mxu0 0.0
    %2323 = vmatpush2.msra.mxu0 0.0
    %2324 = vmatprep.subr.mxu0 0.0
    %2325 = vmatpush2.msra.mxu0 0.0
    %2326 = vmatprep.subr.mxu0 0.0
    %2327 = vmatpush2.msra.mxu0 0.0
    %2328 = vmatprep.subr.mxu0 0.0
    %2329 = vmatpush2.msra.mxu0 0.0
    %2330 = vmatprep.mubr.f32.mxu0 0.0
    %2331 = vmatmul.mubr.f32.gmra.mxu0 %v1830
    %v2332 = vpop.f32.mrf.mxu0
    %v2333 = vadd.f32 %v2258, %v2332
    %v2334 = vpop.f32.mrf.mxu0
    %2335 = vmatprep.mubr.f32.mxu0 0.0
    %2336 = vmatmul.mubr.f32.gmra.mxu0 %v1833
    %v2337 = vpop.f32.mrf.mxu0
    %v2338 = vadd.f32 %v2263, %v2337
    %v2339 = vpop.f32.mrf.mxu0
    %2340 = vdwg.mxu0
    %v2341 = vlaneseq
    %v2342 = vshrl.u32 %v2341, 7
    %v2343 = vsub.s32 5, %v2342
    %v2344 = vrot.slane %v1522, %v2343
    %v2345 = vadd.f32 %v2333, %v2344
    %v2346 = vadd.f32 %v2338, %v2344
    %v2347 = vmax.f32 %v2345, 0.0
    %v2348 = vmax.f32 %v2346, 0.0
    %v2349 = vadd.f32 %v1495, %v2347
    %v2350 = vadd.f32 %v1496, %v2348
    %2351 = vxpose.xlu0.b32.start [1/16] %v85, 128
    %2352 = vxpose.xlu0.b32.cont [2/16] %v86, 128
    %2353 = vxpose.xlu0.b32.cont [3/16] 0.0, 128
    %2354 = vxpose.xlu0.b32.cont [4/16] 0.0, 128
    %2355 = vxpose.xlu0.b32.cont [5/16] 0.0, 128
    %2356 = vxpose.xlu0.b32.cont [6/16] 0.0, 128
    %2357 = vxpose.xlu0.b32.cont [7/16] 0.0, 128
    %2358 = vxpose.xlu0.b32.cont [8/16] 0.0, 128
    %2359 = vxpose.xlu0.b32.cont [9/16] 0.0, 128
    %2360 = vxpose.xlu0.b32.cont [10/16] 0.0, 128
    %2361 = vxpose.xlu0.b32.cont [11/16] 0.0, 128
    %2362 = vxpose.xlu0.b32.cont [12/16] 0.0, 128
    %2363 = vxpose.xlu0.b32.cont [13/16] 0.0, 128
    %2364 = vxpose.xlu0.b32.cont [14/16] 0.0, 128
    %2365 = vxpose.xlu0.b32.cont [15/16] 0.0, 128
    %2366 = vxpose.xlu0.b32.end [16/16] 0.0, 128
    %v2367 = vpop.trf.xlu0
    %v2368 = vpop.trf.xlu0
    %v2369 = vpop.trf.xlu0
    %v2370 = vpop.trf.xlu0
    %v2371 = vpop.trf.xlu0
    %v2372 = vpop.trf.xlu0
    %v2373 = vpop.trf.xlu0
    %v2374 = vpop.trf.xlu0
    %v2375 = vpop.trf.xlu0
    %v2376 = vpop.trf.xlu0
    %v2377 = vpop.trf.xlu0
    %v2378 = vpop.trf.xlu0
    %v2379 = vpop.trf.xlu0
    %v2380 = vpop.trf.xlu0
    %v2381 = vpop.trf.xlu0
    %v2382 = vpop.trf.xlu0
    %v2384 = vsel %vm469, %v2367, 0
    %2386 = vmatprep.subr.mxu0 0.0
    %2387 = vmatpush1.msra.mxu0 0.0
    %2388 = vmatprep.subr.mxu0 0.0
    %2389 = vmatpush1.msra.mxu0 0.0
    %2390 = vmatprep.subr.mxu0 0.0
    %2391 = vmatpush1.msra.mxu0 0.0
    %2392 = vmatprep.subr.mxu0 0.0
    %2393 = vmatpush1.msra.mxu0 0.0
    %2394 = vmatprep.subr.mxu0 0.0
    %2395 = vmatpush1.msra.mxu0 0.0
    %2396 = vmatprep.subr.mxu0 0.0
    %2397 = vmatpush1.msra.mxu0 0.0
    %2398 = vmatprep.subr.mxu0 0.0
    %2399 = vmatpush1.msra.mxu0 0.0
    %2400 = vmatprep.subr.mxu0 0.0
    %2401 = vmatpush1.msra.mxu0 0.0
    %2402 = vmatprep.subr.mxu0 0.0
    %2403 = vmatpush1.msra.mxu0 0.0
    %2404 = vmatprep.subr.mxu0 0.0
    %2405 = vmatpush1.msra.mxu0 0.0
    %2406 = vmatprep.subr.mxu0 0.0
    %2407 = vmatpush1.msra.mxu0 0.0
    %2408 = vmatprep.subr.mxu0 0.0
    %2409 = vmatpush1.msra.mxu0 0.0
    %2410 = vmatprep.subr.mxu0 0.0
    %2411 = vmatpush1.msra.mxu0 0.0
    %2412 = vmatprep.subr.mxu0 0.0
    %2413 = vmatpush1.msra.mxu0 0.0
    %2414 = vmatprep.subr.mxu0 0.0
    %2415 = vmatpush1.msra.mxu0 %v2184
    %2416 = vmatprep.subr.mxu0 0.0
    %2417 = vmatpush1.msra.mxu0 %v2183
    %2418 = vmatprep.subr.mxu0 0.0
    %2419 = vmatpush2.msra.mxu0 0.0
    %2420 = vmatprep.subr.mxu0 0.0
    %2421 = vmatpush2.msra.mxu0 0.0
    %2422 = vmatprep.subr.mxu0 0.0
    %2423 = vmatpush2.msra.mxu0 0.0
    %2424 = vmatprep.subr.mxu0 0.0
    %2425 = vmatpush2.msra.mxu0 0.0
    %2426 = vmatprep.subr.mxu0 0.0
    %2427 = vmatpush2.msra.mxu0 0.0
    %2428 = vmatprep.subr.mxu0 0.0
    %2429 = vmatpush2.msra.mxu0 0.0
    %2430 = vmatprep.subr.mxu0 0.0
    %2431 = vmatpush2.msra.mxu0 0.0
    %2432 = vmatprep.subr.mxu0 0.0
    %2433 = vmatpush2.msra.mxu0 0.0
    %2434 = vmatprep.subr.mxu0 0.0
    %2435 = vmatpush2.msra.mxu0 0.0
    %2436 = vmatprep.subr.mxu0 0.0
    %2437 = vmatpush2.msra.mxu0 0.0
    %2438 = vmatprep.subr.mxu0 0.0
    %2439 = vmatpush2.msra.mxu0 0.0
    %2440 = vmatprep.subr.mxu0 0.0
    %2441 = vmatpush2.msra.mxu0 0.0
    %2442 = vmatprep.subr.mxu0 0.0
    %2443 = vmatpush2.msra.mxu0 0.0
    %2444 = vmatprep.subr.mxu0 0.0
    %2445 = vmatpush2.msra.mxu0 0.0
    %2446 = vmatprep.subr.mxu0 0.0
    %2447 = vmatpush2.msra.mxu0 0.0
    %2448 = vmatprep.subr.mxu0 0.0
    %2449 = vmatpush2.msra.mxu0 0.0
    %2450 = vmatprep.mubr.f32.mxu0 0.0
    %2451 = vmatmul.mubr.f32.gmra.mxu0 %v2384
    %v2452 = vpop.f32.mrf.mxu0
    %v2453 = vadd.f32 0.0, %v2452
    %v2454 = vpop.f32.mrf.mxu0
    %2455 = vdwg.mxu0
    %2456 = vxpose.xlu0.b32.start [1/16] %v71, 128
    %2457 = vxpose.xlu0.b32.cont [2/16] %v72, 128
    %2458 = vxpose.xlu0.b32.cont [3/16] 0.0, 128
    %2459 = vxpose.xlu0.b32.cont [4/16] 0.0, 128
    %2460 = vxpose.xlu0.b32.cont [5/16] 0.0, 128
    %2461 = vxpose.xlu0.b32.cont [6/16] 0.0, 128
    %2462 = vxpose.xlu0.b32.cont [7/16] 0.0, 128
    %2463 = vxpose.xlu0.b32.cont [8/16] 0.0, 128
    %2464 = vxpose.xlu0.b32.cont [9/16] 0.0, 128
    %2465 = vxpose.xlu0.b32.cont [10/16] 0.0, 128
    %2466 = vxpose.xlu0.b32.cont [11/16] 0.0, 128
    %2467 = vxpose.xlu0.b32.cont [12/16] 0.0, 128
    %2468 = vxpose.xlu0.b32.cont [13/16] 0.0, 128
    %2469 = vxpose.xlu0.b32.cont [14/16] 0.0, 128
    %2470 = vxpose.xlu0.b32.cont [15/16] 0.0, 128
    %2471 = vxpose.xlu0.b32.end [16/16] 0.0, 128
    %v2472 = vpop.trf.xlu0
    %v2473 = vpop.trf.xlu0
    %v2474 = vpop.trf.xlu0
    %v2475 = vpop.trf.xlu0
    %v2476 = vpop.trf.xlu0
    %v2477 = vpop.trf.xlu0
    %v2478 = vpop.trf.xlu0
    %v2479 = vpop.trf.xlu0
    %v2480 = vpop.trf.xlu0
    %v2481 = vpop.trf.xlu0
    %v2482 = vpop.trf.xlu0
    %v2483 = vpop.trf.xlu0
    %v2484 = vpop.trf.xlu0
    %v2485 = vpop.trf.xlu0
    %v2486 = vpop.trf.xlu0
    %v2487 = vpop.trf.xlu0
    %v2489 = vsel %vm469, %v2472, 0
    %2491 = vmatprep.subr.mxu0 0.0
    %2492 = vmatpush1.msra.mxu0 0.0
    %2493 = vmatprep.subr.mxu0 0.0
    %2494 = vmatpush1.msra.mxu0 0.0
    %2495 = vmatprep.subr.mxu0 0.0
    %2496 = vmatpush1.msra.mxu0 0.0
    %2497 = vmatprep.subr.mxu0 0.0
    %2498 = vmatpush1.msra.mxu0 0.0
    %2499 = vmatprep.subr.mxu0 0.0
    %2500 = vmatpush1.msra.mxu0 0.0
    %2501 = vmatprep.subr.mxu0 0.0
    %2502 = vmatpush1.msra.mxu0 0.0
    %2503 = vmatprep.subr.mxu0 0.0
    %2504 = vmatpush1.msra.mxu0 0.0
    %2505 = vmatprep.subr.mxu0 0.0
    %2506 = vmatpush1.msra.mxu0 0.0
    %2507 = vmatprep.subr.mxu0 0.0
    %2508 = vmatpush1.msra.mxu0 0.0
    %2509 = vmatprep.subr.mxu0 0.0
    %2510 = vmatpush1.msra.mxu0 0.0
    %2511 = vmatprep.subr.mxu0 0.0
    %2512 = vmatpush1.msra.mxu0 0.0
    %2513 = vmatprep.subr.mxu0 0.0
    %2514 = vmatpush1.msra.mxu0 0.0
    %2515 = vmatprep.subr.mxu0 0.0
    %2516 = vmatpush1.msra.mxu0 0.0
    %2517 = vmatprep.subr.mxu0 0.0
    %2518 = vmatpush1.msra.mxu0 0.0
    %2519 = vmatprep.subr.mxu0 0.0
    %2520 = vmatpush1.msra.mxu0 %v2350
    %2521 = vmatprep.subr.mxu0 0.0
    %2522 = vmatpush1.msra.mxu0 %v2349
    %2523 = vmatprep.subr.mxu0 0.0
    %2524 = vmatpush2.msra.mxu0 0.0
    %2525 = vmatprep.subr.mxu0 0.0
    %2526 = vmatpush2.msra.mxu0 0.0
    %2527 = vmatprep.subr.mxu0 0.0
    %2528 = vmatpush2.msra.mxu0 0.0
    %2529 = vmatprep.subr.mxu0 0.0
    %2530 = vmatpush2.msra.mxu0 0.0
    %2531 = vmatprep.subr.mxu0 0.0
    %2532 = vmatpush2.msra.mxu0 0.0
    %2533 = vmatprep.subr.mxu0 0.0
    %2534 = vmatpush2.msra.mxu0 0.0
    %2535 = vmatprep.subr.mxu0 0.0
    %2536 = vmatpush2.msra.mxu0 0.0
    %2537 = vmatprep.subr.mxu0 0.0
    %2538 = vmatpush2.msra.mxu0 0.0
    %2539 = vmatprep.subr.mxu0 0.0
    %2540 = vmatpush2.msra.mxu0 0.0
    %2541 = vmatprep.subr.mxu0 0.0
    %2542 = vmatpush2.msra.mxu0 0.0
    %2543 = vmatprep.subr.mxu0 0.0
    %2544 = vmatpush2.msra.mxu0 0.0
    %2545 = vmatprep.subr.mxu0 0.0
    %2546 = vmatpush2.msra.mxu0 0.0
    %2547 = vmatprep.subr.mxu0 0.0
    %2548 = vmatpush2.msra.mxu0 0.0
    %2549 = vmatprep.subr.mxu0 0.0
    %2550 = vmatpush2.msra.mxu0 0.0
    %2551 = vmatprep.subr.mxu0 0.0
    %2552 = vmatpush2.msra.mxu0 0.0
    %2553 = vmatprep.subr.mxu0 0.0
    %2554 = vmatpush2.msra.mxu0 0.0
    %2555 = vmatprep.mubr.f32.mxu0 0.0
    %2556 = vmatmul.mubr.f32.gmra.mxu0 %v2489
    %v2557 = vpop.f32.mrf.mxu0
    %v2558 = vadd.f32 0.0, %v2557
    %v2559 = vpop.f32.mrf.mxu0
    %2560 = vdwg.mxu0
    %2561 = vmatprep.subr.mxu0 0.0
    %2562 = vmatpush1.msra.mxu0 0.0
    %2563 = vmatprep.subr.mxu0 0.0
    %2564 = vmatpush1.msra.mxu0 0.0
    %2565 = vmatprep.subr.mxu0 0.0
    %2566 = vmatpush1.msra.mxu0 0.0
    %2567 = vmatprep.subr.mxu0 0.0
    %2568 = vmatpush1.msra.mxu0 0.0
    %2569 = vmatprep.subr.mxu0 0.0
    %2570 = vmatpush1.msra.mxu0 0.0
    %2571 = vmatprep.subr.mxu0 0.0
    %2572 = vmatpush1.msra.mxu0 0.0
    %2573 = vmatprep.subr.mxu0 0.0
    %2574 = vmatpush1.msra.mxu0 0.0
    %2575 = vmatprep.subr.mxu0 0.0
    %2576 = vmatpush1.msra.mxu0 0.0
    %2577 = vmatprep.subr.mxu0 0.0
    %2578 = vmatpush1.msra.mxu0 0.0
    %2579 = vmatprep.subr.mxu0 0.0
    %2580 = vmatpush1.msra.mxu0 0.0
    %2581 = vmatprep.subr.mxu0 0.0
    %2582 = vmatpush1.msra.mxu0 0.0
    %2583 = vmatprep.subr.mxu0 0.0
    %2584 = vmatpush1.msra.mxu0 0.0
    %2585 = vmatprep.subr.mxu0 0.0
    %2586 = vmatpush1.msra.mxu0 0.0
    %2587 = vmatprep.subr.mxu0 0.0
    %2588 = vmatpush1.msra.mxu0 0.0
    %2589 = vmatprep.subr.mxu0 0.0
    %2590 = vmatpush1.msra.mxu0 1.0
    %2591 = vmatprep.subr.mxu0 0.0
    %2592 = vmatpush1.msra.mxu0 1.0
    %2593 = vmatprep.subr.mxu0 0.0
    %2594 = vmatpush2.msra.mxu0 0.0
    %2595 = vmatprep.subr.mxu0 0.0
    %2596 = vmatpush2.msra.mxu0 0.0
    %2597 = vmatprep.subr.mxu0 0.0
    %2598 = vmatpush2.msra.mxu0 0.0
    %2599 = vmatprep.subr.mxu0 0.0
    %2600 = vmatpush2.msra.mxu0 0.0
    %2601 = vmatprep.subr.mxu0 0.0
    %2602 = vmatpush2.msra.mxu0 0.0
    %2603 = vmatprep.subr.mxu0 0.0
    %2604 = vmatpush2.msra.mxu0 0.0
    %2605 = vmatprep.subr.mxu0 0.0
    %2606 = vmatpush2.msra.mxu0 0.0
    %2607 = vmatprep.subr.mxu0 0.0
    %2608 = vmatpush2.msra.mxu0 0.0
    %2609 = vmatprep.subr.mxu0 0.0
    %2610 = vmatpush2.msra.mxu0 0.0
    %2611 = vmatprep.subr.mxu0 0.0
    %2612 = vmatpush2.msra.mxu0 0.0
    %2613 = vmatprep.subr.mxu0 0.0
    %2614 = vmatpush2.msra.mxu0 0.0
    %2615 = vmatprep.subr.mxu0 0.0
    %2616 = vmatpush2.msra.mxu0 0.0
    %2617 = vmatprep.subr.mxu0 0.0
    %2618 = vmatpush2.msra.mxu0 0.0
    %2619 = vmatprep.subr.mxu0 0.0
    %2620 = vmatpush2.msra.mxu0 0.0
    %2621 = vmatprep.subr.mxu0 0.0
    %2622 = vmatpush2.msra.mxu0 0.0
    %2623 = vmatprep.subr.mxu0 0.0
    %2624 = vmatpush2.msra.mxu0 0.0
    %2625 = vmatprep.mubr.f32.mxu0 0.0
    %2626 = vmatmul.mubr.f32.gmra.mxu0 %v2384
    %v2627 = vpop.f32.mrf.mxu0
    %v2628 = vadd.f32 0.0, %v2627
    %v2629 = vpop.f32.mrf.mxu0
    %2630 = vdwg.mxu0
    %2631 = vmatprep.subr.mxu0 0.0
    %2632 = vmatpush1.msra.mxu0 0.0
    %2633 = vmatprep.subr.mxu0 0.0
    %2634 = vmatpush1.msra.mxu0 0.0
    %2635 = vmatprep.subr.mxu0 0.0
    %2636 = vmatpush1.msra.mxu0 0.0
    %2637 = vmatprep.subr.mxu0 0.0
    %2638 = vmatpush1.msra.mxu0 0.0
    %2639 = vmatprep.subr.mxu0 0.0
    %2640 = vmatpush1.msra.mxu0 0.0
    %2641 = vmatprep.subr.mxu0 0.0
    %2642 = vmatpush1.msra.mxu0 0.0
    %2643 = vmatprep.subr.mxu0 0.0
    %2644 = vmatpush1.msra.mxu0 0.0
    %2645 = vmatprep.subr.mxu0 0.0
    %2646 = vmatpush1.msra.mxu0 0.0
    %2647 = vmatprep.subr.mxu0 0.0
    %2648 = vmatpush1.msra.mxu0 0.0
    %2649 = vmatprep.subr.mxu0 0.0
    %2650 = vmatpush1.msra.mxu0 0.0
    %2651 = vmatprep.subr.mxu0 0.0
    %2652 = vmatpush1.msra.mxu0 0.0
    %2653 = vmatprep.subr.mxu0 0.0
    %2654 = vmatpush1.msra.mxu0 0.0
    %2655 = vmatprep.subr.mxu0 0.0
    %2656 = vmatpush1.msra.mxu0 0.0
    %2657 = vmatprep.subr.mxu0 0.0
    %2658 = vmatpush1.msra.mxu0 0.0
    %2659 = vmatprep.subr.mxu0 0.0
    %2660 = vmatpush1.msra.mxu0 1.0
    %2661 = vmatprep.subr.mxu0 0.0
    %2662 = vmatpush1.msra.mxu0 1.0
    %2663 = vmatprep.subr.mxu0 0.0
    %2664 = vmatpush2.msra.mxu0 0.0
    %2665 = vmatprep.subr.mxu0 0.0
    %2666 = vmatpush2.msra.mxu0 0.0
    %2667 = vmatprep.subr.mxu0 0.0
    %2668 = vmatpush2.msra.mxu0 0.0
    %2669 = vmatprep.subr.mxu0 0.0
    %2670 = vmatpush2.msra.mxu0 0.0
    %2671 = vmatprep.subr.mxu0 0.0
    %2672 = vmatpush2.msra.mxu0 0.0
    %2673 = vmatprep.subr.mxu0 0.0
    %2674 = vmatpush2.msra.mxu0 0.0
    %2675 = vmatprep.subr.mxu0 0.0
    %2676 = vmatpush2.msra.mxu0 0.0
    %2677 = vmatprep.subr.mxu0 0.0
    %2678 = vmatpush2.msra.mxu0 0.0
    %2679 = vmatprep.subr.mxu0 0.0
    %2680 = vmatpush2.msra.mxu0 0.0
    %2681 = vmatprep.subr.mxu0 0.0
    %2682 = vmatpush2.msra.mxu0 0.0
    %2683 = vmatprep.subr.mxu0 0.0
    %2684 = vmatpush2.msra.mxu0 0.0
    %2685 = vmatprep.subr.mxu0 0.0
    %2686 = vmatpush2.msra.mxu0 0.0
    %2687 = vmatprep.subr.mxu0 0.0
    %2688 = vmatpush2.msra.mxu0 0.0
    %2689 = vmatprep.subr.mxu0 0.0
    %2690 = vmatpush2.msra.mxu0 0.0
    %2691 = vmatprep.subr.mxu0 0.0
    %2692 = vmatpush2.msra.mxu0 0.0
    %2693 = vmatprep.subr.mxu0 0.0
    %2694 = vmatpush2.msra.mxu0 0.0
    %2695 = vmatprep.mubr.f32.mxu0 0.0
    %2696 = vmatmul.mubr.f32.gmra.mxu0 %v2489
    %v2697 = vpop.f32.mrf.mxu0
    %v2698 = vadd.f32 0.0, %v2697
    %v2699 = vpop.f32.mrf.mxu0
    %2700 = vdwg.mxu0
    %v2701 = vmax.f32 %v2628, 1.0
    %2703 = vset.pattern.permute.xlu0 0
    %2704 = vperm.xlu0 %2703, %v2701
    %v2705 = vpop.permute.xlu0 %2704
    %v2707 = vrcp.pop %v2705
    %v2708 = vmul.f32 %v2453, %v2707
    %v2709 = vmax.f32 %v2698, 1.0
    %2711 = vset.pattern.permute.xlu0 0
    %2712 = vperm.xlu0 %2711, %v2709
    %v2713 = vpop.permute.xlu0 %2712
    %v2715 = vrcp.pop %v2713
    %v2716 = vmul.f32 %v2558, %v2715
    %v2717 = vld [vmem:[%s8] sm:$0xff]
    %v2718 = vld [vmem:[%s8 + $0x8] sm:$0xff]
    %v2719 = vld [vmem:[%s8 + $0x10] sm:$0xff]
    %v2720 = vld [vmem:[%s8 + $0x18] sm:$0xff]
    %v2721 = vld [vmem:[%s8 + $0x20] sm:$0xff]
    %v2722 = vld [vmem:[%s8 + $0x28] sm:$0xff]
    %v2723 = vld [vmem:[%s8 + $0x30] sm:$0x1]
    %v2724 = vld [vmem:[%s8 + $0x38] sm:$0xff]
    %v2725 = vld [vmem:[%s8 + $0x40] sm:$0xff]
    %v2726 = vld [vmem:[%s8 + $0x48] sm:$0xff]
    %v2727 = vld [vmem:[%s8 + $0x50] sm:$0xff]
    %v2728 = vld [vmem:[%s8 + $0x58] sm:$0xff]
    %v2729 = vld [vmem:[%s8 + $0x60] sm:$0xff]
    %v2730 = vld [vmem:[%s8 + $0x68] sm:$0xff]
    %v2731 = vld [vmem:[%s8 + $0x70] sm:$0xff]
    %v2732 = vld [vmem:[%s8 + $0x78] sm:$0xff]
    %v2733 = vld [vmem:[%s8 + $0x80] sm:$0xff]
    %v2734 = vld [vmem:[%s8 + $0x88] sm:$0xff]
    %v2735 = vld [vmem:[%s8 + $0x90] sm:$0xff]
    %v2736 = vld [vmem:[%s8 + $0x98] sm:$0xff]
    %v2737 = vld [vmem:[%s8 + $0xa0] sm:$0xff]
    %v2738 = vld [vmem:[%s8 + $0xa8] sm:$0xff]
    %v2739 = vld [vmem:[%s8 + $0xb0] sm:$0xff]
    %v2740 = vld [vmem:[%s8 + $0xb8] sm:$0x1]
    %v2742 = vsel %vm469, %v2716, 0
    %2744 = vmatprep.subr.mxu0 0.0
    %2745 = vmatpush1.msra.mxu0 0.0
    %2746 = vmatprep.subr.mxu0 0.0
    %2747 = vmatpush1.msra.mxu0 0.0
    %2748 = vmatprep.subr.mxu0 0.0
    %2749 = vmatpush1.msra.mxu0 0.0
    %2750 = vmatprep.subr.mxu0 0.0
    %2751 = vmatpush1.msra.mxu0 0.0
    %2752 = vmatprep.subr.mxu0 0.0
    %2753 = vmatpush1.msra.mxu0 0.0
    %2754 = vmatprep.subr.mxu0 0.0
    %2755 = vmatpush1.msra.mxu0 0.0
    %2756 = vmatprep.subr.mxu0 0.0
    %2757 = vmatpush1.msra.mxu0 0.0
    %2758 = vmatprep.subr.mxu0 0.0
    %2759 = vmatpush1.msra.mxu0 0.0
    %2760 = vmatprep.subr.mxu0 0.0
    %2761 = vmatpush1.msra.mxu0 0.0
    %2762 = vmatprep.subr.mxu0 0.0
    %2763 = vmatpush1.msra.mxu0 0.0
    %2764 = vmatprep.subr.mxu0 0.0
    %2765 = vmatpush1.msra.mxu0 0.0
    %2766 = vmatprep.subr.mxu0 0.0
    %2767 = vmatpush1.msra.mxu0 0.0
    %2768 = vmatprep.subr.mxu0 0.0
    %2769 = vmatpush1.msra.mxu0 0.0
    %2770 = vmatprep.subr.mxu0 0.0
    %2771 = vmatpush1.msra.mxu0 0.0
    %2772 = vmatprep.subr.mxu0 0.0
    %2773 = vmatpush1.msra.mxu0 %v2722
    %2774 = vmatprep.subr.mxu0 0.0
    %2775 = vmatpush1.msra.mxu0 %v2721
    %2776 = vmatprep.subr.mxu0 0.0
    %2777 = vmatpush2.msra.mxu0 0.0
    %2778 = vmatprep.subr.mxu0 0.0
    %2779 = vmatpush2.msra.mxu0 0.0
    %2780 = vmatprep.subr.mxu0 0.0
    %2781 = vmatpush2.msra.mxu0 0.0
    %2782 = vmatprep.subr.mxu0 0.0
    %2783 = vmatpush2.msra.mxu0 0.0
    %2784 = vmatprep.subr.mxu0 0.0
    %2785 = vmatpush2.msra.mxu0 0.0
    %2786 = vmatprep.subr.mxu0 0.0
    %2787 = vmatpush2.msra.mxu0 0.0
    %2788 = vmatprep.subr.mxu0 0.0
    %2789 = vmatpush2.msra.mxu0 0.0
    %2790 = vmatprep.subr.mxu0 0.0
    %2791 = vmatpush2.msra.mxu0 0.0
    %2792 = vmatprep.subr.mxu0 0.0
    %2793 = vmatpush2.msra.mxu0 0.0
    %2794 = vmatprep.subr.mxu0 0.0
    %2795 = vmatpush2.msra.mxu0 0.0
    %2796 = vmatprep.subr.mxu0 0.0
    %2797 = vmatpush2.msra.mxu0 0.0
    %2798 = vmatprep.subr.mxu0 0.0
    %2799 = vmatpush2.msra.mxu0 0.0
    %2800 = vmatprep.subr.mxu0 0.0
    %2801 = vmatpush2.msra.mxu0 0.0
    %2802 = vmatprep.subr.mxu0 0.0
    %2803 = vmatpush2.msra.mxu0 0.0
    %2804 = vmatprep.subr.mxu0 0.0
    %2805 = vmatpush2.msra.mxu0 0.0
    %2806 = vmatprep.subr.mxu0 0.0
    %2807 = vmatpush2.msra.mxu0 0.0
    %2808 = vmatprep.mubr.f32.mxu0 0.0
    %2809 = vmatmul.mubr.f32.gmra.mxu0 %v2742
    %v2810 = vpop.f32.mrf.mxu0
    %v2811 = vadd.f32 0.0, %v2810
    %v2812 = vpop.f32.mrf.mxu0
    %2813 = vdwg.mxu0
    %v2815 = vsel %vm598, %v2708, 0
    %2817 = vmatprep.subr.mxu0 0.0
    %2818 = vmatpush1.msra.mxu0 0.0
    %2819 = vmatprep.subr.mxu0 0.0
    %2820 = vmatpush1.msra.mxu0 0.0
    %2821 = vmatprep.subr.mxu0 0.0
    %2822 = vmatpush1.msra.mxu0 0.0
    %2823 = vmatprep.subr.mxu0 0.0
    %2824 = vmatpush1.msra.mxu0 0.0
    %2825 = vmatprep.subr.mxu0 0.0
    %2826 = vmatpush1.msra.mxu0 0.0
    %2827 = vmatprep.subr.mxu0 0.0
    %2828 = vmatpush1.msra.mxu0 0.0
    %2829 = vmatprep.subr.mxu0 0.0
    %2830 = vmatpush1.msra.mxu0 0.0
    %2831 = vmatprep.subr.mxu0 0.0
    %2832 = vmatpush1.msra.mxu0 0.0
    %2833 = vmatprep.subr.mxu0 0.0
    %2834 = vmatpush1.msra.mxu0 0.0
    %2835 = vmatprep.subr.mxu0 0.0
    %2836 = vmatpush1.msra.mxu0 0.0
    %2837 = vmatprep.subr.mxu0 0.0
    %2838 = vmatpush1.msra.mxu0 0.0
    %2839 = vmatprep.subr.mxu0 0.0
    %2840 = vmatpush1.msra.mxu0 0.0
    %2841 = vmatprep.subr.mxu0 0.0
    %2842 = vmatpush1.msra.mxu0 %v2720
    %2843 = vmatprep.subr.mxu0 0.0
    %2844 = vmatpush1.msra.mxu0 %v2719
    %2845 = vmatprep.subr.mxu0 0.0
    %2846 = vmatpush1.msra.mxu0 %v2718
    %2847 = vmatprep.subr.mxu0 0.0
    %2848 = vmatpush1.msra.mxu0 %v2717
    %2849 = vmatprep.subr.mxu0 0.0
    %2850 = vmatpush2.msra.mxu0 0.0
    %2851 = vmatprep.subr.mxu0 0.0
    %2852 = vmatpush2.msra.mxu0 0.0
    %2853 = vmatprep.subr.mxu0 0.0
    %2854 = vmatpush2.msra.mxu0 0.0
    %2855 = vmatprep.subr.mxu0 0.0
    %2856 = vmatpush2.msra.mxu0 0.0
    %2857 = vmatprep.subr.mxu0 0.0
    %2858 = vmatpush2.msra.mxu0 0.0
    %2859 = vmatprep.subr.mxu0 0.0
    %2860 = vmatpush2.msra.mxu0 0.0
    %2861 = vmatprep.subr.mxu0 0.0
    %2862 = vmatpush2.msra.mxu0 0.0
    %2863 = vmatprep.subr.mxu0 0.0
    %2864 = vmatpush2.msra.mxu0 0.0
    %2865 = vmatprep.subr.mxu0 0.0
    %2866 = vmatpush2.msra.mxu0 0.0
    %2867 = vmatprep.subr.mxu0 0.0
    %2868 = vmatpush2.msra.mxu0 0.0
    %2869 = vmatprep.subr.mxu0 0.0
    %2870 = vmatpush2.msra.mxu0 0.0
    %2871 = vmatprep.subr.mxu0 0.0
    %2872 = vmatpush2.msra.mxu0 0.0
    %2873 = vmatprep.subr.mxu0 0.0
    %2874 = vmatpush2.msra.mxu0 0.0
    %2875 = vmatprep.subr.mxu0 0.0
    %2876 = vmatpush2.msra.mxu0 0.0
    %2877 = vmatprep.subr.mxu0 0.0
    %2878 = vmatpush2.msra.mxu0 0.0
    %2879 = vmatprep.subr.mxu0 0.0
    %2880 = vmatpush2.msra.mxu0 0.0
    %2881 = vmatprep.mubr.f32.mxu0 0.0
    %2882 = vmatmul.mubr.f32.gmra.mxu0 %v2815
    %v2883 = vpop.f32.mrf.mxu0
    %v2884 = vadd.f32 %v2811, %v2883
    %v2885 = vpop.f32.mrf.mxu0
    %2886 = vdwg.mxu0
    %v2887 = vlaneseq
    %v2888 = vshrl.u32 %v2887, 7
    %v2889 = vsub.s32 0, %v2888
    %v2890 = vrot.slane %v2723, %v2889
    %v2891 = vadd.f32 %v2884, %v2890
    %v2892 = vmax.f32 %v2891, 0.0
    %v2893 = vlaneseq
    %v2894 = vshrl.u32 %v2893, 7
    %v2895 = vsub.s32 0, %v2894
    %v2896 = vrot.slane %v2740, %v2895
    %2897 = vmatprep.subr.mxu0 0.0
    %2898 = vmatpush1.msra.mxu0 %v2739
    %2899 = vmatprep.subr.mxu0 0.0
    %2900 = vmatpush1.msra.mxu0 %v2738
    %2901 = vmatprep.subr.mxu0 0.0
    %2902 = vmatpush1.msra.mxu0 %v2737
    %2903 = vmatprep.subr.mxu0 0.0
    %2904 = vmatpush1.msra.mxu0 %v2736
    %2905 = vmatprep.subr.mxu0 0.0
    %2906 = vmatpush1.msra.mxu0 %v2735
    %2907 = vmatprep.subr.mxu0 0.0
    %2908 = vmatpush1.msra.mxu0 %v2734
    %2909 = vmatprep.subr.mxu0 0.0
    %2910 = vmatpush1.msra.mxu0 %v2733
    %2911 = vmatprep.subr.mxu0 0.0
    %2912 = vmatpush1.msra.mxu0 %v2732
    %2913 = vmatprep.subr.mxu0 0.0
    %2914 = vmatpush1.msra.mxu0 %v2731
    %2915 = vmatprep.subr.mxu0 0.0
    %2916 = vmatpush1.msra.mxu0 %v2730
    %2917 = vmatprep.subr.mxu0 0.0
    %2918 = vmatpush1.msra.mxu0 %v2729
    %2919 = vmatprep.subr.mxu0 0.0
    %2920 = vmatpush1.msra.mxu0 %v2728
    %2921 = vmatprep.subr.mxu0 0.0
    %2922 = vmatpush1.msra.mxu0 %v2727
    %2923 = vmatprep.subr.mxu0 0.0
    %2924 = vmatpush1.msra.mxu0 %v2726
    %2925 = vmatprep.subr.mxu0 0.0
    %2926 = vmatpush1.msra.mxu0 %v2725
    %2927 = vmatprep.subr.mxu0 0.0
    %2928 = vmatpush1.msra.mxu0 %v2724
    %2929 = vmatprep.subr.mxu0 0.0
    %2930 = vmatpush2.msra.mxu0 0.0
    %2931 = vmatprep.subr.mxu0 0.0
    %2932 = vmatpush2.msra.mxu0 0.0
    %2933 = vmatprep.subr.mxu0 0.0
    %2934 = vmatpush2.msra.mxu0 0.0
    %2935 = vmatprep.subr.mxu0 0.0
    %2936 = vmatpush2.msra.mxu0 0.0
    %2937 = vmatprep.subr.mxu0 0.0
    %2938 = vmatpush2.msra.mxu0 0.0
    %2939 = vmatprep.subr.mxu0 0.0
    %2940 = vmatpush2.msra.mxu0 0.0
    %2941 = vmatprep.subr.mxu0 0.0
    %2942 = vmatpush2.msra.mxu0 0.0
    %2943 = vmatprep.subr.mxu0 0.0
    %2944 = vmatpush2.msra.mxu0 0.0
    %2945 = vmatprep.subr.mxu0 0.0
    %2946 = vmatpush2.msra.mxu0 0.0
    %2947 = vmatprep.subr.mxu0 0.0
    %2948 = vmatpush2.msra.mxu0 0.0
    %2949 = vmatprep.subr.mxu0 0.0
    %2950 = vmatpush2.msra.mxu0 0.0
    %2951 = vmatprep.subr.mxu0 0.0
    %2952 = vmatpush2.msra.mxu0 0.0
    %2953 = vmatprep.subr.mxu0 0.0
    %2954 = vmatpush2.msra.mxu0 0.0
    %2955 = vmatprep.subr.mxu0 0.0
    %2956 = vmatpush2.msra.mxu0 0.0
    %2957 = vmatprep.subr.mxu0 0.0
    %2958 = vmatpush2.msra.mxu0 0.0
    %2959 = vmatprep.subr.mxu0 0.0
    %2960 = vmatpush2.msra.mxu0 0.0
    %2961 = vmatprep.mubr.f32.mxu0 0.0
    %2962 = vmatmul.mubr.f32.gmra.mxu0 %v2892
    %v2963 = vpop.f32.mrf.mxu0
    %v2964 = vadd.f32 %v2896, %v2963
    %v2965 = vpop.f32.mrf.mxu0
    %2966 = vdwg.mxu0
    %2967 = vst [vmem:[#allocation2] sm:$0x3] %v2964
    // Predicated region
    $region38: #{tpu_custom_call.1} parent=1 // pred_check
      _
    $region39: #{tpu_custom_call.1} parent=1 // pred_check_branch
      %2969 = sbr.rel (0) target = $region41
    $region40: #{tpu_custom_call.1} parent=1 // pred_region
      %s2971 = ssub.s32 32, 32
      %2972 = vsyncadd [#allocation3], %s2971
      %s2974 = sshll.u32 [#allocation2], 4
      %s2975 = int_to_ptr.vmem [resolvable:$true] %s2974
      %2977 = dma.vmem_to_hbm [thread:$0]  %s2975, 32, %s9, [#allocation3]
    $region41: #{tpu_custom_call.1} parent=1 // pred_fallthru
      _
    // Predicated region
    $region42: #{tpu_custom_call.1} parent=1 // pred_check
      _
    $region43: #{tpu_custom_call.1} parent=1 // pred_check_branch
      %2979 = sbr.rel (0) target = $region45
    $region44: #{tpu_custom_call.1} parent=1 // pred_region
      %2980 = dma.done [#allocation3], 32
    $region45: #{tpu_custom_call.1} parent=1 // pred_fallthru
      _
    %2981 = vsyncpa [#allocation3], 1

</llo_original>
